<compile_context>
chip_gen: v7x
topology: tpu7x:2x2x1
jax: 0.10.0
libtpu: 0.0.40
codegen_flags: <defaults>
</compile_context>

<pallas_src>
import functools

import jax
import jax.numpy as jnp
from jax.experimental import pallas as pl
from jax.experimental.pallas import tpu as pltpu


_DILATIONS = (1, 3, 9)   # residual11 / residual21 / residual31 dilations (kernel_size=3)
_BN_EPS = 1e-5


def _round_up(v, m):
    return (v + m - 1) // m * m


def _shift_lanes(x, s):
    """y[:, p] = x[:, p + s] (zeros shifted in at the edges); s is a static Python int."""
    if s == 0:
        return x
    c, w = x.shape
    if s > 0:
        return jnp.concatenate([x[:, s:], jnp.zeros((c, s), x.dtype)], axis=1)
    return jnp.concatenate([jnp.zeros((c, -s), x.dtype), x[:, : w + s]], axis=1)


def _bn_elu(acc, gb, mask, inv_count):
    """Training-mode BatchNorm1d (affine folded into scale/shift) + ELU(alpha=1).

    Batch statistics are taken only over the masked (valid) columns; the output is re-masked so
    the zero-padding borders stay exactly zero for downstream dilated convs.
    """
    gamma = gb[:, 0:1]
    beta = gb[:, 1:2]
    am = acc * mask
    mean = jnp.sum(am, axis=1, keepdims=True) * inv_count
    cen = acc - mean
    var = jnp.sum(cen * cen * mask, axis=1, keepdims=True) * inv_count   # biased variance
    scale = gamma * jax.lax.rsqrt(var + _BN_EPS)
    shift = beta - mean * scale
    y = acc * scale + shift
    # Stable expm1 for the ELU negative branch: expm1(t) = tanh(t/2) * (exp(t) + 1).
    t = jnp.minimum(y, 0.0)
    y = jnp.where(y > 0.0, y, jnp.tanh(0.5 * t) * (jnp.exp(t) + 1.0))
    return y * mask


def _conv_bn_elu(x, w_ref, gb_ref, shifts, mask, inv_count):
    """Conv1d (taps = static lane shifts, single MXU matmul) + BN + ELU on (C, NLP) values."""
    taps = [_shift_lanes(x, s) for s in shifts]
    xt = taps[0] if len(taps) == 1 else jnp.concatenate(taps, axis=0)   # (K*Cin, NLP)
    acc = jnp.dot(w_ref[...], xt, preferred_element_type=jnp.float32)   # (Cout, NLP)
    return _bn_elu(acc, gb_ref[...], mask, inv_count)


def _fused_upsampling_kernel(x_ref, *refs, n, length, stride, lp, pmax, nlp, l_up, out_w):
    o_ref = refs[-1]
    (w11, gb11, w12, gb12, w21, gb21, w22, gb22,
     w31, gb31, w32, gb32, wup, gbup) = refs[:-1]

    # Interior mask over the per-sample-padded flat layout (1.0 on the N*L valid columns).
    col = jax.lax.broadcasted_iota(jnp.int32, (1, nlp), 1)
    conds = []
    for i in range(n):
        s0 = i * lp + pmax
        conds.append((col >= s0) & (col < s0 + length))
    interior = functools.reduce(jnp.logical_or, conds).astype(jnp.float32)
    inv_nl = 1.0 / float(n * length)

    d1, d2, d3 = _DILATIONS
    o1 = x_ref[...]
    o2 = _conv_bn_elu(o1, w11, gb11, (-d1, 0, d1), interior, inv_nl)             # residual11
    o3 = _conv_bn_elu(o2, w12, gb12, (0,), interior, inv_nl)                     # residual12
    o4 = _conv_bn_elu(o3 + o1, w21, gb21, (-d2, 0, d2), interior, inv_nl)        # residual21
    o5 = _conv_bn_elu(o4, w22, gb22, (0,), interior, inv_nl)                     # residual22
    o6 = _conv_bn_elu(o1 + o3 + o5, w31, gb31, (-d3, 0, d3), interior, inv_nl)   # residual31
    o7 = _conv_bn_elu(o6, w32, gb32, (0,), interior, inv_nl)                     # residual32
    y = o1 + o3 + o5 + o7

    # upblock: Conv1d(co2 -> channel_out, kernel=2*Stride, stride=Stride, padding=0) + BN + ELU.
    # Each strided tap is gathered with an in-kernel 0/1 selection matmul that maps padded-flat
    # input columns onto a lane-dense output axis of width out_w (multiple of 128).
    row = jax.lax.broadcasted_iota(jnp.int32, (nlp, out_w), 0)
    colo = jax.lax.broadcasted_iota(jnp.int32, (nlp, out_w), 1)
    k_up = 2 * stride
    taps = []
    for k in range(k_up):
        sels = []
        for i in range(n):
            t = colo - i * l_up
            sels.append((t >= 0) & (t < l_up) & (row == i * lp + pmax + stride * t + k))
        sel = functools.reduce(jnp.logical_or, sels).astype(jnp.float32)
        taps.append(jnp.dot(y, sel, preferred_element_type=jnp.float32))         # (co2, out_w)
    xt_up = jnp.concatenate(taps, axis=0)                                        # (k_up*co2, out_w)
    acc_up = jnp.dot(wup[...], xt_up, preferred_element_type=jnp.float32)        # (Cout, out_w)

    out_mask = (jax.lax.broadcasted_iota(jnp.int32, (1, out_w), 1) < n * l_up).astype(jnp.float32)
    o_ref[...] = _bn_elu(acc_up, gbup[...], out_mask, 1.0 / float(n * l_up))


def _prep_conv_bn(w, gamma, beta):
    """PyTorch Conv1d weight (Cout, Cin, K) -> tap-major 2-D (Cout, K*Cin); gamma/beta -> (Cout, 2)."""
    cout, cin, k = w.shape
    w2d = jnp.transpose(w, (0, 2, 1)).reshape(cout, k * cin)
    gb = jnp.stack([gamma, beta], axis=1)
    return w2d, gb


def upsampling_layer_forward(x, params, stride):
    """Fused forward pass of UpSamplingLayer.  x: (N, channel_in, L) -> (N, channel_out, L_up)."""
    n, cin, length = x.shape
    cout = params["up"][0].shape[0]
    co2 = cout // 2
    assert cin == co2, "forward()'s residual adds require channel_in == channel_out // 2"

    pmax = max(_DILATIONS)
    lp = length + 2 * pmax
    nlp = _round_up(n * lp, 128)
    l_up = (length - 2 * stride) // stride + 1
    out_w = _round_up(n * l_up, 128)

    # One-time input layout glue: per-sample zero padding, NCL -> (C, N*Lp), lane padding.
    xp = jnp.pad(x, ((0, 0), (0, 0), (pmax, pmax)))
    x_flat = jnp.transpose(xp, (1, 0, 2)).reshape(cin, n * lp)
    x_flat = jnp.pad(x_flat, ((0, 0), (0, nlp - n * lp)))

    flat_params = []
    for name in ("r11", "r12", "r21", "r22", "r31", "r32", "up"):
        flat_params.extend(_prep_conv_bn(*params[name]))

    vmem = pl.BlockSpec(memory_space=pltpu.MemorySpace.VMEM)
    kernel = functools.partial(
        _fused_upsampling_kernel,
        n=n, length=length, stride=stride, lp=lp, pmax=pmax, nlp=nlp, l_up=l_up, out_w=out_w)
    out_pad = pl.pallas_call(
        kernel,
        out_shape=jax.ShapeDtypeStruct((cout, out_w), jnp.float32),
        in_specs=[vmem] * (1 + len(flat_params)),
        out_specs=vmem,
    )(x_flat, *flat_params)

    out = out_pad[:, : n * l_up].reshape(cout, n, l_up)
    return jnp.transpose(out, (1, 0, 2))


def make_conv_bn_params(key, cin, cout, k):
    k1, k2, k3 = jax.random.split(key, 3)
    bound = 1.0 / float(cin * k) ** 0.5
    w = jax.random.uniform(k1, (cout, cin, k), jnp.float32, -bound, bound)
    # Conv bias intentionally omitted: training-mode BatchNorm subtracts the per-channel batch
    # mean immediately after the conv, so the bias cancels exactly (mathematically a no-op).
    gamma = jax.random.uniform(k2, (cout,), jnp.float32, 0.5, 1.5)
    beta = jax.random.uniform(k3, (cout,), jnp.float32, -0.1, 0.1)
    return (w, gamma, beta)


if __name__ == "__main__":
    # Module config: UpSamplingLayer(channel_in=4, channel_out=8, Stride=2).
    # Note: the forward's residual adds require channel_in == channel_out // 2.
    channel_in, channel_out, Stride = 4, 8, 2
    co2 = channel_out // 2
    N, L = 2, 64

    key = jax.random.PRNGKey(0)
    keys = jax.random.split(key, 8)
    x = jax.random.normal(keys[0], (N, channel_in, L), jnp.float32)

    params = {
        "r11": make_conv_bn_params(keys[1], channel_in, co2, 3),
        "r12": make_conv_bn_params(keys[2], co2, co2, 1),
        "r21": make_conv_bn_params(keys[3], co2, co2, 3),
        "r22": make_conv_bn_params(keys[4], co2, co2, 1),
        "r31": make_conv_bn_params(keys[5], co2, co2, 3),
        "r32": make_conv_bn_params(keys[6], co2, co2, 1),
        "up":  make_conv_bn_params(keys[7], co2, channel_out, 2 * Stride),
    }

    fwd = jax.jit(functools.partial(upsampling_layer_forward, stride=Stride))
    out = fwd(x, params)
    jax.block_until_ready(out)

    L_up = (L - 2 * Stride) // Stride + 1
    assert out.shape == (N, channel_out, L_up), out.shape
    assert bool(jnp.all(jnp.isfinite(out)))
    print("KERNEL_OK")
</pallas_src>

<mosaic_0001>
module attributes {stable_mosaic.version = 11 : i64} {
  func.func @_fused_upsampling_kernel(%arg0: memref<4x256xf32, #tpu.memory_space<vmem>>, %arg1: memref<4x12xf32, #tpu.memory_space<vmem>>, %arg2: memref<4x2xf32, #tpu.memory_space<vmem>>, %arg3: memref<4x4xf32, #tpu.memory_space<vmem>>, %arg4: memref<4x2xf32, #tpu.memory_space<vmem>>, %arg5: memref<4x12xf32, #tpu.memory_space<vmem>>, %arg6: memref<4x2xf32, #tpu.memory_space<vmem>>, %arg7: memref<4x4xf32, #tpu.memory_space<vmem>>, %arg8: memref<4x2xf32, #tpu.memory_space<vmem>>, %arg9: memref<4x12xf32, #tpu.memory_space<vmem>>, %arg10: memref<4x2xf32, #tpu.memory_space<vmem>>, %arg11: memref<4x4xf32, #tpu.memory_space<vmem>>, %arg12: memref<4x2xf32, #tpu.memory_space<vmem>>, %arg13: memref<8x16xf32, #tpu.memory_space<vmem>>, %arg14: memref<8x2xf32, #tpu.memory_space<vmem>>, %arg15: memref<8x128xf32, #tpu.memory_space<vmem>>) attributes {dimension_semantics = [], scalar_prefetch = 0 : i64, scratch_operands = 0 : i64, tpu.core_type = #tpu.core_type<tc>} {
    %0 = tpu.iota {dimensions = array<i32: 1>} : vector<1x256xi32>
    %c9_i32 = arith.constant 9 : i32
    %1 = vector.broadcast %c9_i32 : i32 to vector<1x256xi32>
    %2 = arith.cmpi sge, %0, %1 : vector<1x256xi32>
    %c73_i32 = arith.constant 73 : i32
    %3 = vector.broadcast %c73_i32 : i32 to vector<1x256xi32>
    %4 = arith.cmpi slt, %0, %3 : vector<1x256xi32>
    %5 = arith.andi %2, %4 : vector<1x256xi1>
    %c91_i32 = arith.constant 91 : i32
    %6 = vector.broadcast %c91_i32 : i32 to vector<1x256xi32>
    %7 = arith.cmpi sge, %0, %6 : vector<1x256xi32>
    %c155_i32 = arith.constant 155 : i32
    %8 = vector.broadcast %c155_i32 : i32 to vector<1x256xi32>
    %9 = arith.cmpi slt, %0, %8 : vector<1x256xi32>
    %10 = arith.andi %7, %9 : vector<1x256xi1>
    %11 = arith.ori %5, %10 : vector<1x256xi1>
    %12 = arith.extui %11 : vector<1x256xi1> to vector<1x256xi32>
    %13 = arith.sitofp %12 : vector<1x256xi32> to vector<1x256xf32>
    %c0 = arith.constant 0 : index
    %c0_0 = arith.constant 0 : index
    %14 = vector.load %arg0[%c0, %c0_0] : memref<4x256xf32, #tpu.memory_space<vmem>>, vector<4x256xf32>
    %cst = arith.constant 0.000000e+00 : f32
    %15 = vector.broadcast %cst : f32 to vector<4x1xf32>
    %16 = vector.extract_strided_slice %14 {offsets = [0, 0], sizes = [4, 255], strides = [1, 1]} : vector<4x256xf32> to vector<4x255xf32>
    %17 = tpu.concatenate %15, %16 in 1 : vector<4x1xf32>, vector<4x255xf32> -> vector<4x256xf32>
    %18 = vector.extract_strided_slice %14 {offsets = [0, 1], sizes = [4, 255], strides = [1, 1]} : vector<4x256xf32> to vector<4x255xf32>
    %cst_1 = arith.constant 0.000000e+00 : f32
    %19 = vector.broadcast %cst_1 : f32 to vector<4x1xf32>
    %20 = tpu.concatenate %18, %19 in 1 : vector<4x255xf32>, vector<4x1xf32> -> vector<4x256xf32>
    %21 = tpu.concatenate %17, %14, %20 in 0 : vector<4x256xf32>, vector<4x256xf32>, vector<4x256xf32> -> vector<12x256xf32>
    %c0_2 = arith.constant 0 : index
    %c0_3 = arith.constant 0 : index
    %22 = vector.load %arg1[%c0_2, %c0_3] : memref<4x12xf32, #tpu.memory_space<vmem>>, vector<4x12xf32>
    %cst_4 = arith.constant dense<0.000000e+00> : vector<4x256xf32>
    %23 = tpu.matmul %22, %21, %cst_4 {dimension_numbers = #tpu.dot_dimension_numbers<[1], [0], [0], [1], [0, 0, 1, 1], [], []>} : vector<4x12xf32>, vector<12x256xf32>, vector<4x256xf32> -> vector<4x256xf32>
    %c0_5 = arith.constant 0 : index
    %c0_6 = arith.constant 0 : index
    %24 = vector.load %arg2[%c0_5, %c0_6] : memref<4x2xf32, #tpu.memory_space<vmem>>, vector<4x2xf32>
    %25 = vector.extract_strided_slice %24 {offsets = [0, 0], sizes = [4, 1], strides = [1, 1]} : vector<4x2xf32> to vector<4x1xf32>
    %26 = vector.extract_strided_slice %24 {offsets = [0, 1], sizes = [4, 1], strides = [1, 1]} : vector<4x2xf32> to vector<4x1xf32>
    %27 = vector.broadcast %13 : vector<1x256xf32> to vector<4x256xf32>
    %28 = arith.mulf %23, %27 : vector<4x256xf32>
    %cst_7 = arith.constant dense<0.000000e+00> : vector<4xf32>
    %29 = vector.multi_reduction <add>, %28, %cst_7 [1] : vector<4x256xf32> to vector<4xf32>
    %30 = vector.shape_cast %29 : vector<4xf32> to vector<4x1xf32>
    %cst_8 = arith.constant 7.812500e-03 : f32
    %31 = vector.broadcast %cst_8 : f32 to vector<4x1xf32>
    %32 = arith.mulf %30, %31 : vector<4x1xf32>
    %33 = vector.broadcast %32 : vector<4x1xf32> to vector<4x256xf32>
    %34 = arith.subf %23, %33 : vector<4x256xf32>
    %35 = arith.mulf %34, %34 : vector<4x256xf32>
    %36 = vector.broadcast %13 : vector<1x256xf32> to vector<4x256xf32>
    %37 = arith.mulf %35, %36 : vector<4x256xf32>
    %cst_9 = arith.constant dense<0.000000e+00> : vector<4xf32>
    %38 = vector.multi_reduction <add>, %37, %cst_9 [1] : vector<4x256xf32> to vector<4xf32>
    %39 = vector.shape_cast %38 : vector<4xf32> to vector<4x1xf32>
    %cst_10 = arith.constant 7.812500e-03 : f32
    %40 = vector.broadcast %cst_10 : f32 to vector<4x1xf32>
    %41 = arith.mulf %39, %40 : vector<4x1xf32>
    %cst_11 = arith.constant 9.99999974E-6 : f32
    %42 = vector.broadcast %cst_11 : f32 to vector<4x1xf32>
    %43 = arith.addf %41, %42 : vector<4x1xf32>
    %44 = math.rsqrt %43 : vector<4x1xf32>
    %45 = arith.mulf %25, %44 : vector<4x1xf32>
    %46 = arith.mulf %32, %45 : vector<4x1xf32>
    %47 = arith.subf %26, %46 : vector<4x1xf32>
    %48 = vector.broadcast %45 : vector<4x1xf32> to vector<4x256xf32>
    %49 = arith.mulf %23, %48 : vector<4x256xf32>
    %50 = vector.broadcast %47 : vector<4x1xf32> to vector<4x256xf32>
    %51 = arith.addf %49, %50 : vector<4x256xf32>
    %cst_12 = arith.constant 0.000000e+00 : f32
    %52 = vector.broadcast %cst_12 : f32 to vector<4x256xf32>
    %53 = arith.minimumf %51, %52 : vector<4x256xf32>
    %cst_13 = arith.constant 0.000000e+00 : f32
    %54 = vector.broadcast %cst_13 : f32 to vector<4x256xf32>
    %55 = arith.cmpf ogt, %51, %54 : vector<4x256xf32>
    %cst_14 = arith.constant 5.000000e-01 : f32
    %56 = vector.broadcast %cst_14 : f32 to vector<4x256xf32>
    %57 = arith.mulf %56, %53 : vector<4x256xf32>
    %58 = math.tanh %57 : vector<4x256xf32>
    %59 = math.exp %53 : vector<4x256xf32>
    %cst_15 = arith.constant 1.000000e+00 : f32
    %60 = vector.broadcast %cst_15 : f32 to vector<4x256xf32>
    %61 = arith.addf %59, %60 : vector<4x256xf32>
    %62 = arith.mulf %58, %61 : vector<4x256xf32>
    %63 = arith.select %55, %51, %62 : vector<4x256xi1>, vector<4x256xf32>
    %64 = vector.broadcast %13 : vector<1x256xf32> to vector<4x256xf32>
    %65 = arith.mulf %63, %64 : vector<4x256xf32>
    %c0_16 = arith.constant 0 : index
    %c0_17 = arith.constant 0 : index
    %66 = vector.load %arg3[%c0_16, %c0_17] : memref<4x4xf32, #tpu.memory_space<vmem>>, vector<4x4xf32>
    %cst_18 = arith.constant dense<0.000000e+00> : vector<4x256xf32>
    %67 = tpu.matmul %66, %65, %cst_18 {dimension_numbers = #tpu.dot_dimension_numbers<[1], [0], [0], [1], [0, 0, 1, 1], [], []>} : vector<4x4xf32>, vector<4x256xf32>, vector<4x256xf32> -> vector<4x256xf32>
    %c0_19 = arith.constant 0 : index
    %c0_20 = arith.constant 0 : index
    %68 = vector.load %arg4[%c0_19, %c0_20] : memref<4x2xf32, #tpu.memory_space<vmem>>, vector<4x2xf32>
    %69 = vector.extract_strided_slice %68 {offsets = [0, 0], sizes = [4, 1], strides = [1, 1]} : vector<4x2xf32> to vector<4x1xf32>
    %70 = vector.extract_strided_slice %68 {offsets = [0, 1], sizes = [4, 1], strides = [1, 1]} : vector<4x2xf32> to vector<4x1xf32>
    %71 = vector.broadcast %13 : vector<1x256xf32> to vector<4x256xf32>
    %72 = arith.mulf %67, %71 : vector<4x256xf32>
    %cst_21 = arith.constant dense<0.000000e+00> : vector<4xf32>
    %73 = vector.multi_reduction <add>, %72, %cst_21 [1] : vector<4x256xf32> to vector<4xf32>
    %74 = vector.shape_cast %73 : vector<4xf32> to vector<4x1xf32>
    %cst_22 = arith.constant 7.812500e-03 : f32
    %75 = vector.broadcast %cst_22 : f32 to vector<4x1xf32>
    %76 = arith.mulf %74, %75 : vector<4x1xf32>
    %77 = vector.broadcast %76 : vector<4x1xf32> to vector<4x256xf32>
    %78 = arith.subf %67, %77 : vector<4x256xf32>
    %79 = arith.mulf %78, %78 : vector<4x256xf32>
    %80 = vector.broadcast %13 : vector<1x256xf32> to vector<4x256xf32>
    %81 = arith.mulf %79, %80 : vector<4x256xf32>
    %cst_23 = arith.constant dense<0.000000e+00> : vector<4xf32>
    %82 = vector.multi_reduction <add>, %81, %cst_23 [1] : vector<4x256xf32> to vector<4xf32>
    %83 = vector.shape_cast %82 : vector<4xf32> to vector<4x1xf32>
    %cst_24 = arith.constant 7.812500e-03 : f32
    %84 = vector.broadcast %cst_24 : f32 to vector<4x1xf32>
    %85 = arith.mulf %83, %84 : vector<4x1xf32>
    %cst_25 = arith.constant 9.99999974E-6 : f32
    %86 = vector.broadcast %cst_25 : f32 to vector<4x1xf32>
    %87 = arith.addf %85, %86 : vector<4x1xf32>
    %88 = math.rsqrt %87 : vector<4x1xf32>
    %89 = arith.mulf %69, %88 : vector<4x1xf32>
    %90 = arith.mulf %76, %89 : vector<4x1xf32>
    %91 = arith.subf %70, %90 : vector<4x1xf32>
    %92 = vector.broadcast %89 : vector<4x1xf32> to vector<4x256xf32>
    %93 = arith.mulf %67, %92 : vector<4x256xf32>
    %94 = vector.broadcast %91 : vector<4x1xf32> to vector<4x256xf32>
    %95 = arith.addf %93, %94 : vector<4x256xf32>
    %cst_26 = arith.constant 0.000000e+00 : f32
    %96 = vector.broadcast %cst_26 : f32 to vector<4x256xf32>
    %97 = arith.minimumf %95, %96 : vector<4x256xf32>
    %cst_27 = arith.constant 0.000000e+00 : f32
    %98 = vector.broadcast %cst_27 : f32 to vector<4x256xf32>
    %99 = arith.cmpf ogt, %95, %98 : vector<4x256xf32>
    %cst_28 = arith.constant 5.000000e-01 : f32
    %100 = vector.broadcast %cst_28 : f32 to vector<4x256xf32>
    %101 = arith.mulf %100, %97 : vector<4x256xf32>
    %102 = math.tanh %101 : vector<4x256xf32>
    %103 = math.exp %97 : vector<4x256xf32>
    %cst_29 = arith.constant 1.000000e+00 : f32
    %104 = vector.broadcast %cst_29 : f32 to vector<4x256xf32>
    %105 = arith.addf %103, %104 : vector<4x256xf32>
    %106 = arith.mulf %102, %105 : vector<4x256xf32>
    %107 = arith.select %99, %95, %106 : vector<4x256xi1>, vector<4x256xf32>
    %108 = vector.broadcast %13 : vector<1x256xf32> to vector<4x256xf32>
    %109 = arith.mulf %107, %108 : vector<4x256xf32>
    %110 = arith.addf %109, %14 : vector<4x256xf32>
    %cst_30 = arith.constant 0.000000e+00 : f32
    %111 = vector.broadcast %cst_30 : f32 to vector<4x3xf32>
    %112 = vector.extract_strided_slice %110 {offsets = [0, 0], sizes = [4, 253], strides = [1, 1]} : vector<4x256xf32> to vector<4x253xf32>
    %113 = tpu.concatenate %111, %112 in 1 : vector<4x3xf32>, vector<4x253xf32> -> vector<4x256xf32>
    %114 = vector.extract_strided_slice %110 {offsets = [0, 3], sizes = [4, 253], strides = [1, 1]} : vector<4x256xf32> to vector<4x253xf32>
    %cst_31 = arith.constant 0.000000e+00 : f32
    %115 = vector.broadcast %cst_31 : f32 to vector<4x3xf32>
    %116 = tpu.concatenate %114, %115 in 1 : vector<4x253xf32>, vector<4x3xf32> -> vector<4x256xf32>
    %117 = tpu.concatenate %113, %110, %116 in 0 : vector<4x256xf32>, vector<4x256xf32>, vector<4x256xf32> -> vector<12x256xf32>
    %c0_32 = arith.constant 0 : index
    %c0_33 = arith.constant 0 : index
    %118 = vector.load %arg5[%c0_32, %c0_33] : memref<4x12xf32, #tpu.memory_space<vmem>>, vector<4x12xf32>
    %cst_34 = arith.constant dense<0.000000e+00> : vector<4x256xf32>
    %119 = tpu.matmul %118, %117, %cst_34 {dimension_numbers = #tpu.dot_dimension_numbers<[1], [0], [0], [1], [0, 0, 1, 1], [], []>} : vector<4x12xf32>, vector<12x256xf32>, vector<4x256xf32> -> vector<4x256xf32>
    %c0_35 = arith.constant 0 : index
    %c0_36 = arith.constant 0 : index
    %120 = vector.load %arg6[%c0_35, %c0_36] : memref<4x2xf32, #tpu.memory_space<vmem>>, vector<4x2xf32>
    %121 = vector.extract_strided_slice %120 {offsets = [0, 0], sizes = [4, 1], strides = [1, 1]} : vector<4x2xf32> to vector<4x1xf32>
    %122 = vector.extract_strided_slice %120 {offsets = [0, 1], sizes = [4, 1], strides = [1, 1]} : vector<4x2xf32> to vector<4x1xf32>
    %123 = vector.broadcast %13 : vector<1x256xf32> to vector<4x256xf32>
    %124 = arith.mulf %119, %123 : vector<4x256xf32>
    %cst_37 = arith.constant dense<0.000000e+00> : vector<4xf32>
    %125 = vector.multi_reduction <add>, %124, %cst_37 [1] : vector<4x256xf32> to vector<4xf32>
    %126 = vector.shape_cast %125 : vector<4xf32> to vector<4x1xf32>
    %cst_38 = arith.constant 7.812500e-03 : f32
    %127 = vector.broadcast %cst_38 : f32 to vector<4x1xf32>
    %128 = arith.mulf %126, %127 : vector<4x1xf32>
    %129 = vector.broadcast %128 : vector<4x1xf32> to vector<4x256xf32>
    %130 = arith.subf %119, %129 : vector<4x256xf32>
    %131 = arith.mulf %130, %130 : vector<4x256xf32>
    %132 = vector.broadcast %13 : vector<1x256xf32> to vector<4x256xf32>
    %133 = arith.mulf %131, %132 : vector<4x256xf32>
    %cst_39 = arith.constant dense<0.000000e+00> : vector<4xf32>
    %134 = vector.multi_reduction <add>, %133, %cst_39 [1] : vector<4x256xf32> to vector<4xf32>
    %135 = vector.shape_cast %134 : vector<4xf32> to vector<4x1xf32>
    %cst_40 = arith.constant 7.812500e-03 : f32
    %136 = vector.broadcast %cst_40 : f32 to vector<4x1xf32>
    %137 = arith.mulf %135, %136 : vector<4x1xf32>
    %cst_41 = arith.constant 9.99999974E-6 : f32
    %138 = vector.broadcast %cst_41 : f32 to vector<4x1xf32>
    %139 = arith.addf %137, %138 : vector<4x1xf32>
    %140 = math.rsqrt %139 : vector<4x1xf32>
    %141 = arith.mulf %121, %140 : vector<4x1xf32>
    %142 = arith.mulf %128, %141 : vector<4x1xf32>
    %143 = arith.subf %122, %142 : vector<4x1xf32>
    %144 = vector.broadcast %141 : vector<4x1xf32> to vector<4x256xf32>
    %145 = arith.mulf %119, %144 : vector<4x256xf32>
    %146 = vector.broadcast %143 : vector<4x1xf32> to vector<4x256xf32>
    %147 = arith.addf %145, %146 : vector<4x256xf32>
    %cst_42 = arith.constant 0.000000e+00 : f32
    %148 = vector.broadcast %cst_42 : f32 to vector<4x256xf32>
    %149 = arith.minimumf %147, %148 : vector<4x256xf32>
    %cst_43 = arith.constant 0.000000e+00 : f32
    %150 = vector.broadcast %cst_43 : f32 to vector<4x256xf32>
    %151 = arith.cmpf ogt, %147, %150 : vector<4x256xf32>
    %cst_44 = arith.constant 5.000000e-01 : f32
    %152 = vector.broadcast %cst_44 : f32 to vector<4x256xf32>
    %153 = arith.mulf %152, %149 : vector<4x256xf32>
    %154 = math.tanh %153 : vector<4x256xf32>
    %155 = math.exp %149 : vector<4x256xf32>
    %cst_45 = arith.constant 1.000000e+00 : f32
    %156 = vector.broadcast %cst_45 : f32 to vector<4x256xf32>
    %157 = arith.addf %155, %156 : vector<4x256xf32>
    %158 = arith.mulf %154, %157 : vector<4x256xf32>
    %159 = arith.select %151, %147, %158 : vector<4x256xi1>, vector<4x256xf32>
    %160 = vector.broadcast %13 : vector<1x256xf32> to vector<4x256xf32>
    %161 = arith.mulf %159, %160 : vector<4x256xf32>
    %c0_46 = arith.constant 0 : index
    %c0_47 = arith.constant 0 : index
    %162 = vector.load %arg7[%c0_46, %c0_47] : memref<4x4xf32, #tpu.memory_space<vmem>>, vector<4x4xf32>
    %cst_48 = arith.constant dense<0.000000e+00> : vector<4x256xf32>
    %163 = tpu.matmul %162, %161, %cst_48 {dimension_numbers = #tpu.dot_dimension_numbers<[1], [0], [0], [1], [0, 0, 1, 1], [], []>} : vector<4x4xf32>, vector<4x256xf32>, vector<4x256xf32> -> vector<4x256xf32>
    %c0_49 = arith.constant 0 : index
    %c0_50 = arith.constant 0 : index
    %164 = vector.load %arg8[%c0_49, %c0_50] : memref<4x2xf32, #tpu.memory_space<vmem>>, vector<4x2xf32>
    %165 = vector.extract_strided_slice %164 {offsets = [0, 0], sizes = [4, 1], strides = [1, 1]} : vector<4x2xf32> to vector<4x1xf32>
    %166 = vector.extract_strided_slice %164 {offsets = [0, 1], sizes = [4, 1], strides = [1, 1]} : vector<4x2xf32> to vector<4x1xf32>
    %167 = vector.broadcast %13 : vector<1x256xf32> to vector<4x256xf32>
    %168 = arith.mulf %163, %167 : vector<4x256xf32>
    %cst_51 = arith.constant dense<0.000000e+00> : vector<4xf32>
    %169 = vector.multi_reduction <add>, %168, %cst_51 [1] : vector<4x256xf32> to vector<4xf32>
    %170 = vector.shape_cast %169 : vector<4xf32> to vector<4x1xf32>
    %cst_52 = arith.constant 7.812500e-03 : f32
    %171 = vector.broadcast %cst_52 : f32 to vector<4x1xf32>
    %172 = arith.mulf %170, %171 : vector<4x1xf32>
    %173 = vector.broadcast %172 : vector<4x1xf32> to vector<4x256xf32>
    %174 = arith.subf %163, %173 : vector<4x256xf32>
    %175 = arith.mulf %174, %174 : vector<4x256xf32>
    %176 = vector.broadcast %13 : vector<1x256xf32> to vector<4x256xf32>
    %177 = arith.mulf %175, %176 : vector<4x256xf32>
    %cst_53 = arith.constant dense<0.000000e+00> : vector<4xf32>
    %178 = vector.multi_reduction <add>, %177, %cst_53 [1] : vector<4x256xf32> to vector<4xf32>
    %179 = vector.shape_cast %178 : vector<4xf32> to vector<4x1xf32>
    %cst_54 = arith.constant 7.812500e-03 : f32
    %180 = vector.broadcast %cst_54 : f32 to vector<4x1xf32>
    %181 = arith.mulf %179, %180 : vector<4x1xf32>
    %cst_55 = arith.constant 9.99999974E-6 : f32
    %182 = vector.broadcast %cst_55 : f32 to vector<4x1xf32>
    %183 = arith.addf %181, %182 : vector<4x1xf32>
    %184 = math.rsqrt %183 : vector<4x1xf32>
    %185 = arith.mulf %165, %184 : vector<4x1xf32>
    %186 = arith.mulf %172, %185 : vector<4x1xf32>
    %187 = arith.subf %166, %186 : vector<4x1xf32>
    %188 = vector.broadcast %185 : vector<4x1xf32> to vector<4x256xf32>
    %189 = arith.mulf %163, %188 : vector<4x256xf32>
    %190 = vector.broadcast %187 : vector<4x1xf32> to vector<4x256xf32>
    %191 = arith.addf %189, %190 : vector<4x256xf32>
    %cst_56 = arith.constant 0.000000e+00 : f32
    %192 = vector.broadcast %cst_56 : f32 to vector<4x256xf32>
    %193 = arith.minimumf %191, %192 : vector<4x256xf32>
    %cst_57 = arith.constant 0.000000e+00 : f32
    %194 = vector.broadcast %cst_57 : f32 to vector<4x256xf32>
    %195 = arith.cmpf ogt, %191, %194 : vector<4x256xf32>
    %cst_58 = arith.constant 5.000000e-01 : f32
    %196 = vector.broadcast %cst_58 : f32 to vector<4x256xf32>
    %197 = arith.mulf %196, %193 : vector<4x256xf32>
    %198 = math.tanh %197 : vector<4x256xf32>
    %199 = math.exp %193 : vector<4x256xf32>
    %cst_59 = arith.constant 1.000000e+00 : f32
    %200 = vector.broadcast %cst_59 : f32 to vector<4x256xf32>
    %201 = arith.addf %199, %200 : vector<4x256xf32>
    %202 = arith.mulf %198, %201 : vector<4x256xf32>
    %203 = arith.select %195, %191, %202 : vector<4x256xi1>, vector<4x256xf32>
    %204 = vector.broadcast %13 : vector<1x256xf32> to vector<4x256xf32>
    %205 = arith.mulf %203, %204 : vector<4x256xf32>
    %206 = arith.addf %14, %109 : vector<4x256xf32>
    %207 = arith.addf %206, %205 : vector<4x256xf32>
    %cst_60 = arith.constant 0.000000e+00 : f32
    %208 = vector.broadcast %cst_60 : f32 to vector<4x9xf32>
    %209 = vector.extract_strided_slice %207 {offsets = [0, 0], sizes = [4, 247], strides = [1, 1]} : vector<4x256xf32> to vector<4x247xf32>
    %210 = tpu.concatenate %208, %209 in 1 : vector<4x9xf32>, vector<4x247xf32> -> vector<4x256xf32>
    %211 = vector.extract_strided_slice %207 {offsets = [0, 9], sizes = [4, 247], strides = [1, 1]} : vector<4x256xf32> to vector<4x247xf32>
    %cst_61 = arith.constant 0.000000e+00 : f32
    %212 = vector.broadcast %cst_61 : f32 to vector<4x9xf32>
    %213 = tpu.concatenate %211, %212 in 1 : vector<4x247xf32>, vector<4x9xf32> -> vector<4x256xf32>
    %214 = tpu.concatenate %210, %207, %213 in 0 : vector<4x256xf32>, vector<4x256xf32>, vector<4x256xf32> -> vector<12x256xf32>
    %c0_62 = arith.constant 0 : index
    %c0_63 = arith.constant 0 : index
    %215 = vector.load %arg9[%c0_62, %c0_63] : memref<4x12xf32, #tpu.memory_space<vmem>>, vector<4x12xf32>
    %cst_64 = arith.constant dense<0.000000e+00> : vector<4x256xf32>
    %216 = tpu.matmul %215, %214, %cst_64 {dimension_numbers = #tpu.dot_dimension_numbers<[1], [0], [0], [1], [0, 0, 1, 1], [], []>} : vector<4x12xf32>, vector<12x256xf32>, vector<4x256xf32> -> vector<4x256xf32>
    %c0_65 = arith.constant 0 : index
    %c0_66 = arith.constant 0 : index
    %217 = vector.load %arg10[%c0_65, %c0_66] : memref<4x2xf32, #tpu.memory_space<vmem>>, vector<4x2xf32>
    %218 = vector.extract_strided_slice %217 {offsets = [0, 0], sizes = [4, 1], strides = [1, 1]} : vector<4x2xf32> to vector<4x1xf32>
    %219 = vector.extract_strided_slice %217 {offsets = [0, 1], sizes = [4, 1], strides = [1, 1]} : vector<4x2xf32> to vector<4x1xf32>
    %220 = vector.broadcast %13 : vector<1x256xf32> to vector<4x256xf32>
    %221 = arith.mulf %216, %220 : vector<4x256xf32>
    %cst_67 = arith.constant dense<0.000000e+00> : vector<4xf32>
    %222 = vector.multi_reduction <add>, %221, %cst_67 [1] : vector<4x256xf32> to vector<4xf32>
    %223 = vector.shape_cast %222 : vector<4xf32> to vector<4x1xf32>
    %cst_68 = arith.constant 7.812500e-03 : f32
    %224 = vector.broadcast %cst_68 : f32 to vector<4x1xf32>
    %225 = arith.mulf %223, %224 : vector<4x1xf32>
    %226 = vector.broadcast %225 : vector<4x1xf32> to vector<4x256xf32>
    %227 = arith.subf %216, %226 : vector<4x256xf32>
    %228 = arith.mulf %227, %227 : vector<4x256xf32>
    %229 = vector.broadcast %13 : vector<1x256xf32> to vector<4x256xf32>
    %230 = arith.mulf %228, %229 : vector<4x256xf32>
    %cst_69 = arith.constant dense<0.000000e+00> : vector<4xf32>
    %231 = vector.multi_reduction <add>, %230, %cst_69 [1] : vector<4x256xf32> to vector<4xf32>
    %232 = vector.shape_cast %231 : vector<4xf32> to vector<4x1xf32>
    %cst_70 = arith.constant 7.812500e-03 : f32
    %233 = vector.broadcast %cst_70 : f32 to vector<4x1xf32>
    %234 = arith.mulf %232, %233 : vector<4x1xf32>
    %cst_71 = arith.constant 9.99999974E-6 : f32
    %235 = vector.broadcast %cst_71 : f32 to vector<4x1xf32>
    %236 = arith.addf %234, %235 : vector<4x1xf32>
    %237 = math.rsqrt %236 : vector<4x1xf32>
    %238 = arith.mulf %218, %237 : vector<4x1xf32>
    %239 = arith.mulf %225, %238 : vector<4x1xf32>
    %240 = arith.subf %219, %239 : vector<4x1xf32>
    %241 = vector.broadcast %238 : vector<4x1xf32> to vector<4x256xf32>
    %242 = arith.mulf %216, %241 : vector<4x256xf32>
    %243 = vector.broadcast %240 : vector<4x1xf32> to vector<4x256xf32>
    %244 = arith.addf %242, %243 : vector<4x256xf32>
    %cst_72 = arith.constant 0.000000e+00 : f32
    %245 = vector.broadcast %cst_72 : f32 to vector<4x256xf32>
    %246 = arith.minimumf %244, %245 : vector<4x256xf32>
    %cst_73 = arith.constant 0.000000e+00 : f32
    %247 = vector.broadcast %cst_73 : f32 to vector<4x256xf32>
    %248 = arith.cmpf ogt, %244, %247 : vector<4x256xf32>
    %cst_74 = arith.constant 5.000000e-01 : f32
    %249 = vector.broadcast %cst_74 : f32 to vector<4x256xf32>
    %250 = arith.mulf %249, %246 : vector<4x256xf32>
    %251 = math.tanh %250 : vector<4x256xf32>
    %252 = math.exp %246 : vector<4x256xf32>
    %cst_75 = arith.constant 1.000000e+00 : f32
    %253 = vector.broadcast %cst_75 : f32 to vector<4x256xf32>
    %254 = arith.addf %252, %253 : vector<4x256xf32>
    %255 = arith.mulf %251, %254 : vector<4x256xf32>
    %256 = arith.select %248, %244, %255 : vector<4x256xi1>, vector<4x256xf32>
    %257 = vector.broadcast %13 : vector<1x256xf32> to vector<4x256xf32>
    %258 = arith.mulf %256, %257 : vector<4x256xf32>
    %c0_76 = arith.constant 0 : index
    %c0_77 = arith.constant 0 : index
    %259 = vector.load %arg11[%c0_76, %c0_77] : memref<4x4xf32, #tpu.memory_space<vmem>>, vector<4x4xf32>
    %cst_78 = arith.constant dense<0.000000e+00> : vector<4x256xf32>
    %260 = tpu.matmul %259, %258, %cst_78 {dimension_numbers = #tpu.dot_dimension_numbers<[1], [0], [0], [1], [0, 0, 1, 1], [], []>} : vector<4x4xf32>, vector<4x256xf32>, vector<4x256xf32> -> vector<4x256xf32>
    %c0_79 = arith.constant 0 : index
    %c0_80 = arith.constant 0 : index
    %261 = vector.load %arg12[%c0_79, %c0_80] : memref<4x2xf32, #tpu.memory_space<vmem>>, vector<4x2xf32>
    %262 = vector.extract_strided_slice %261 {offsets = [0, 0], sizes = [4, 1], strides = [1, 1]} : vector<4x2xf32> to vector<4x1xf32>
    %263 = vector.extract_strided_slice %261 {offsets = [0, 1], sizes = [4, 1], strides = [1, 1]} : vector<4x2xf32> to vector<4x1xf32>
    %264 = vector.broadcast %13 : vector<1x256xf32> to vector<4x256xf32>
    %265 = arith.mulf %260, %264 : vector<4x256xf32>
    %cst_81 = arith.constant dense<0.000000e+00> : vector<4xf32>
    %266 = vector.multi_reduction <add>, %265, %cst_81 [1] : vector<4x256xf32> to vector<4xf32>
    %267 = vector.shape_cast %266 : vector<4xf32> to vector<4x1xf32>
    %cst_82 = arith.constant 7.812500e-03 : f32
    %268 = vector.broadcast %cst_82 : f32 to vector<4x1xf32>
    %269 = arith.mulf %267, %268 : vector<4x1xf32>
    %270 = vector.broadcast %269 : vector<4x1xf32> to vector<4x256xf32>
    %271 = arith.subf %260, %270 : vector<4x256xf32>
    %272 = arith.mulf %271, %271 : vector<4x256xf32>
    %273 = vector.broadcast %13 : vector<1x256xf32> to vector<4x256xf32>
    %274 = arith.mulf %272, %273 : vector<4x256xf32>
    %cst_83 = arith.constant dense<0.000000e+00> : vector<4xf32>
    %275 = vector.multi_reduction <add>, %274, %cst_83 [1] : vector<4x256xf32> to vector<4xf32>
    %276 = vector.shape_cast %275 : vector<4xf32> to vector<4x1xf32>
    %cst_84 = arith.constant 7.812500e-03 : f32
    %277 = vector.broadcast %cst_84 : f32 to vector<4x1xf32>
    %278 = arith.mulf %276, %277 : vector<4x1xf32>
    %cst_85 = arith.constant 9.99999974E-6 : f32
    %279 = vector.broadcast %cst_85 : f32 to vector<4x1xf32>
    %280 = arith.addf %278, %279 : vector<4x1xf32>
    %281 = math.rsqrt %280 : vector<4x1xf32>
    %282 = arith.mulf %262, %281 : vector<4x1xf32>
    %283 = arith.mulf %269, %282 : vector<4x1xf32>
    %284 = arith.subf %263, %283 : vector<4x1xf32>
    %285 = vector.broadcast %282 : vector<4x1xf32> to vector<4x256xf32>
    %286 = arith.mulf %260, %285 : vector<4x256xf32>
    %287 = vector.broadcast %284 : vector<4x1xf32> to vector<4x256xf32>
    %288 = arith.addf %286, %287 : vector<4x256xf32>
    %cst_86 = arith.constant 0.000000e+00 : f32
    %289 = vector.broadcast %cst_86 : f32 to vector<4x256xf32>
    %290 = arith.minimumf %288, %289 : vector<4x256xf32>
    %cst_87 = arith.constant 0.000000e+00 : f32
    %291 = vector.broadcast %cst_87 : f32 to vector<4x256xf32>
    %292 = arith.cmpf ogt, %288, %291 : vector<4x256xf32>
    %cst_88 = arith.constant 5.000000e-01 : f32
    %293 = vector.broadcast %cst_88 : f32 to vector<4x256xf32>
    %294 = arith.mulf %293, %290 : vector<4x256xf32>
    %295 = math.tanh %294 : vector<4x256xf32>
    %296 = math.exp %290 : vector<4x256xf32>
    %cst_89 = arith.constant 1.000000e+00 : f32
    %297 = vector.broadcast %cst_89 : f32 to vector<4x256xf32>
    %298 = arith.addf %296, %297 : vector<4x256xf32>
    %299 = arith.mulf %295, %298 : vector<4x256xf32>
    %300 = arith.select %292, %288, %299 : vector<4x256xi1>, vector<4x256xf32>
    %301 = vector.broadcast %13 : vector<1x256xf32> to vector<4x256xf32>
    %302 = arith.mulf %300, %301 : vector<4x256xf32>
    %303 = arith.addf %14, %109 : vector<4x256xf32>
    %304 = arith.addf %303, %205 : vector<4x256xf32>
    %305 = arith.addf %304, %302 : vector<4x256xf32>
    %306 = tpu.iota {dimensions = array<i32: 0>} : vector<256x128xi32>
    %307 = tpu.iota {dimensions = array<i32: 1>} : vector<256x128xi32>
    %c0_i32 = arith.constant 0 : i32
    %308 = vector.broadcast %c0_i32 : i32 to vector<256x128xi32>
    %309 = arith.subi %307, %308 : vector<256x128xi32>
    %c0_i32_90 = arith.constant 0 : i32
    %310 = vector.broadcast %c0_i32_90 : i32 to vector<256x128xi32>
    %311 = arith.cmpi sge, %309, %310 : vector<256x128xi32>
    %c31_i32 = arith.constant 31 : i32
    %312 = vector.broadcast %c31_i32 : i32 to vector<256x128xi32>
    %313 = arith.cmpi slt, %309, %312 : vector<256x128xi32>
    %314 = arith.andi %311, %313 : vector<256x128xi1>
    %c2_i32 = arith.constant 2 : i32
    %315 = vector.broadcast %c2_i32 : i32 to vector<256x128xi32>
    %316 = arith.muli %315, %309 : vector<256x128xi32>
    %c9_i32_91 = arith.constant 9 : i32
    %317 = vector.broadcast %c9_i32_91 : i32 to vector<256x128xi32>
    %318 = arith.addi %317, %316 : vector<256x128xi32>
    %c0_i32_92 = arith.constant 0 : i32
    %319 = vector.broadcast %c0_i32_92 : i32 to vector<256x128xi32>
    %320 = arith.addi %318, %319 : vector<256x128xi32>
    %321 = arith.cmpi eq, %306, %320 : vector<256x128xi32>
    %322 = arith.andi %314, %321 : vector<256x128xi1>
    %c31_i32_93 = arith.constant 31 : i32
    %323 = vector.broadcast %c31_i32_93 : i32 to vector<256x128xi32>
    %324 = arith.subi %307, %323 : vector<256x128xi32>
    %c0_i32_94 = arith.constant 0 : i32
    %325 = vector.broadcast %c0_i32_94 : i32 to vector<256x128xi32>
    %326 = arith.cmpi sge, %324, %325 : vector<256x128xi32>
    %c31_i32_95 = arith.constant 31 : i32
    %327 = vector.broadcast %c31_i32_95 : i32 to vector<256x128xi32>
    %328 = arith.cmpi slt, %324, %327 : vector<256x128xi32>
    %329 = arith.andi %326, %328 : vector<256x128xi1>
    %c2_i32_96 = arith.constant 2 : i32
    %330 = vector.broadcast %c2_i32_96 : i32 to vector<256x128xi32>
    %331 = arith.muli %330, %324 : vector<256x128xi32>
    %c91_i32_97 = arith.constant 91 : i32
    %332 = vector.broadcast %c91_i32_97 : i32 to vector<256x128xi32>
    %333 = arith.addi %332, %331 : vector<256x128xi32>
    %c0_i32_98 = arith.constant 0 : i32
    %334 = vector.broadcast %c0_i32_98 : i32 to vector<256x128xi32>
    %335 = arith.addi %333, %334 : vector<256x128xi32>
    %336 = arith.cmpi eq, %306, %335 : vector<256x128xi32>
    %337 = arith.andi %329, %336 : vector<256x128xi1>
    %338 = arith.ori %322, %337 : vector<256x128xi1>
    %339 = arith.extui %338 : vector<256x128xi1> to vector<256x128xi32>
    %340 = arith.sitofp %339 : vector<256x128xi32> to vector<256x128xf32>
    %cst_99 = arith.constant dense<0.000000e+00> : vector<4x128xf32>
    %341 = tpu.matmul %305, %340, %cst_99 {dimension_numbers = #tpu.dot_dimension_numbers<[1], [0], [0], [1], [0, 0, 1, 1], [], []>} : vector<4x256xf32>, vector<256x128xf32>, vector<4x128xf32> -> vector<4x128xf32>
    %c0_i32_100 = arith.constant 0 : i32
    %342 = vector.broadcast %c0_i32_100 : i32 to vector<256x128xi32>
    %343 = arith.subi %307, %342 : vector<256x128xi32>
    %c0_i32_101 = arith.constant 0 : i32
    %344 = vector.broadcast %c0_i32_101 : i32 to vector<256x128xi32>
    %345 = arith.cmpi sge, %343, %344 : vector<256x128xi32>
    %c31_i32_102 = arith.constant 31 : i32
    %346 = vector.broadcast %c31_i32_102 : i32 to vector<256x128xi32>
    %347 = arith.cmpi slt, %343, %346 : vector<256x128xi32>
    %348 = arith.andi %345, %347 : vector<256x128xi1>
    %c2_i32_103 = arith.constant 2 : i32
    %349 = vector.broadcast %c2_i32_103 : i32 to vector<256x128xi32>
    %350 = arith.muli %349, %343 : vector<256x128xi32>
    %c9_i32_104 = arith.constant 9 : i32
    %351 = vector.broadcast %c9_i32_104 : i32 to vector<256x128xi32>
    %352 = arith.addi %351, %350 : vector<256x128xi32>
    %c1_i32 = arith.constant 1 : i32
    %353 = vector.broadcast %c1_i32 : i32 to vector<256x128xi32>
    %354 = arith.addi %352, %353 : vector<256x128xi32>
    %355 = arith.cmpi eq, %306, %354 : vector<256x128xi32>
    %356 = arith.andi %348, %355 : vector<256x128xi1>
    %c31_i32_105 = arith.constant 31 : i32
    %357 = vector.broadcast %c31_i32_105 : i32 to vector<256x128xi32>
    %358 = arith.subi %307, %357 : vector<256x128xi32>
    %c0_i32_106 = arith.constant 0 : i32
    %359 = vector.broadcast %c0_i32_106 : i32 to vector<256x128xi32>
    %360 = arith.cmpi sge, %358, %359 : vector<256x128xi32>
    %c31_i32_107 = arith.constant 31 : i32
    %361 = vector.broadcast %c31_i32_107 : i32 to vector<256x128xi32>
    %362 = arith.cmpi slt, %358, %361 : vector<256x128xi32>
    %363 = arith.andi %360, %362 : vector<256x128xi1>
    %c2_i32_108 = arith.constant 2 : i32
    %364 = vector.broadcast %c2_i32_108 : i32 to vector<256x128xi32>
    %365 = arith.muli %364, %358 : vector<256x128xi32>
    %c91_i32_109 = arith.constant 91 : i32
    %366 = vector.broadcast %c91_i32_109 : i32 to vector<256x128xi32>
    %367 = arith.addi %366, %365 : vector<256x128xi32>
    %c1_i32_110 = arith.constant 1 : i32
    %368 = vector.broadcast %c1_i32_110 : i32 to vector<256x128xi32>
    %369 = arith.addi %367, %368 : vector<256x128xi32>
    %370 = arith.cmpi eq, %306, %369 : vector<256x128xi32>
    %371 = arith.andi %363, %370 : vector<256x128xi1>
    %372 = arith.ori %356, %371 : vector<256x128xi1>
    %373 = arith.extui %372 : vector<256x128xi1> to vector<256x128xi32>
    %374 = arith.sitofp %373 : vector<256x128xi32> to vector<256x128xf32>
    %cst_111 = arith.constant dense<0.000000e+00> : vector<4x128xf32>
    %375 = tpu.matmul %305, %374, %cst_111 {dimension_numbers = #tpu.dot_dimension_numbers<[1], [0], [0], [1], [0, 0, 1, 1], [], []>} : vector<4x256xf32>, vector<256x128xf32>, vector<4x128xf32> -> vector<4x128xf32>
    %c0_i32_112 = arith.constant 0 : i32
    %376 = vector.broadcast %c0_i32_112 : i32 to vector<256x128xi32>
    %377 = arith.subi %307, %376 : vector<256x128xi32>
    %c0_i32_113 = arith.constant 0 : i32
    %378 = vector.broadcast %c0_i32_113 : i32 to vector<256x128xi32>
    %379 = arith.cmpi sge, %377, %378 : vector<256x128xi32>
    %c31_i32_114 = arith.constant 31 : i32
    %380 = vector.broadcast %c31_i32_114 : i32 to vector<256x128xi32>
    %381 = arith.cmpi slt, %377, %380 : vector<256x128xi32>
    %382 = arith.andi %379, %381 : vector<256x128xi1>
    %c2_i32_115 = arith.constant 2 : i32
    %383 = vector.broadcast %c2_i32_115 : i32 to vector<256x128xi32>
    %384 = arith.muli %383, %377 : vector<256x128xi32>
    %c9_i32_116 = arith.constant 9 : i32
    %385 = vector.broadcast %c9_i32_116 : i32 to vector<256x128xi32>
    %386 = arith.addi %385, %384 : vector<256x128xi32>
    %c2_i32_117 = arith.constant 2 : i32
    %387 = vector.broadcast %c2_i32_117 : i32 to vector<256x128xi32>
    %388 = arith.addi %386, %387 : vector<256x128xi32>
    %389 = arith.cmpi eq, %306, %388 : vector<256x128xi32>
    %390 = arith.andi %382, %389 : vector<256x128xi1>
    %c31_i32_118 = arith.constant 31 : i32
    %391 = vector.broadcast %c31_i32_118 : i32 to vector<256x128xi32>
    %392 = arith.subi %307, %391 : vector<256x128xi32>
    %c0_i32_119 = arith.constant 0 : i32
    %393 = vector.broadcast %c0_i32_119 : i32 to vector<256x128xi32>
    %394 = arith.cmpi sge, %392, %393 : vector<256x128xi32>
    %c31_i32_120 = arith.constant 31 : i32
    %395 = vector.broadcast %c31_i32_120 : i32 to vector<256x128xi32>
    %396 = arith.cmpi slt, %392, %395 : vector<256x128xi32>
    %397 = arith.andi %394, %396 : vector<256x128xi1>
    %c2_i32_121 = arith.constant 2 : i32
    %398 = vector.broadcast %c2_i32_121 : i32 to vector<256x128xi32>
    %399 = arith.muli %398, %392 : vector<256x128xi32>
    %c91_i32_122 = arith.constant 91 : i32
    %400 = vector.broadcast %c91_i32_122 : i32 to vector<256x128xi32>
    %401 = arith.addi %400, %399 : vector<256x128xi32>
    %c2_i32_123 = arith.constant 2 : i32
    %402 = vector.broadcast %c2_i32_123 : i32 to vector<256x128xi32>
    %403 = arith.addi %401, %402 : vector<256x128xi32>
    %404 = arith.cmpi eq, %306, %403 : vector<256x128xi32>
    %405 = arith.andi %397, %404 : vector<256x128xi1>
    %406 = arith.ori %390, %405 : vector<256x128xi1>
    %407 = arith.extui %406 : vector<256x128xi1> to vector<256x128xi32>
    %408 = arith.sitofp %407 : vector<256x128xi32> to vector<256x128xf32>
    %cst_124 = arith.constant dense<0.000000e+00> : vector<4x128xf32>
    %409 = tpu.matmul %305, %408, %cst_124 {dimension_numbers = #tpu.dot_dimension_numbers<[1], [0], [0], [1], [0, 0, 1, 1], [], []>} : vector<4x256xf32>, vector<256x128xf32>, vector<4x128xf32> -> vector<4x128xf32>
    %c0_i32_125 = arith.constant 0 : i32
    %410 = vector.broadcast %c0_i32_125 : i32 to vector<256x128xi32>
    %411 = arith.subi %307, %410 : vector<256x128xi32>
    %c0_i32_126 = arith.constant 0 : i32
    %412 = vector.broadcast %c0_i32_126 : i32 to vector<256x128xi32>
    %413 = arith.cmpi sge, %411, %412 : vector<256x128xi32>
    %c31_i32_127 = arith.constant 31 : i32
    %414 = vector.broadcast %c31_i32_127 : i32 to vector<256x128xi32>
    %415 = arith.cmpi slt, %411, %414 : vector<256x128xi32>
    %416 = arith.andi %413, %415 : vector<256x128xi1>
    %c2_i32_128 = arith.constant 2 : i32
    %417 = vector.broadcast %c2_i32_128 : i32 to vector<256x128xi32>
    %418 = arith.muli %417, %411 : vector<256x128xi32>
    %c9_i32_129 = arith.constant 9 : i32
    %419 = vector.broadcast %c9_i32_129 : i32 to vector<256x128xi32>
    %420 = arith.addi %419, %418 : vector<256x128xi32>
    %c3_i32 = arith.constant 3 : i32
    %421 = vector.broadcast %c3_i32 : i32 to vector<256x128xi32>
    %422 = arith.addi %420, %421 : vector<256x128xi32>
    %423 = arith.cmpi eq, %306, %422 : vector<256x128xi32>
    %424 = arith.andi %416, %423 : vector<256x128xi1>
    %c31_i32_130 = arith.constant 31 : i32
    %425 = vector.broadcast %c31_i32_130 : i32 to vector<256x128xi32>
    %426 = arith.subi %307, %425 : vector<256x128xi32>
    %c0_i32_131 = arith.constant 0 : i32
    %427 = vector.broadcast %c0_i32_131 : i32 to vector<256x128xi32>
    %428 = arith.cmpi sge, %426, %427 : vector<256x128xi32>
    %c31_i32_132 = arith.constant 31 : i32
    %429 = vector.broadcast %c31_i32_132 : i32 to vector<256x128xi32>
    %430 = arith.cmpi slt, %426, %429 : vector<256x128xi32>
    %431 = arith.andi %428, %430 : vector<256x128xi1>
    %c2_i32_133 = arith.constant 2 : i32
    %432 = vector.broadcast %c2_i32_133 : i32 to vector<256x128xi32>
    %433 = arith.muli %432, %426 : vector<256x128xi32>
    %c91_i32_134 = arith.constant 91 : i32
    %434 = vector.broadcast %c91_i32_134 : i32 to vector<256x128xi32>
    %435 = arith.addi %434, %433 : vector<256x128xi32>
    %c3_i32_135 = arith.constant 3 : i32
    %436 = vector.broadcast %c3_i32_135 : i32 to vector<256x128xi32>
    %437 = arith.addi %435, %436 : vector<256x128xi32>
    %438 = arith.cmpi eq, %306, %437 : vector<256x128xi32>
    %439 = arith.andi %431, %438 : vector<256x128xi1>
    %440 = arith.ori %424, %439 : vector<256x128xi1>
    %441 = arith.extui %440 : vector<256x128xi1> to vector<256x128xi32>
    %442 = arith.sitofp %441 : vector<256x128xi32> to vector<256x128xf32>
    %cst_136 = arith.constant dense<0.000000e+00> : vector<4x128xf32>
    %443 = tpu.matmul %305, %442, %cst_136 {dimension_numbers = #tpu.dot_dimension_numbers<[1], [0], [0], [1], [0, 0, 1, 1], [], []>} : vector<4x256xf32>, vector<256x128xf32>, vector<4x128xf32> -> vector<4x128xf32>
    %444 = tpu.concatenate %341, %375, %409, %443 in 0 : vector<4x128xf32>, vector<4x128xf32>, vector<4x128xf32>, vector<4x128xf32> -> vector<16x128xf32>
    %c0_137 = arith.constant 0 : index
    %c0_138 = arith.constant 0 : index
    %445 = vector.load %arg13[%c0_137, %c0_138] : memref<8x16xf32, #tpu.memory_space<vmem>>, vector<8x16xf32>
    %cst_139 = arith.constant dense<0.000000e+00> : vector<8x128xf32>
    %446 = tpu.matmul %445, %444, %cst_139 {dimension_numbers = #tpu.dot_dimension_numbers<[1], [0], [0], [1], [0, 0, 1, 1], [], []>} : vector<8x16xf32>, vector<16x128xf32>, vector<8x128xf32> -> vector<8x128xf32>
    %447 = tpu.iota {dimensions = array<i32: 1>} : vector<1x128xi32>
    %c62_i32 = arith.constant 62 : i32
    %448 = vector.broadcast %c62_i32 : i32 to vector<1x128xi32>
    %449 = arith.cmpi slt, %447, %448 : vector<1x128xi32>
    %450 = arith.extui %449 : vector<1x128xi1> to vector<1x128xi32>
    %451 = arith.sitofp %450 : vector<1x128xi32> to vector<1x128xf32>
    %c0_140 = arith.constant 0 : index
    %c0_141 = arith.constant 0 : index
    %452 = vector.load %arg14[%c0_140, %c0_141] : memref<8x2xf32, #tpu.memory_space<vmem>>, vector<8x2xf32>
    %453 = vector.extract_strided_slice %452 {offsets = [0, 0], sizes = [8, 1], strides = [1, 1]} : vector<8x2xf32> to vector<8x1xf32>
    %454 = vector.extract_strided_slice %452 {offsets = [0, 1], sizes = [8, 1], strides = [1, 1]} : vector<8x2xf32> to vector<8x1xf32>
    %455 = vector.broadcast %451 : vector<1x128xf32> to vector<8x128xf32>
    %456 = arith.mulf %446, %455 : vector<8x128xf32>
    %cst_142 = arith.constant dense<0.000000e+00> : vector<8xf32>
    %457 = vector.multi_reduction <add>, %456, %cst_142 [1] : vector<8x128xf32> to vector<8xf32>
    %458 = vector.shape_cast %457 : vector<8xf32> to vector<8x1xf32>
    %cst_143 = arith.constant 0.0161290318 : f32
    %459 = vector.broadcast %cst_143 : f32 to vector<8x1xf32>
    %460 = arith.mulf %458, %459 : vector<8x1xf32>
    %461 = vector.broadcast %460 : vector<8x1xf32> to vector<8x128xf32>
    %462 = arith.subf %446, %461 : vector<8x128xf32>
    %463 = arith.mulf %462, %462 : vector<8x128xf32>
    %464 = vector.broadcast %451 : vector<1x128xf32> to vector<8x128xf32>
    %465 = arith.mulf %463, %464 : vector<8x128xf32>
    %cst_144 = arith.constant dense<0.000000e+00> : vector<8xf32>
    %466 = vector.multi_reduction <add>, %465, %cst_144 [1] : vector<8x128xf32> to vector<8xf32>
    %467 = vector.shape_cast %466 : vector<8xf32> to vector<8x1xf32>
    %cst_145 = arith.constant 0.0161290318 : f32
    %468 = vector.broadcast %cst_145 : f32 to vector<8x1xf32>
    %469 = arith.mulf %467, %468 : vector<8x1xf32>
    %cst_146 = arith.constant 9.99999974E-6 : f32
    %470 = vector.broadcast %cst_146 : f32 to vector<8x1xf32>
    %471 = arith.addf %469, %470 : vector<8x1xf32>
    %472 = math.rsqrt %471 : vector<8x1xf32>
    %473 = arith.mulf %453, %472 : vector<8x1xf32>
    %474 = arith.mulf %460, %473 : vector<8x1xf32>
    %475 = arith.subf %454, %474 : vector<8x1xf32>
    %476 = vector.broadcast %473 : vector<8x1xf32> to vector<8x128xf32>
    %477 = arith.mulf %446, %476 : vector<8x128xf32>
    %478 = vector.broadcast %475 : vector<8x1xf32> to vector<8x128xf32>
    %479 = arith.addf %477, %478 : vector<8x128xf32>
    %cst_147 = arith.constant 0.000000e+00 : f32
    %480 = vector.broadcast %cst_147 : f32 to vector<8x128xf32>
    %481 = arith.minimumf %479, %480 : vector<8x128xf32>
    %cst_148 = arith.constant 0.000000e+00 : f32
    %482 = vector.broadcast %cst_148 : f32 to vector<8x128xf32>
    %483 = arith.cmpf ogt, %479, %482 : vector<8x128xf32>
    %cst_149 = arith.constant 5.000000e-01 : f32
    %484 = vector.broadcast %cst_149 : f32 to vector<8x128xf32>
    %485 = arith.mulf %484, %481 : vector<8x128xf32>
    %486 = math.tanh %485 : vector<8x128xf32>
    %487 = math.exp %481 : vector<8x128xf32>
    %cst_150 = arith.constant 1.000000e+00 : f32
    %488 = vector.broadcast %cst_150 : f32 to vector<8x128xf32>
    %489 = arith.addf %487, %488 : vector<8x128xf32>
    %490 = arith.mulf %486, %489 : vector<8x128xf32>
    %491 = arith.select %483, %479, %490 : vector<8x128xi1>, vector<8x128xf32>
    %492 = vector.broadcast %451 : vector<1x128xf32> to vector<8x128xf32>
    %493 = arith.mulf %491, %492 : vector<8x128xf32>
    %c0_151 = arith.constant 0 : index
    %c0_152 = arith.constant 0 : index
    %494 = vector.load %arg15[%c0_151, %c0_152] : memref<8x128xf32, #tpu.memory_space<vmem>>, vector<8x128xf32>
    tpu.vector_store %arg15[%c0_151, %c0_152], %493 {strides = array<i32>} : memref<8x128xf32, #tpu.memory_space<vmem>>, vector<8x128xf32>,
    return
  }
}

</mosaic_0001>

<llo_original>
// kernel: upsampling_layer_forward.1
$region0: #{upsampling_layer_forward.1}
  #allocation0 [shape = 'u32[]', space=smem, size = 0x4, offset = 0x4, fixed_abs, tag = 'smem constant byte address 0x4 - core index']
  #allocation1 [shape = 'u32[144,128]{1,0:T(1,128)}', space=vmem, size = 0x12000, scoped, tag = 'internal scratch']
  %s0 = inlined_call_operand.vmem [shape: f32[4,256], index: 0, kind: input, shape index: {}]
  %s1 = inlined_call_operand.vmem [shape: f32[4,12], index: 1, kind: input, shape index: {}]
  %s2 = inlined_call_operand.vmem [shape: f32[4,2], index: 2, kind: input, shape index: {}]
  %s3 = inlined_call_operand.vmem [shape: f32[4,4], index: 3, kind: input, shape index: {}]
  %s4 = inlined_call_operand.vmem [shape: f32[4,2], index: 4, kind: input, shape index: {}]
  %s5 = inlined_call_operand.vmem [shape: f32[4,12], index: 5, kind: input, shape index: {}]
  %s6 = inlined_call_operand.vmem [shape: f32[4,2], index: 6, kind: input, shape index: {}]
  %s7 = inlined_call_operand.vmem [shape: f32[4,4], index: 7, kind: input, shape index: {}]
  %s8 = inlined_call_operand.vmem [shape: f32[4,2], index: 8, kind: input, shape index: {}]
  %s9 = inlined_call_operand.vmem [shape: f32[4,12], index: 9, kind: input, shape index: {}]
  %s10 = inlined_call_operand.vmem [shape: f32[4,2], index: 10, kind: input, shape index: {}]
  %s11 = inlined_call_operand.vmem [shape: f32[4,4], index: 11, kind: input, shape index: {}]
  %s12 = inlined_call_operand.vmem [shape: f32[4,2], index: 12, kind: input, shape index: {}]
  %s13 = inlined_call_operand.vmem [shape: f32[8,16], index: 13, kind: input, shape index: {}]
  %s14 = inlined_call_operand.vmem [shape: f32[8,2], index: 14, kind: input, shape index: {}]
  %s15 = inlined_call_operand.vmem [shape: f32[8,128], index: 15, kind: output, shape index: {}]
  %s16 = sld [smem:[#allocation0]]
  $region70: #{upsampling_layer_forward.1} parent=0
    _
  %s18 = ssub.s32 1, %s16
  %s19 = scalar_select 0, %s18, %s16
  // Predicated region
  $region2: #{upsampling_layer_forward.1} parent=0 // pred_check
    _
  $region3: #{upsampling_layer_forward.1} parent=0 // pred_check_branch
    %21 = sbr.rel (0) target = $region5
  $region4: #{upsampling_layer_forward.1} parent=0 // pred_region
    _
  $region5: #{upsampling_layer_forward.1} parent=0 // pred_fallthru
    _
  // Predicated region
  $region6: #{upsampling_layer_forward.1} parent=0 // pred_check
    _
  $region7: #{upsampling_layer_forward.1} parent=0 // pred_check_branch
    %23 = sbr.rel (0) target = $region9
  $region8: #{upsampling_layer_forward.1} parent=0 // pred_region
    _
  $region9: #{upsampling_layer_forward.1} parent=0 // pred_fallthru
    _
  // Predicated region
  $region10: #{upsampling_layer_forward.1} parent=0 // pred_check
    _
  $region11: #{upsampling_layer_forward.1} parent=0 // pred_check_branch
    %25 = sbr.rel (0) target = $region13
  $region12: #{upsampling_layer_forward.1} parent=0 // pred_region
    _
  $region13: #{upsampling_layer_forward.1} parent=0 // pred_fallthru
    _
  // Predicated region
  $region14: #{upsampling_layer_forward.1} parent=0 // pred_check
    _
  $region15: #{upsampling_layer_forward.1} parent=0 // pred_check_branch
    %27 = sbr.rel (0) target = $region17
  $region16: #{upsampling_layer_forward.1} parent=0 // pred_region
    _
  $region17: #{upsampling_layer_forward.1} parent=0 // pred_fallthru
    _
  // Predicated region
  $region18: #{upsampling_layer_forward.1} parent=0 // pred_check
    _
  $region19: #{upsampling_layer_forward.1} parent=0 // pred_check_branch
    %29 = sbr.rel (0) target = $region21
  $region20: #{upsampling_layer_forward.1} parent=0 // pred_region
    _
  $region21: #{upsampling_layer_forward.1} parent=0 // pred_fallthru
    _
  // Predicated region
  $region22: #{upsampling_layer_forward.1} parent=0 // pred_check
    _
  $region23: #{upsampling_layer_forward.1} parent=0 // pred_check_branch
    %31 = sbr.rel (0) target = $region25
  $region24: #{upsampling_layer_forward.1} parent=0 // pred_region
    _
  $region25: #{upsampling_layer_forward.1} parent=0 // pred_fallthru
    _
  // Predicated region
  $region26: #{upsampling_layer_forward.1} parent=0 // pred_check
    _
  $region27: #{upsampling_layer_forward.1} parent=0 // pred_check_branch
    %33 = sbr.rel (0) target = $region29
  $region28: #{upsampling_layer_forward.1} parent=0 // pred_region
    _
  $region29: #{upsampling_layer_forward.1} parent=0 // pred_fallthru
    _
  // Predicated region
  $region30: #{upsampling_layer_forward.1} parent=0 // pred_check
    _
  $region31: #{upsampling_layer_forward.1} parent=0 // pred_check_branch
    %35 = sbr.rel (0) target = $region33
  $region32: #{upsampling_layer_forward.1} parent=0 // pred_region
    _
  $region33: #{upsampling_layer_forward.1} parent=0 // pred_fallthru
    _
  // Predicated region
  $region34: #{upsampling_layer_forward.1} parent=0 // pred_check
    _
  $region35: #{upsampling_layer_forward.1} parent=0 // pred_check_branch
    %37 = sbr.rel (0) target = $region37
  $region36: #{upsampling_layer_forward.1} parent=0 // pred_region
    _
  $region37: #{upsampling_layer_forward.1} parent=0 // pred_fallthru
    _
  // Predicated region
  $region38: #{upsampling_layer_forward.1} parent=0 // pred_check
    _
  $region39: #{upsampling_layer_forward.1} parent=0 // pred_check_branch
    %39 = sbr.rel (0) target = $region41
  $region40: #{upsampling_layer_forward.1} parent=0 // pred_region
    _
  $region41: #{upsampling_layer_forward.1} parent=0 // pred_fallthru
    _
  // Predicated region
  $region42: #{upsampling_layer_forward.1} parent=0 // pred_check
    _
  $region43: #{upsampling_layer_forward.1} parent=0 // pred_check_branch
    %41 = sbr.rel (0) target = $region45
  $region44: #{upsampling_layer_forward.1} parent=0 // pred_region
    _
  $region45: #{upsampling_layer_forward.1} parent=0 // pred_fallthru
    _
  // Predicated region
  $region46: #{upsampling_layer_forward.1} parent=0 // pred_check
    _
  $region47: #{upsampling_layer_forward.1} parent=0 // pred_check_branch
    %43 = sbr.rel (0) target = $region49
  $region48: #{upsampling_layer_forward.1} parent=0 // pred_region
    _
  $region49: #{upsampling_layer_forward.1} parent=0 // pred_fallthru
    _
  // Predicated region
  $region50: #{upsampling_layer_forward.1} parent=0 // pred_check
    _
  $region51: #{upsampling_layer_forward.1} parent=0 // pred_check_branch
    %45 = sbr.rel (0) target = $region53
  $region52: #{upsampling_layer_forward.1} parent=0 // pred_region
    _
  $region53: #{upsampling_layer_forward.1} parent=0 // pred_fallthru
    _
  // Predicated region
  $region54: #{upsampling_layer_forward.1} parent=0 // pred_check
    _
  $region55: #{upsampling_layer_forward.1} parent=0 // pred_check_branch
    %47 = sbr.rel (0) target = $region57
  $region56: #{upsampling_layer_forward.1} parent=0 // pred_region
    _
  $region57: #{upsampling_layer_forward.1} parent=0 // pred_fallthru
    _
  // Predicated region
  $region58: #{upsampling_layer_forward.1} parent=0 // pred_check
    _
  $region59: #{upsampling_layer_forward.1} parent=0 // pred_check_branch
    %49 = sbr.rel (0) target = $region61
  $region60: #{upsampling_layer_forward.1} parent=0 // pred_region
    _
  $region61: #{upsampling_layer_forward.1} parent=0 // pred_fallthru
    _
  %v50 = vlaneseq
  %v51 = vand.u32 %v50, 127
  %v52 = vadd.s32 %v51, 128
  %vm53 = vcmp.ge.s32.totalorder %v51, 9
  %vm54 = vcmp.ge.s32.totalorder %v52, 9
  %vm55 = vcmp.lt.s32.totalorder %v51, 73
  %vm56 = vcmp.lt.s32.totalorder %v52, 73
  %vm57 = vmand %vm53, %vm55
  %vm58 = vmand %vm54, %vm56
  %vm59 = vcmp.ge.s32.totalorder %v51, 91
  %vm60 = vcmp.ge.s32.totalorder %v52, 91
  %vm61 = vcmp.lt.s32.totalorder %v51, 155
  %vm62 = vcmp.lt.s32.totalorder %v52, 155
  %vm63 = vmand %vm59, %vm61
  %vm64 = vmand %vm60, %vm62
  %vm65 = vmor %vm57, %vm63
  %vm66 = vmor %vm58, %vm64
  %v67 = vsel %vm65, 1, 0
  %v68 = vsel %vm66, 1, 0
  %v69 = vcvt.s32.f32 %v67
  %v70 = vcvt.s32.f32 %v68
  %v71 = vld [vmem:[%s0] sm:$0xff]
  %v73 = vcombine.high %v71, %v71
  %74 = vrot.lane.b32.xlu0 %v71, 1
  %v75 = vpop.permute.xlu0 %74
  %76 = vrot.lane.b32.xlu0 %v73, 1
  %v77 = vpop.permute.xlu0 %76
  %vm78 = vcmask 7168
  %v79 = vsel %vm78, %v75, %v77
  %v82 = vsel %vm78, 0.0, %v75
  %83 = vrot.lane.b32.xlu0 %v71, 127
  %v84 = vpop.permute.xlu0 %83
  %85 = vrot.lane.b32.xlu0 %v73, 127
  %v86 = vpop.permute.xlu0 %85
  %vm87 = vcmask 1039360
  %v88 = vsel %vm87, %v84, %v86
  %v90 = vsel %vm87, %v86, 0.0
  %v91 = vcombine.low %v71, %v71
  %vm93 = vcmask 1043456
  %v94 = vsel %vm93, %v82, %v91
  %v95 = vsel %vm93, %v79, %v71
  %v96 = vld [vmem:[%s1] sm:$0xf]
  %vm97 = vcmask 97280
  %v99 = vsel %vm97, %v96, 0
  %v101 = vsel %vm93, %v88, 0
  %v104 = vsel %vm93, %v90, 0
  %106 = vmatprep.subr.mxu0 %v95
  %107 = vmatpush1.msra.mxu0 %v94
  %108 = vmatprep.subr.mxu0 %v104
  %109 = vmatpush1.msra.mxu0 %v101
  %110 = vmatprep.subr.mxu0 0.0
  %111 = vmatpush1.msra.mxu0 0.0
  %112 = vmatprep.subr.mxu0 0.0
  %113 = vmatpush1.msra.mxu0 0.0
  %114 = vmatprep.subr.mxu0 0.0
  %115 = vmatpush1.msra.mxu0 0.0
  %116 = vmatprep.subr.mxu0 0.0
  %117 = vmatpush1.msra.mxu0 0.0
  %118 = vmatprep.subr.mxu0 0.0
  %119 = vmatpush1.msra.mxu0 0.0
  %120 = vmatprep.subr.mxu0 0.0
  %121 = vmatpush1.msra.mxu0 0.0
  %122 = vmatprep.subr.mxu0 0.0
  %123 = vmatpush1.msra.mxu0 0.0
  %124 = vmatprep.subr.mxu0 0.0
  %125 = vmatpush1.msra.mxu0 0.0
  %126 = vmatprep.subr.mxu0 0.0
  %127 = vmatpush1.msra.mxu0 0.0
  %128 = vmatprep.subr.mxu0 0.0
  %129 = vmatpush1.msra.mxu0 0.0
  %130 = vmatprep.subr.mxu0 0.0
  %131 = vmatpush1.msra.mxu0 0.0
  %132 = vmatprep.subr.mxu0 0.0
  %133 = vmatpush1.msra.mxu0 0.0
  %134 = vmatprep.subr.mxu0 0.0
  %135 = vmatpush1.msra.mxu0 0.0
  %136 = vmatprep.subr.mxu0 0.0
  %137 = vmatpush1.msra.mxu0 0.0
  %138 = vmatprep.subr.mxu0 0.0
  %139 = vmatpush1.msra.mxu0 0.0
  %140 = vmatprep.subr.mxu0 0.0
  %141 = vmatpush1.msra.mxu0 0.0
  %142 = vmatprep.subr.mxu0 0.0
  %143 = vmatpush1.msra.mxu0 0.0
  %144 = vmatprep.subr.mxu0 0.0
  %145 = vmatpush1.msra.mxu0 0.0
  %146 = vmatprep.subr.mxu0 0.0
  %147 = vmatpush1.msra.mxu0 0.0
  %148 = vmatprep.subr.mxu0 0.0
  %149 = vmatpush1.msra.mxu0 0.0
  %150 = vmatprep.subr.mxu0 0.0
  %151 = vmatpush1.msra.mxu0 0.0
  %152 = vmatprep.subr.mxu0 0.0
  %153 = vmatpush1.msra.mxu0 0.0
  %154 = vmatprep.subr.mxu0 0.0
  %155 = vmatpush1.msra.mxu0 0.0
  %156 = vmatprep.subr.mxu0 0.0
  %157 = vmatpush1.msra.mxu0 0.0
  %158 = vmatprep.subr.mxu0 0.0
  %159 = vmatpush1.msra.mxu0 0.0
  %160 = vmatprep.subr.mxu0 0.0
  %161 = vmatpush1.msra.mxu0 0.0
  %162 = vmatprep.subr.mxu0 0.0
  %163 = vmatpush1.msra.mxu0 0.0
  %164 = vmatprep.subr.mxu0 0.0
  %165 = vmatpush1.msra.mxu0 0.0
  %166 = vmatprep.subr.mxu0 0.0
  %167 = vmatpush1.msra.mxu0 0.0
  %168 = vmatprep.subr.mxu0 0.0
  %169 = vmatpush1.msra.mxu0 0.0
  %170 = vmatprep.mubr.f32.mxu0 0.0
  %171 = vmatmul.mubr.f32.gmra.mrb[0].mxu0 %v99
  %v172 = vpop.f32.mrb[0].mxu0
  %v173 = vadd.f32 0.0, %v172
  %v174 = vpop.f32.mrb[0].mxu0
  %v175 = vadd.f32 0.0, %v174
  %176 = vdwg.mxu0
  %v177 = vld [vmem:[%s2] sm:$0xf]
  %v178 = vmul.f32 %v173, %v69
  %v179 = vmul.f32 %v175, %v70
  %v180 = vsel %vm93, %v178, 0.0
  %v181 = vsel %vm93, %v179, 0.0
  %v182 = vadd.f32 %v180, %v181
  %183 = vadd.xlane.f32.xlu0 %v182
  %v184 = vpop.xlane.xlu0 %183
  %v185 = vmul.f32 %v184, 0.0078125
  %v186 = vsub.f32 %v173, %v185
  %v187 = vsub.f32 %v175, %v185
  %v188 = vmul.f32 %v186, %v186
  %v189 = vmul.f32 %v187, %v187
  %v190 = vmul.f32 %v188, %v69
  %v191 = vmul.f32 %v189, %v70
  %v192 = vsel %vm93, %v190, 0.0
  %v193 = vsel %vm93, %v191, 0.0
  %v194 = vadd.f32 %v192, %v193
  %195 = vadd.xlane.f32.xlu0 %v194
  %v196 = vpop.xlane.xlu0 %195
  %v197 = vmul.f32 %v196, 0.0078125
  %v198 = vadd.f32 %v197, 1e-05
  %v199 = vrsqrt.pop %v198
  %v200 = vmul.f32 %v177, %v199
  %v201 = vmul.f32 %v185, %v200
  %203 = vrot.lane.b32.xlu0 %v201, 1
  %v204 = vpop.permute.xlu0 %203
  %v206 = vsub.f32 %v177, %v204
  %208 = vset.pattern.permute.xlu0 0
  %209 = vperm.xlu0 %208, %v200
  %v210 = vpop.permute.xlu0 %209
  %v212 = vmul.f32 %v173, %v210
  %v213 = vmul.f32 %v175, %v210
  %215 = vset.pattern.permute.xlu0 1
  %216 = vperm.xlu0 %215, %v206
  %v217 = vpop.permute.xlu0 %216
  %v219 = vadd.f32 %v212, %v217
  %v220 = vadd.f32 %v213, %v217
  %v221 = vmin.f32 %v219, 0.0
  %v222 = vmin.f32 %v220, 0.0
  %vm223 = vcmp.gt.f32.partialorder %v219, 0.0
  %vm224 = vcmp.gt.f32.partialorder %v220, 0.0
  %v225 = vmul.f32 %v221, 0.5
  %v226 = vmul.f32 %v222, 0.5
  %v227 = vtanh.pop %v225
  %v228 = vtanh.pop %v226
  %v229 = vmul.f32 %v221, 1.442695
  %v230 = vpow.pop %v229
  %v231 = vmul.f32 %v222, 1.442695
  %v232 = vpow.pop %v231
  %v233 = vadd.f32 %v230, 1.0
  %v234 = vadd.f32 %v232, 1.0
  %v235 = vmul.f32 %v227, %v233
  %v236 = vmul.f32 %v228, %v234
  %v237 = vsel %vm223, %v219, %v235
  %v238 = vsel %vm224, %v220, %v236
  %v239 = vmul.f32 %v237, %v69
  %v240 = vmul.f32 %v238, %v70
  %v241 = vld [vmem:[%s3] sm:$0xf]
  %vm242 = vcmask 31744
  %v244 = vsel %vm242, %v241, 0
  %v247 = vsel %vm93, %v239, 0
  %v250 = vsel %vm93, %v240, 0
  %252 = vmatprep.subr.mxu0 %v250
  %253 = vmatpush1.msra.mxu0 %v247
  %254 = vmatprep.subr.mxu0 0.0
  %255 = vmatpush1.msra.mxu0 0.0
  %256 = vmatprep.subr.mxu0 0.0
  %257 = vmatpush1.msra.mxu0 0.0
  %258 = vmatprep.subr.mxu0 0.0
  %259 = vmatpush1.msra.mxu0 0.0
  %260 = vmatprep.subr.mxu0 0.0
  %261 = vmatpush1.msra.mxu0 0.0
  %262 = vmatprep.subr.mxu0 0.0
  %263 = vmatpush1.msra.mxu0 0.0
  %264 = vmatprep.subr.mxu0 0.0
  %265 = vmatpush1.msra.mxu0 0.0
  %266 = vmatprep.subr.mxu0 0.0
  %267 = vmatpush1.msra.mxu0 0.0
  %268 = vmatprep.subr.mxu0 0.0
  %269 = vmatpush1.msra.mxu0 0.0
  %270 = vmatprep.subr.mxu0 0.0
  %271 = vmatpush1.msra.mxu0 0.0
  %272 = vmatprep.subr.mxu0 0.0
  %273 = vmatpush1.msra.mxu0 0.0
  %274 = vmatprep.subr.mxu0 0.0
  %275 = vmatpush1.msra.mxu0 0.0
  %276 = vmatprep.subr.mxu0 0.0
  %277 = vmatpush1.msra.mxu0 0.0
  %278 = vmatprep.subr.mxu0 0.0
  %279 = vmatpush1.msra.mxu0 0.0
  %280 = vmatprep.subr.mxu0 0.0
  %281 = vmatpush1.msra.mxu0 0.0
  %282 = vmatprep.subr.mxu0 0.0
  %283 = vmatpush1.msra.mxu0 0.0
  %284 = vmatprep.subr.mxu0 0.0
  %285 = vmatpush1.msra.mxu0 0.0
  %286 = vmatprep.subr.mxu0 0.0
  %287 = vmatpush1.msra.mxu0 0.0
  %288 = vmatprep.subr.mxu0 0.0
  %289 = vmatpush1.msra.mxu0 0.0
  %290 = vmatprep.subr.mxu0 0.0
  %291 = vmatpush1.msra.mxu0 0.0
  %292 = vmatprep.subr.mxu0 0.0
  %293 = vmatpush1.msra.mxu0 0.0
  %294 = vmatprep.subr.mxu0 0.0
  %295 = vmatpush1.msra.mxu0 0.0
  %296 = vmatprep.subr.mxu0 0.0
  %297 = vmatpush1.msra.mxu0 0.0
  %298 = vmatprep.subr.mxu0 0.0
  %299 = vmatpush1.msra.mxu0 0.0
  %300 = vmatprep.subr.mxu0 0.0
  %301 = vmatpush1.msra.mxu0 0.0
  %302 = vmatprep.subr.mxu0 0.0
  %303 = vmatpush1.msra.mxu0 0.0
  %304 = vmatprep.subr.mxu0 0.0
  %305 = vmatpush1.msra.mxu0 0.0
  %306 = vmatprep.subr.mxu0 0.0
  %307 = vmatpush1.msra.mxu0 0.0
  %308 = vmatprep.subr.mxu0 0.0
  %309 = vmatpush1.msra.mxu0 0.0
  %310 = vmatprep.subr.mxu0 0.0
  %311 = vmatpush1.msra.mxu0 0.0
  %312 = vmatprep.subr.mxu0 0.0
  %313 = vmatpush1.msra.mxu0 0.0
  %314 = vmatprep.subr.mxu0 0.0
  %315 = vmatpush1.msra.mxu0 0.0
  %316 = vmatprep.mubr.f32.mxu0 0.0
  %317 = vmatmul.mubr.f32.gmra.mrb[0].mxu0 %v244
  %v318 = vpop.f32.mrb[0].mxu0
  %v319 = vadd.f32 0.0, %v318
  %v320 = vpop.f32.mrb[0].mxu0
  %v321 = vadd.f32 0.0, %v320
  %322 = vdwg.mxu0
  %v323 = vld [vmem:[%s4] sm:$0xf]
  %v324 = vmul.f32 %v319, %v69
  %v325 = vmul.f32 %v321, %v70
  %v326 = vsel %vm93, %v324, 0.0
  %v327 = vsel %vm93, %v325, 0.0
  %v328 = vadd.f32 %v326, %v327
  %329 = vadd.xlane.f32.xlu0 %v328
  %v330 = vpop.xlane.xlu0 %329
  %v331 = vmul.f32 %v330, 0.0078125
  %v332 = vsub.f32 %v319, %v331
  %v333 = vsub.f32 %v321, %v331
  %v334 = vmul.f32 %v332, %v332
  %v335 = vmul.f32 %v333, %v333
  %v336 = vmul.f32 %v334, %v69
  %v337 = vmul.f32 %v335, %v70
  %v338 = vsel %vm93, %v336, 0.0
  %v339 = vsel %vm93, %v337, 0.0
  %v340 = vadd.f32 %v338, %v339
  %341 = vadd.xlane.f32.xlu0 %v340
  %v342 = vpop.xlane.xlu0 %341
  %v343 = vmul.f32 %v342, 0.0078125
  %v344 = vadd.f32 %v343, 1e-05
  %v345 = vrsqrt.pop %v344
  %v346 = vmul.f32 %v323, %v345
  %v347 = vmul.f32 %v331, %v346
  %349 = vrot.lane.b32.xlu0 %v347, 1
  %v350 = vpop.permute.xlu0 %349
  %v352 = vsub.f32 %v323, %v350
  %354 = vset.pattern.permute.xlu0 0
  %355 = vperm.xlu0 %354, %v346
  %v356 = vpop.permute.xlu0 %355
  %v358 = vmul.f32 %v319, %v356
  %v359 = vmul.f32 %v321, %v356
  %361 = vset.pattern.permute.xlu0 1
  %362 = vperm.xlu0 %361, %v352
  %v363 = vpop.permute.xlu0 %362
  %v365 = vadd.f32 %v358, %v363
  %v366 = vadd.f32 %v359, %v363
  %v367 = vmin.f32 %v365, 0.0
  %v368 = vmin.f32 %v366, 0.0
  %vm369 = vcmp.gt.f32.partialorder %v365, 0.0
  %vm370 = vcmp.gt.f32.partialorder %v366, 0.0
  %v371 = vmul.f32 %v367, 0.5
  %v372 = vmul.f32 %v368, 0.5
  %v373 = vtanh.pop %v371
  %v374 = vtanh.pop %v372
  %v375 = vmul.f32 %v367, 1.442695
  %v376 = vpow.pop %v375
  %v377 = vmul.f32 %v368, 1.442695
  %v378 = vpow.pop %v377
  %v379 = vadd.f32 %v376, 1.0
  %v380 = vadd.f32 %v378, 1.0
  %v381 = vmul.f32 %v373, %v379
  %v382 = vmul.f32 %v374, %v380
  %v383 = vsel %vm369, %v365, %v381
  %v384 = vsel %vm370, %v366, %v382
  %v385 = vmul.f32 %v383, %v69
  %v386 = vmul.f32 %v384, %v70
  %v388 = vadd.f32 %v385, %v71
  %v389 = vadd.f32 %v386, %v73
  %392 = vrot.lane.b32.xlu0 %v388, 3
  %v393 = vpop.permute.xlu0 %392
  %394 = vrot.lane.b32.xlu0 %v389, 3
  %v395 = vpop.permute.xlu0 %394
  %vm396 = vcmask 23552
  %v397 = vsel %vm396, %v393, %v395
  %v400 = vsel %vm396, 0.0, %v393
  %401 = vrot.lane.b32.xlu0 %v388, 125
  %v402 = vpop.permute.xlu0 %401
  %403 = vrot.lane.b32.xlu0 %v389, 125
  %v404 = vpop.permute.xlu0 %403
  %vm405 = vcmask 1022976
  %v406 = vsel %vm405, %v402, %v404
  %v408 = vsel %vm405, %v404, 0.0
  %v409 = vrot.slane %v388, 4
  %v410 = vrot.slane %v389, 4
  %v413 = vsel %vm93, %v400, %v409
  %v414 = vsel %vm93, %v397, %v410
  %v415 = vld [vmem:[%s5] sm:$0xf]
  %v417 = vsel %vm97, %v415, 0
  %v419 = vsel %vm93, %v406, 0
  %v422 = vsel %vm93, %v408, 0
  %424 = vmatprep.subr.mxu0 %v414
  %425 = vmatpush1.msra.mxu0 %v413
  %426 = vmatprep.subr.mxu0 %v422
  %427 = vmatpush1.msra.mxu0 %v419
  %428 = vmatprep.subr.mxu0 0.0
  %429 = vmatpush1.msra.mxu0 0.0
  %430 = vmatprep.subr.mxu0 0.0
  %431 = vmatpush1.msra.mxu0 0.0
  %432 = vmatprep.subr.mxu0 0.0
  %433 = vmatpush1.msra.mxu0 0.0
  %434 = vmatprep.subr.mxu0 0.0
  %435 = vmatpush1.msra.mxu0 0.0
  %436 = vmatprep.subr.mxu0 0.0
  %437 = vmatpush1.msra.mxu0 0.0
  %438 = vmatprep.subr.mxu0 0.0
  %439 = vmatpush1.msra.mxu0 0.0
  %440 = vmatprep.subr.mxu0 0.0
  %441 = vmatpush1.msra.mxu0 0.0
  %442 = vmatprep.subr.mxu0 0.0
  %443 = vmatpush1.msra.mxu0 0.0
  %444 = vmatprep.subr.mxu0 0.0
  %445 = vmatpush1.msra.mxu0 0.0
  %446 = vmatprep.subr.mxu0 0.0
  %447 = vmatpush1.msra.mxu0 0.0
  %448 = vmatprep.subr.mxu0 0.0
  %449 = vmatpush1.msra.mxu0 0.0
  %450 = vmatprep.subr.mxu0 0.0
  %451 = vmatpush1.msra.mxu0 0.0
  %452 = vmatprep.subr.mxu0 0.0
  %453 = vmatpush1.msra.mxu0 0.0
  %454 = vmatprep.subr.mxu0 0.0
  %455 = vmatpush1.msra.mxu0 0.0
  %456 = vmatprep.subr.mxu0 0.0
  %457 = vmatpush1.msra.mxu0 0.0
  %458 = vmatprep.subr.mxu0 0.0
  %459 = vmatpush1.msra.mxu0 0.0
  %460 = vmatprep.subr.mxu0 0.0
  %461 = vmatpush1.msra.mxu0 0.0
  %462 = vmatprep.subr.mxu0 0.0
  %463 = vmatpush1.msra.mxu0 0.0
  %464 = vmatprep.subr.mxu0 0.0
  %465 = vmatpush1.msra.mxu0 0.0
  %466 = vmatprep.subr.mxu0 0.0
  %467 = vmatpush1.msra.mxu0 0.0
  %468 = vmatprep.subr.mxu0 0.0
  %469 = vmatpush1.msra.mxu0 0.0
  %470 = vmatprep.subr.mxu0 0.0
  %471 = vmatpush1.msra.mxu0 0.0
  %472 = vmatprep.subr.mxu0 0.0
  %473 = vmatpush1.msra.mxu0 0.0
  %474 = vmatprep.subr.mxu0 0.0
  %475 = vmatpush1.msra.mxu0 0.0
  %476 = vmatprep.subr.mxu0 0.0
  %477 = vmatpush1.msra.mxu0 0.0
  %478 = vmatprep.subr.mxu0 0.0
  %479 = vmatpush1.msra.mxu0 0.0
  %480 = vmatprep.subr.mxu0 0.0
  %481 = vmatpush1.msra.mxu0 0.0
  %482 = vmatprep.subr.mxu0 0.0
  %483 = vmatpush1.msra.mxu0 0.0
  %484 = vmatprep.subr.mxu0 0.0
  %485 = vmatpush1.msra.mxu0 0.0
  %486 = vmatprep.subr.mxu0 0.0
  %487 = vmatpush1.msra.mxu0 0.0
  %488 = vmatprep.mubr.f32.mxu0 0.0
  %489 = vmatmul.mubr.f32.gmra.mrb[0].mxu0 %v417
  %v490 = vpop.f32.mrb[0].mxu0
  %v491 = vadd.f32 0.0, %v490
  %v492 = vpop.f32.mrb[0].mxu0
  %v493 = vadd.f32 0.0, %v492
  %494 = vdwg.mxu0
  %v495 = vld [vmem:[%s6] sm:$0xf]
  %v496 = vmul.f32 %v491, %v69
  %v497 = vmul.f32 %v493, %v70
  %v498 = vsel %vm93, %v496, 0.0
  %v499 = vsel %vm93, %v497, 0.0
  %v500 = vadd.f32 %v498, %v499
  %501 = vadd.xlane.f32.xlu0 %v500
  %v502 = vpop.xlane.xlu0 %501
  %v503 = vmul.f32 %v502, 0.0078125
  %v504 = vsub.f32 %v491, %v503
  %v505 = vsub.f32 %v493, %v503
  %v506 = vmul.f32 %v504, %v504
  %v507 = vmul.f32 %v505, %v505
  %v508 = vmul.f32 %v506, %v69
  %v509 = vmul.f32 %v507, %v70
  %v510 = vsel %vm93, %v508, 0.0
  %v511 = vsel %vm93, %v509, 0.0
  %v512 = vadd.f32 %v510, %v511
  %513 = vadd.xlane.f32.xlu0 %v512
  %v514 = vpop.xlane.xlu0 %513
  %v515 = vmul.f32 %v514, 0.0078125
  %v516 = vadd.f32 %v515, 1e-05
  %v517 = vrsqrt.pop %v516
  %v518 = vmul.f32 %v495, %v517
  %v519 = vmul.f32 %v503, %v518
  %521 = vrot.lane.b32.xlu0 %v519, 1
  %v522 = vpop.permute.xlu0 %521
  %v524 = vsub.f32 %v495, %v522
  %526 = vset.pattern.permute.xlu0 0
  %527 = vperm.xlu0 %526, %v518
  %v528 = vpop.permute.xlu0 %527
  %v530 = vmul.f32 %v491, %v528
  %v531 = vmul.f32 %v493, %v528
  %533 = vset.pattern.permute.xlu0 1
  %534 = vperm.xlu0 %533, %v524
  %v535 = vpop.permute.xlu0 %534
  %v537 = vadd.f32 %v530, %v535
  %v538 = vadd.f32 %v531, %v535
  %v539 = vmin.f32 %v537, 0.0
  %v540 = vmin.f32 %v538, 0.0
  %vm541 = vcmp.gt.f32.partialorder %v537, 0.0
  %vm542 = vcmp.gt.f32.partialorder %v538, 0.0
  %v543 = vmul.f32 %v539, 0.5
  %v544 = vmul.f32 %v540, 0.5
  %v545 = vtanh.pop %v543
  %v546 = vtanh.pop %v544
  %v547 = vmul.f32 %v539, 1.442695
  %v548 = vpow.pop %v547
  %v549 = vmul.f32 %v540, 1.442695
  %v550 = vpow.pop %v549
  %v551 = vadd.f32 %v548, 1.0
  %v552 = vadd.f32 %v550, 1.0
  %v553 = vmul.f32 %v545, %v551
  %v554 = vmul.f32 %v546, %v552
  %v555 = vsel %vm541, %v537, %v553
  %v556 = vsel %vm542, %v538, %v554
  %v557 = vmul.f32 %v555, %v69
  %v558 = vmul.f32 %v556, %v70
  %v559 = vld [vmem:[%s7] sm:$0xf]
  %v561 = vsel %vm242, %v559, 0
  %v564 = vsel %vm93, %v557, 0
  %v567 = vsel %vm93, %v558, 0
  %569 = vmatprep.subr.mxu0 %v567
  %570 = vmatpush1.msra.mxu0 %v564
  %571 = vmatprep.subr.mxu0 0.0
  %572 = vmatpush1.msra.mxu0 0.0
  %573 = vmatprep.subr.mxu0 0.0
  %574 = vmatpush1.msra.mxu0 0.0
  %575 = vmatprep.subr.mxu0 0.0
  %576 = vmatpush1.msra.mxu0 0.0
  %577 = vmatprep.subr.mxu0 0.0
  %578 = vmatpush1.msra.mxu0 0.0
  %579 = vmatprep.subr.mxu0 0.0
  %580 = vmatpush1.msra.mxu0 0.0
  %581 = vmatprep.subr.mxu0 0.0
  %582 = vmatpush1.msra.mxu0 0.0
  %583 = vmatprep.subr.mxu0 0.0
  %584 = vmatpush1.msra.mxu0 0.0
  %585 = vmatprep.subr.mxu0 0.0
  %586 = vmatpush1.msra.mxu0 0.0
  %587 = vmatprep.subr.mxu0 0.0
  %588 = vmatpush1.msra.mxu0 0.0
  %589 = vmatprep.subr.mxu0 0.0
  %590 = vmatpush1.msra.mxu0 0.0
  %591 = vmatprep.subr.mxu0 0.0
  %592 = vmatpush1.msra.mxu0 0.0
  %593 = vmatprep.subr.mxu0 0.0
  %594 = vmatpush1.msra.mxu0 0.0
  %595 = vmatprep.subr.mxu0 0.0
  %596 = vmatpush1.msra.mxu0 0.0
  %597 = vmatprep.subr.mxu0 0.0
  %598 = vmatpush1.msra.mxu0 0.0
  %599 = vmatprep.subr.mxu0 0.0
  %600 = vmatpush1.msra.mxu0 0.0
  %601 = vmatprep.subr.mxu0 0.0
  %602 = vmatpush1.msra.mxu0 0.0
  %603 = vmatprep.subr.mxu0 0.0
  %604 = vmatpush1.msra.mxu0 0.0
  %605 = vmatprep.subr.mxu0 0.0
  %606 = vmatpush1.msra.mxu0 0.0
  %607 = vmatprep.subr.mxu0 0.0
  %608 = vmatpush1.msra.mxu0 0.0
  %609 = vmatprep.subr.mxu0 0.0
  %610 = vmatpush1.msra.mxu0 0.0
  %611 = vmatprep.subr.mxu0 0.0
  %612 = vmatpush1.msra.mxu0 0.0
  %613 = vmatprep.subr.mxu0 0.0
  %614 = vmatpush1.msra.mxu0 0.0
  %615 = vmatprep.subr.mxu0 0.0
  %616 = vmatpush1.msra.mxu0 0.0
  %617 = vmatprep.subr.mxu0 0.0
  %618 = vmatpush1.msra.mxu0 0.0
  %619 = vmatprep.subr.mxu0 0.0
  %620 = vmatpush1.msra.mxu0 0.0
  %621 = vmatprep.subr.mxu0 0.0
  %622 = vmatpush1.msra.mxu0 0.0
  %623 = vmatprep.subr.mxu0 0.0
  %624 = vmatpush1.msra.mxu0 0.0
  %625 = vmatprep.subr.mxu0 0.0
  %626 = vmatpush1.msra.mxu0 0.0
  %627 = vmatprep.subr.mxu0 0.0
  %628 = vmatpush1.msra.mxu0 0.0
  %629 = vmatprep.subr.mxu0 0.0
  %630 = vmatpush1.msra.mxu0 0.0
  %631 = vmatprep.subr.mxu0 0.0
  %632 = vmatpush1.msra.mxu0 0.0
  %633 = vmatprep.mubr.f32.mxu0 0.0
  %634 = vmatmul.mubr.f32.gmra.mrb[0].mxu0 %v561
  %v635 = vpop.f32.mrb[0].mxu0
  %v636 = vadd.f32 0.0, %v635
  %v637 = vpop.f32.mrb[0].mxu0
  %v638 = vadd.f32 0.0, %v637
  %639 = vdwg.mxu0
  %v640 = vld [vmem:[%s8] sm:$0xf]
  %v641 = vmul.f32 %v636, %v69
  %v642 = vmul.f32 %v638, %v70
  %v643 = vsel %vm93, %v641, 0.0
  %v644 = vsel %vm93, %v642, 0.0
  %v645 = vadd.f32 %v643, %v644
  %646 = vadd.xlane.f32.xlu0 %v645
  %v647 = vpop.xlane.xlu0 %646
  %v648 = vmul.f32 %v647, 0.0078125
  %v649 = vsub.f32 %v636, %v648
  %v650 = vsub.f32 %v638, %v648
  %v651 = vmul.f32 %v649, %v649
  %v652 = vmul.f32 %v650, %v650
  %v653 = vmul.f32 %v651, %v69
  %v654 = vmul.f32 %v652, %v70
  %v655 = vsel %vm93, %v653, 0.0
  %v656 = vsel %vm93, %v654, 0.0
  %v657 = vadd.f32 %v655, %v656
  %658 = vadd.xlane.f32.xlu0 %v657
  %v659 = vpop.xlane.xlu0 %658
  %v660 = vmul.f32 %v659, 0.0078125
  %v661 = vadd.f32 %v660, 1e-05
  %v662 = vrsqrt.pop %v661
  %v663 = vmul.f32 %v640, %v662
  %v664 = vmul.f32 %v648, %v663
  %666 = vrot.lane.b32.xlu0 %v664, 1
  %v667 = vpop.permute.xlu0 %666
  %v669 = vsub.f32 %v640, %v667
  %671 = vset.pattern.permute.xlu0 0
  %672 = vperm.xlu0 %671, %v663
  %v673 = vpop.permute.xlu0 %672
  %v675 = vmul.f32 %v636, %v673
  %v676 = vmul.f32 %v638, %v673
  %678 = vset.pattern.permute.xlu0 1
  %679 = vperm.xlu0 %678, %v669
  %v680 = vpop.permute.xlu0 %679
  %v682 = vadd.f32 %v675, %v680
  %v683 = vadd.f32 %v676, %v680
  %v684 = vmin.f32 %v682, 0.0
  %v685 = vmin.f32 %v683, 0.0
  %vm686 = vcmp.gt.f32.partialorder %v682, 0.0
  %vm687 = vcmp.gt.f32.partialorder %v683, 0.0
  %v688 = vmul.f32 %v684, 0.5
  %v689 = vmul.f32 %v685, 0.5
  %v690 = vtanh.pop %v688
  %v691 = vtanh.pop %v689
  %v692 = vmul.f32 %v684, 1.442695
  %v693 = vpow.pop %v692
  %v694 = vmul.f32 %v685, 1.442695
  %v695 = vpow.pop %v694
  %v696 = vadd.f32 %v693, 1.0
  %v697 = vadd.f32 %v695, 1.0
  %v698 = vmul.f32 %v690, %v696
  %v699 = vmul.f32 %v691, %v697
  %v700 = vsel %vm686, %v682, %v698
  %v701 = vsel %vm687, %v683, %v699
  %v702 = vmul.f32 %v700, %v69
  %v703 = vmul.f32 %v701, %v70
  %v704 = vadd.f32 %v388, %v702
  %v705 = vadd.f32 %v389, %v703
  %708 = vrot.lane.b32.xlu0 %v704, 9
  %v709 = vpop.permute.xlu0 %708
  %710 = vrot.lane.b32.xlu0 %v705, 9
  %v711 = vpop.permute.xlu0 %710
  %vm712 = vcmask 72704
  %v713 = vsel %vm712, %v709, %v711
  %v716 = vsel %vm712, 0.0, %v709
  %717 = vrot.lane.b32.xlu0 %v704, 119
  %v718 = vpop.permute.xlu0 %717
  %719 = vrot.lane.b32.xlu0 %v705, 119
  %v720 = vpop.permute.xlu0 %719
  %vm721 = vcmask 973824
  %v722 = vsel %vm721, %v718, %v720
  %v724 = vsel %vm721, %v720, 0.0
  %v725 = vrot.slane %v704, 4
  %v726 = vrot.slane %v705, 4
  %v729 = vsel %vm93, %v716, %v725
  %v730 = vsel %vm93, %v713, %v726
  %v731 = vld [vmem:[%s9] sm:$0xf]
  %v733 = vsel %vm97, %v731, 0
  %v735 = vsel %vm93, %v722, 0
  %v738 = vsel %vm93, %v724, 0
  %740 = vmatprep.subr.mxu0 %v730
  %741 = vmatpush1.msra.mxu0 %v729
  %742 = vmatprep.subr.mxu0 %v738
  %743 = vmatpush1.msra.mxu0 %v735
  %744 = vmatprep.subr.mxu0 0.0
  %745 = vmatpush1.msra.mxu0 0.0
  %746 = vmatprep.subr.mxu0 0.0
  %747 = vmatpush1.msra.mxu0 0.0
  %748 = vmatprep.subr.mxu0 0.0
  %749 = vmatpush1.msra.mxu0 0.0
  %750 = vmatprep.subr.mxu0 0.0
  %751 = vmatpush1.msra.mxu0 0.0
  %752 = vmatprep.subr.mxu0 0.0
  %753 = vmatpush1.msra.mxu0 0.0
  %754 = vmatprep.subr.mxu0 0.0
  %755 = vmatpush1.msra.mxu0 0.0
  %756 = vmatprep.subr.mxu0 0.0
  %757 = vmatpush1.msra.mxu0 0.0
  %758 = vmatprep.subr.mxu0 0.0
  %759 = vmatpush1.msra.mxu0 0.0
  %760 = vmatprep.subr.mxu0 0.0
  %761 = vmatpush1.msra.mxu0 0.0
  %762 = vmatprep.subr.mxu0 0.0
  %763 = vmatpush1.msra.mxu0 0.0
  %764 = vmatprep.subr.mxu0 0.0
  %765 = vmatpush1.msra.mxu0 0.0
  %766 = vmatprep.subr.mxu0 0.0
  %767 = vmatpush1.msra.mxu0 0.0
  %768 = vmatprep.subr.mxu0 0.0
  %769 = vmatpush1.msra.mxu0 0.0
  %770 = vmatprep.subr.mxu0 0.0
  %771 = vmatpush1.msra.mxu0 0.0
  %772 = vmatprep.subr.mxu0 0.0
  %773 = vmatpush1.msra.mxu0 0.0
  %774 = vmatprep.subr.mxu0 0.0
  %775 = vmatpush1.msra.mxu0 0.0
  %776 = vmatprep.subr.mxu0 0.0
  %777 = vmatpush1.msra.mxu0 0.0
  %778 = vmatprep.subr.mxu0 0.0
  %779 = vmatpush1.msra.mxu0 0.0
  %780 = vmatprep.subr.mxu0 0.0
  %781 = vmatpush1.msra.mxu0 0.0
  %782 = vmatprep.subr.mxu0 0.0
  %783 = vmatpush1.msra.mxu0 0.0
  %784 = vmatprep.subr.mxu0 0.0
  %785 = vmatpush1.msra.mxu0 0.0
  %786 = vmatprep.subr.mxu0 0.0
  %787 = vmatpush1.msra.mxu0 0.0
  %788 = vmatprep.subr.mxu0 0.0
  %789 = vmatpush1.msra.mxu0 0.0
  %790 = vmatprep.subr.mxu0 0.0
  %791 = vmatpush1.msra.mxu0 0.0
  %792 = vmatprep.subr.mxu0 0.0
  %793 = vmatpush1.msra.mxu0 0.0
  %794 = vmatprep.subr.mxu0 0.0
  %795 = vmatpush1.msra.mxu0 0.0
  %796 = vmatprep.subr.mxu0 0.0
  %797 = vmatpush1.msra.mxu0 0.0
  %798 = vmatprep.subr.mxu0 0.0
  %799 = vmatpush1.msra.mxu0 0.0
  %800 = vmatprep.subr.mxu0 0.0
  %801 = vmatpush1.msra.mxu0 0.0
  %802 = vmatprep.subr.mxu0 0.0
  %803 = vmatpush1.msra.mxu0 0.0
  %804 = vmatprep.mubr.f32.mxu0 0.0
  %805 = vmatmul.mubr.f32.gmra.mrb[0].mxu0 %v733
  %v806 = vpop.f32.mrb[0].mxu0
  %v807 = vadd.f32 0.0, %v806
  %v808 = vpop.f32.mrb[0].mxu0
  %v809 = vadd.f32 0.0, %v808
  %810 = vdwg.mxu0
  %v811 = vld [vmem:[%s10] sm:$0xf]
  %v812 = vmul.f32 %v807, %v69
  %v813 = vmul.f32 %v809, %v70
  %v814 = vsel %vm93, %v812, 0.0
  %v815 = vsel %vm93, %v813, 0.0
  %v816 = vadd.f32 %v814, %v815
  %817 = vadd.xlane.f32.xlu0 %v816
  %v818 = vpop.xlane.xlu0 %817
  %v819 = vmul.f32 %v818, 0.0078125
  %v820 = vsub.f32 %v807, %v819
  %v821 = vsub.f32 %v809, %v819
  %v822 = vmul.f32 %v820, %v820
  %v823 = vmul.f32 %v821, %v821
  %v824 = vmul.f32 %v822, %v69
  %v825 = vmul.f32 %v823, %v70
  %v826 = vsel %vm93, %v824, 0.0
  %v827 = vsel %vm93, %v825, 0.0
  %v828 = vadd.f32 %v826, %v827
  %829 = vadd.xlane.f32.xlu0 %v828
  %v830 = vpop.xlane.xlu0 %829
  %v831 = vmul.f32 %v830, 0.0078125
  %v832 = vadd.f32 %v831, 1e-05
  %v833 = vrsqrt.pop %v832
  %v834 = vmul.f32 %v811, %v833
  %v835 = vmul.f32 %v819, %v834
  %837 = vrot.lane.b32.xlu0 %v835, 1
  %v838 = vpop.permute.xlu0 %837
  %v840 = vsub.f32 %v811, %v838
  %842 = vset.pattern.permute.xlu0 0
  %843 = vperm.xlu0 %842, %v834
  %v844 = vpop.permute.xlu0 %843
  %v846 = vmul.f32 %v807, %v844
  %v847 = vmul.f32 %v809, %v844
  %849 = vset.pattern.permute.xlu0 1
  %850 = vperm.xlu0 %849, %v840
  %v851 = vpop.permute.xlu0 %850
  %v853 = vadd.f32 %v846, %v851
  %v854 = vadd.f32 %v847, %v851
  %v855 = vmin.f32 %v853, 0.0
  %v856 = vmin.f32 %v854, 0.0
  %vm857 = vcmp.gt.f32.partialorder %v853, 0.0
  %vm858 = vcmp.gt.f32.partialorder %v854, 0.0
  %v859 = vmul.f32 %v855, 0.5
  %v860 = vmul.f32 %v856, 0.5
  %v861 = vtanh.pop %v859
  %v862 = vtanh.pop %v860
  %v863 = vmul.f32 %v855, 1.442695
  %v864 = vpow.pop %v863
  %v865 = vmul.f32 %v856, 1.442695
  %v866 = vpow.pop %v865
  %v867 = vadd.f32 %v864, 1.0
  %v868 = vadd.f32 %v866, 1.0
  %v869 = vmul.f32 %v861, %v867
  %v870 = vmul.f32 %v862, %v868
  %v871 = vsel %vm857, %v853, %v869
  %v872 = vsel %vm858, %v854, %v870
  %v873 = vmul.f32 %v871, %v69
  %v874 = vmul.f32 %v872, %v70
  %v875 = vld [vmem:[%s11] sm:$0xf]
  %v877 = vsel %vm242, %v875, 0
  %v880 = vsel %vm93, %v873, 0
  %v883 = vsel %vm93, %v874, 0
  %885 = vmatprep.subr.mxu0 %v883
  %886 = vmatpush1.msra.mxu0 %v880
  %887 = vmatprep.subr.mxu0 0.0
  %888 = vmatpush1.msra.mxu0 0.0
  %889 = vmatprep.subr.mxu0 0.0
  %890 = vmatpush1.msra.mxu0 0.0
  %891 = vmatprep.subr.mxu0 0.0
  %892 = vmatpush1.msra.mxu0 0.0
  %893 = vmatprep.subr.mxu0 0.0
  %894 = vmatpush1.msra.mxu0 0.0
  %895 = vmatprep.subr.mxu0 0.0
  %896 = vmatpush1.msra.mxu0 0.0
  %897 = vmatprep.subr.mxu0 0.0
  %898 = vmatpush1.msra.mxu0 0.0
  %899 = vmatprep.subr.mxu0 0.0
  %900 = vmatpush1.msra.mxu0 0.0
  %901 = vmatprep.subr.mxu0 0.0
  %902 = vmatpush1.msra.mxu0 0.0
  %903 = vmatprep.subr.mxu0 0.0
  %904 = vmatpush1.msra.mxu0 0.0
  %905 = vmatprep.subr.mxu0 0.0
  %906 = vmatpush1.msra.mxu0 0.0
  %907 = vmatprep.subr.mxu0 0.0
  %908 = vmatpush1.msra.mxu0 0.0
  %909 = vmatprep.subr.mxu0 0.0
  %910 = vmatpush1.msra.mxu0 0.0
  %911 = vmatprep.subr.mxu0 0.0
  %912 = vmatpush1.msra.mxu0 0.0
  %913 = vmatprep.subr.mxu0 0.0
  %914 = vmatpush1.msra.mxu0 0.0
  %915 = vmatprep.subr.mxu0 0.0
  %916 = vmatpush1.msra.mxu0 0.0
  %917 = vmatprep.subr.mxu0 0.0
  %918 = vmatpush1.msra.mxu0 0.0
  %919 = vmatprep.subr.mxu0 0.0
  %920 = vmatpush1.msra.mxu0 0.0
  %921 = vmatprep.subr.mxu0 0.0
  %922 = vmatpush1.msra.mxu0 0.0
  %923 = vmatprep.subr.mxu0 0.0
  %924 = vmatpush1.msra.mxu0 0.0
  %925 = vmatprep.subr.mxu0 0.0
  %926 = vmatpush1.msra.mxu0 0.0
  %927 = vmatprep.subr.mxu0 0.0
  %928 = vmatpush1.msra.mxu0 0.0
  %929 = vmatprep.subr.mxu0 0.0
  %930 = vmatpush1.msra.mxu0 0.0
  %931 = vmatprep.subr.mxu0 0.0
  %932 = vmatpush1.msra.mxu0 0.0
  %933 = vmatprep.subr.mxu0 0.0
  %934 = vmatpush1.msra.mxu0 0.0
  %935 = vmatprep.subr.mxu0 0.0
  %936 = vmatpush1.msra.mxu0 0.0
  %937 = vmatprep.subr.mxu0 0.0
  %938 = vmatpush1.msra.mxu0 0.0
  %939 = vmatprep.subr.mxu0 0.0
  %940 = vmatpush1.msra.mxu0 0.0
  %941 = vmatprep.subr.mxu0 0.0
  %942 = vmatpush1.msra.mxu0 0.0
  %943 = vmatprep.subr.mxu0 0.0
  %944 = vmatpush1.msra.mxu0 0.0
  %945 = vmatprep.subr.mxu0 0.0
  %946 = vmatpush1.msra.mxu0 0.0
  %947 = vmatprep.subr.mxu0 0.0
  %948 = vmatpush1.msra.mxu0 0.0
  %949 = vmatprep.mubr.f32.mxu0 0.0
  %950 = vmatmul.mubr.f32.gmra.mrb[0].mxu0 %v877
  %v951 = vpop.f32.mrb[0].mxu0
  %v952 = vadd.f32 0.0, %v951
  %v953 = vpop.f32.mrb[0].mxu0
  %v954 = vadd.f32 0.0, %v953
  %955 = vdwg.mxu0
  %v956 = vld [vmem:[%s12] sm:$0xf]
  %v957 = vmul.f32 %v952, %v69
  %v958 = vmul.f32 %v954, %v70
  %v959 = vsel %vm93, %v957, 0.0
  %v960 = vsel %vm93, %v958, 0.0
  %v961 = vadd.f32 %v959, %v960
  %962 = vadd.xlane.f32.xlu0 %v961
  %v963 = vpop.xlane.xlu0 %962
  %v964 = vmul.f32 %v963, 0.0078125
  %v965 = vsub.f32 %v952, %v964
  %v966 = vsub.f32 %v954, %v964
  %v967 = vmul.f32 %v965, %v965
  %v968 = vmul.f32 %v966, %v966
  %v969 = vmul.f32 %v967, %v69
  %v970 = vmul.f32 %v968, %v70
  %v971 = vsel %vm93, %v969, 0.0
  %v972 = vsel %vm93, %v970, 0.0
  %v973 = vadd.f32 %v971, %v972
  %974 = vadd.xlane.f32.xlu0 %v973
  %v975 = vpop.xlane.xlu0 %974
  %v976 = vmul.f32 %v975, 0.0078125
  %v977 = vadd.f32 %v976, 1e-05
  %v978 = vrsqrt.pop %v977
  %v979 = vmul.f32 %v956, %v978
  %v980 = vmul.f32 %v964, %v979
  %982 = vrot.lane.b32.xlu0 %v980, 1
  %v983 = vpop.permute.xlu0 %982
  %v985 = vsub.f32 %v956, %v983
  %987 = vset.pattern.permute.xlu0 0
  %988 = vperm.xlu0 %987, %v979
  %v989 = vpop.permute.xlu0 %988
  %v991 = vmul.f32 %v952, %v989
  %v992 = vmul.f32 %v954, %v989
  %994 = vset.pattern.permute.xlu0 1
  %995 = vperm.xlu0 %994, %v985
  %v996 = vpop.permute.xlu0 %995
  %v998 = vadd.f32 %v991, %v996
  %v999 = vadd.f32 %v992, %v996
  %v1000 = vmin.f32 %v998, 0.0
  %v1001 = vmin.f32 %v999, 0.0
  %vm1002 = vcmp.gt.f32.partialorder %v998, 0.0
  %vm1003 = vcmp.gt.f32.partialorder %v999, 0.0
  %v1004 = vmul.f32 %v1000, 0.5
  %v1005 = vmul.f32 %v1001, 0.5
  %v1006 = vtanh.pop %v1004
  %v1007 = vtanh.pop %v1005
  %v1008 = vmul.f32 %v1000, 1.442695
  %v1009 = vpow.pop %v1008
  %v1010 = vmul.f32 %v1001, 1.442695
  %v1011 = vpow.pop %v1010
  %v1012 = vadd.f32 %v1009, 1.0
  %v1013 = vadd.f32 %v1011, 1.0
  %v1014 = vmul.f32 %v1006, %v1012
  %v1015 = vmul.f32 %v1007, %v1013
  %v1016 = vsel %vm1002, %v998, %v1014
  %v1017 = vsel %vm1003, %v999, %v1015
  %v1018 = vmul.f32 %v1016, %v69
  %v1019 = vmul.f32 %v1017, %v70
  %v1020 = vadd.f32 %v704, %v1018
  %v1021 = vadd.f32 %v705, %v1019
  %v1022 = vlaneseq
  %v1023 = vshrl.u32 %v1022, 7
  %v1024 = vadd.s32 %v1023, 8
  %v1025 = vadd.s32 %v1023, 16
  %v1026 = vadd.s32 %v1023, 24
  %v1027 = vadd.s32 %v1023, 32
  %v1028 = vadd.s32 %v1023, 40
  %v1029 = vadd.s32 %v1023, 48
  %v1030 = vadd.s32 %v1023, 56
  %v1031 = vadd.s32 %v1023, 64
  %v1032 = vadd.s32 %v1023, 72
  %v1033 = vadd.s32 %v1023, 80
  %v1034 = vadd.s32 %v1023, 88
  %v1035 = vadd.s32 %v1023, 96
  %v1036 = vadd.s32 %v1023, 104
  %v1037 = vadd.s32 %v1023, 112
  %v1038 = vadd.s32 %v1023, 120
  %v1039 = vadd.s32 %v1023, 128
  %v1040 = vadd.s32 %v1023, 136
  %v1041 = vadd.s32 %v1023, 144
  %v1042 = vadd.s32 %v1023, 152
  %v1043 = vadd.s32 %v1023, 160
  %v1044 = vadd.s32 %v1023, 168
  %v1045 = vadd.s32 %v1023, 176
  %v1046 = vadd.s32 %v1023, 184
  %v1047 = vadd.s32 %v1023, 192
  %v1048 = vadd.s32 %v1023, 200
  %v1049 = vadd.s32 %v1023, 208
  %v1050 = vadd.s32 %v1023, 216
  %v1051 = vadd.s32 %v1023, 224
  %v1052 = vadd.s32 %v1023, 232
  %v1053 = vadd.s32 %v1023, 240
  %v1054 = vadd.s32 %v1023, 248
  %vm1055 = vcmp.ge.s32.totalorder %v51, 0
  %vm1056 = vcmp.lt.s32.totalorder %v51, 31
  %vm1057 = vmand %vm1055, %vm1056
  %v1058 = vmul.u32 %v51, 2
  %v1059 = vadd.s32 %v1058, 9
  %vm1060 = vcmp.eq.s32.totalorder %v1023, %v1059
  %vm1061 = vcmp.eq.s32.totalorder %v1024, %v1059
  %vm1062 = vcmp.eq.s32.totalorder %v1025, %v1059
  %vm1063 = vcmp.eq.s32.totalorder %v1026, %v1059
  %vm1064 = vcmp.eq.s32.totalorder %v1027, %v1059
  %vm1065 = vcmp.eq.s32.totalorder %v1028, %v1059
  %vm1066 = vcmp.eq.s32.totalorder %v1029, %v1059
  %vm1067 = vcmp.eq.s32.totalorder %v1030, %v1059
  %vm1068 = vcmp.eq.s32.totalorder %v1031, %v1059
  %vm1069 = vcmp.eq.s32.totalorder %v1032, %v1059
  %vm1070 = vcmp.eq.s32.totalorder %v1033, %v1059
  %vm1071 = vcmp.eq.s32.totalorder %v1034, %v1059
  %vm1072 = vcmp.eq.s32.totalorder %v1035, %v1059
  %vm1073 = vcmp.eq.s32.totalorder %v1036, %v1059
  %vm1074 = vcmp.eq.s32.totalorder %v1037, %v1059
  %vm1075 = vcmp.eq.s32.totalorder %v1038, %v1059
  %vm1076 = vcmp.eq.s32.totalorder %v1039, %v1059
  %vm1077 = vcmp.eq.s32.totalorder %v1040, %v1059
  %vm1078 = vcmp.eq.s32.totalorder %v1041, %v1059
  %vm1079 = vcmp.eq.s32.totalorder %v1042, %v1059
  %vm1080 = vcmp.eq.s32.totalorder %v1043, %v1059
  %vm1081 = vcmp.eq.s32.totalorder %v1044, %v1059
  %vm1082 = vcmp.eq.s32.totalorder %v1045, %v1059
  %vm1083 = vcmp.eq.s32.totalorder %v1046, %v1059
  %vm1084 = vcmp.eq.s32.totalorder %v1047, %v1059
  %vm1085 = vcmp.eq.s32.totalorder %v1048, %v1059
  %vm1086 = vcmp.eq.s32.totalorder %v1049, %v1059
  %vm1087 = vcmp.eq.s32.totalorder %v1050, %v1059
  %vm1088 = vcmp.eq.s32.totalorder %v1051, %v1059
  %vm1089 = vcmp.eq.s32.totalorder %v1052, %v1059
  %vm1090 = vcmp.eq.s32.totalorder %v1053, %v1059
  %vm1091 = vcmp.eq.s32.totalorder %v1054, %v1059
  %vm1092 = vmand %vm1057, %vm1060
  %vm1093 = vmand %vm1057, %vm1061
  %vm1094 = vmand %vm1057, %vm1062
  %vm1095 = vmand %vm1057, %vm1063
  %vm1096 = vmand %vm1057, %vm1064
  %vm1097 = vmand %vm1057, %vm1065
  %vm1098 = vmand %vm1057, %vm1066
  %vm1099 = vmand %vm1057, %vm1067
  %vm1100 = vmand %vm1057, %vm1068
  %vm1101 = vmand %vm1057, %vm1069
  %vm1102 = vmand %vm1057, %vm1070
  %vm1103 = vmand %vm1057, %vm1071
  %vm1104 = vmand %vm1057, %vm1072
  %vm1105 = vmand %vm1057, %vm1073
  %vm1106 = vmand %vm1057, %vm1074
  %vm1107 = vmand %vm1057, %vm1075
  %vm1108 = vmand %vm1057, %vm1076
  %vm1109 = vmand %vm1057, %vm1077
  %vm1110 = vmand %vm1057, %vm1078
  %vm1111 = vmand %vm1057, %vm1079
  %vm1112 = vmand %vm1057, %vm1080
  %vm1113 = vmand %vm1057, %vm1081
  %vm1114 = vmand %vm1057, %vm1082
  %vm1115 = vmand %vm1057, %vm1083
  %vm1116 = vmand %vm1057, %vm1084
  %vm1117 = vmand %vm1057, %vm1085
  %vm1118 = vmand %vm1057, %vm1086
  %vm1119 = vmand %vm1057, %vm1087
  %vm1120 = vmand %vm1057, %vm1088
  %vm1121 = vmand %vm1057, %vm1089
  %vm1122 = vmand %vm1057, %vm1090
  %vm1123 = vmand %vm1057, %vm1091
  %v1124 = vsub.s32 %v51, 31
  %vm1125 = vcmp.ge.s32.totalorder %v1124, 0
  %vm1126 = vcmp.lt.s32.totalorder %v1124, 31
  %vm1127 = vmand %vm1125, %vm1126
  %v1128 = vmul.u32 %v1124, 2
  %v1129 = vadd.s32 %v1128, 91
  %vm1130 = vcmp.eq.s32.totalorder %v1023, %v1129
  %vm1131 = vcmp.eq.s32.totalorder %v1024, %v1129
  %vm1132 = vcmp.eq.s32.totalorder %v1025, %v1129
  %vm1133 = vcmp.eq.s32.totalorder %v1026, %v1129
  %vm1134 = vcmp.eq.s32.totalorder %v1027, %v1129
  %vm1135 = vcmp.eq.s32.totalorder %v1028, %v1129
  %vm1136 = vcmp.eq.s32.totalorder %v1029, %v1129
  %vm1137 = vcmp.eq.s32.totalorder %v1030, %v1129
  %vm1138 = vcmp.eq.s32.totalorder %v1031, %v1129
  %vm1139 = vcmp.eq.s32.totalorder %v1032, %v1129
  %vm1140 = vcmp.eq.s32.totalorder %v1033, %v1129
  %vm1141 = vcmp.eq.s32.totalorder %v1034, %v1129
  %vm1142 = vcmp.eq.s32.totalorder %v1035, %v1129
  %vm1143 = vcmp.eq.s32.totalorder %v1036, %v1129
  %vm1144 = vcmp.eq.s32.totalorder %v1037, %v1129
  %vm1145 = vcmp.eq.s32.totalorder %v1038, %v1129
  %vm1146 = vcmp.eq.s32.totalorder %v1039, %v1129
  %vm1147 = vcmp.eq.s32.totalorder %v1040, %v1129
  %vm1148 = vcmp.eq.s32.totalorder %v1041, %v1129
  %vm1149 = vcmp.eq.s32.totalorder %v1042, %v1129
  %vm1150 = vcmp.eq.s32.totalorder %v1043, %v1129
  %vm1151 = vcmp.eq.s32.totalorder %v1044, %v1129
  %vm1152 = vcmp.eq.s32.totalorder %v1045, %v1129
  %vm1153 = vcmp.eq.s32.totalorder %v1046, %v1129
  %vm1154 = vcmp.eq.s32.totalorder %v1047, %v1129
  %vm1155 = vcmp.eq.s32.totalorder %v1048, %v1129
  %vm1156 = vcmp.eq.s32.totalorder %v1049, %v1129
  %vm1157 = vcmp.eq.s32.totalorder %v1050, %v1129
  %vm1158 = vcmp.eq.s32.totalorder %v1051, %v1129
  %vm1159 = vcmp.eq.s32.totalorder %v1052, %v1129
  %vm1160 = vcmp.eq.s32.totalorder %v1053, %v1129
  %vm1161 = vcmp.eq.s32.totalorder %v1054, %v1129
  %vm1162 = vmand %vm1127, %vm1130
  %vm1163 = vmand %vm1127, %vm1131
  %vm1164 = vmand %vm1127, %vm1132
  %vm1165 = vmand %vm1127, %vm1133
  %vm1166 = vmand %vm1127, %vm1134
  %vm1167 = vmand %vm1127, %vm1135
  %vm1168 = vmand %vm1127, %vm1136
  %vm1169 = vmand %vm1127, %vm1137
  %vm1170 = vmand %vm1127, %vm1138
  %vm1171 = vmand %vm1127, %vm1139
  %vm1172 = vmand %vm1127, %vm1140
  %vm1173 = vmand %vm1127, %vm1141
  %vm1174 = vmand %vm1127, %vm1142
  %vm1175 = vmand %vm1127, %vm1143
  %vm1176 = vmand %vm1127, %vm1144
  %vm1177 = vmand %vm1127, %vm1145
  %vm1178 = vmand %vm1127, %vm1146
  %vm1179 = vmand %vm1127, %vm1147
  %vm1180 = vmand %vm1127, %vm1148
  %vm1181 = vmand %vm1127, %vm1149
  %vm1182 = vmand %vm1127, %vm1150
  %vm1183 = vmand %vm1127, %vm1151
  %vm1184 = vmand %vm1127, %vm1152
  %vm1185 = vmand %vm1127, %vm1153
  %vm1186 = vmand %vm1127, %vm1154
  %vm1187 = vmand %vm1127, %vm1155
  %vm1188 = vmand %vm1127, %vm1156
  %vm1189 = vmand %vm1127, %vm1157
  %vm1190 = vmand %vm1127, %vm1158
  %vm1191 = vmand %vm1127, %vm1159
  %vm1192 = vmand %vm1127, %vm1160
  %vm1193 = vmand %vm1127, %vm1161
  %vm1194 = vmor %vm1092, %vm1162
  %vm1195 = vmor %vm1093, %vm1163
  %vm1196 = vmor %vm1094, %vm1164
  %vm1197 = vmor %vm1095, %vm1165
  %vm1198 = vmor %vm1096, %vm1166
  %vm1199 = vmor %vm1097, %vm1167
  %vm1200 = vmor %vm1098, %vm1168
  %vm1201 = vmor %vm1099, %vm1169
  %vm1202 = vmor %vm1100, %vm1170
  %vm1203 = vmor %vm1101, %vm1171
  %vm1204 = vmor %vm1102, %vm1172
  %vm1205 = vmor %vm1103, %vm1173
  %vm1206 = vmor %vm1104, %vm1174
  %vm1207 = vmor %vm1105, %vm1175
  %vm1208 = vmor %vm1106, %vm1176
  %vm1209 = vmor %vm1107, %vm1177
  %vm1210 = vmor %vm1108, %vm1178
  %vm1211 = vmor %vm1109, %vm1179
  %vm1212 = vmor %vm1110, %vm1180
  %vm1213 = vmor %vm1111, %vm1181
  %vm1214 = vmor %vm1112, %vm1182
  %vm1215 = vmor %vm1113, %vm1183
  %vm1216 = vmor %vm1114, %vm1184
  %vm1217 = vmor %vm1115, %vm1185
  %vm1218 = vmor %vm1116, %vm1186
  %vm1219 = vmor %vm1117, %vm1187
  %vm1220 = vmor %vm1118, %vm1188
  %vm1221 = vmor %vm1119, %vm1189
  %vm1222 = vmor %vm1120, %vm1190
  %vm1223 = vmor %vm1121, %vm1191
  %vm1224 = vmor %vm1122, %vm1192
  %vm1225 = vmor %vm1123, %vm1193
  %v1226 = vsel %vm1194, 1, 0
  %v1227 = vsel %vm1195, 1, 0
  %v1228 = vsel %vm1196, 1, 0
  %v1229 = vsel %vm1197, 1, 0
  %v1230 = vsel %vm1198, 1, 0
  %v1231 = vsel %vm1199, 1, 0
  %v1232 = vsel %vm1200, 1, 0
  %v1233 = vsel %vm1201, 1, 0
  %v1234 = vsel %vm1202, 1, 0
  %v1235 = vsel %vm1203, 1, 0
  %v1236 = vsel %vm1204, 1, 0
  %v1237 = vsel %vm1205, 1, 0
  %v1238 = vsel %vm1206, 1, 0
  %v1239 = vsel %vm1207, 1, 0
  %v1240 = vsel %vm1208, 1, 0
  %v1241 = vsel %vm1209, 1, 0
  %v1242 = vsel %vm1210, 1, 0
  %v1243 = vsel %vm1211, 1, 0
  %v1244 = vsel %vm1212, 1, 0
  %v1245 = vsel %vm1213, 1, 0
  %v1246 = vsel %vm1214, 1, 0
  %v1247 = vsel %vm1215, 1, 0
  %v1248 = vsel %vm1216, 1, 0
  %v1249 = vsel %vm1217, 1, 0
  %v1250 = vsel %vm1218, 1, 0
  %v1251 = vsel %vm1219, 1, 0
  %v1252 = vsel %vm1220, 1, 0
  %v1253 = vsel %vm1221, 1, 0
  %v1254 = vsel %vm1222, 1, 0
  %v1255 = vsel %vm1223, 1, 0
  %v1256 = vsel %vm1224, 1, 0
  %v1257 = vsel %vm1225, 1, 0
  %v1258 = vcvt.s32.f32 %v1226
  %v1259 = vcvt.s32.f32 %v1227
  %v1260 = vcvt.s32.f32 %v1228
  %v1261 = vcvt.s32.f32 %v1229
  %v1262 = vcvt.s32.f32 %v1230
  %v1263 = vcvt.s32.f32 %v1231
  %v1264 = vcvt.s32.f32 %v1232
  %v1265 = vcvt.s32.f32 %v1233
  %v1266 = vcvt.s32.f32 %v1234
  %v1267 = vcvt.s32.f32 %v1235
  %v1268 = vcvt.s32.f32 %v1236
  %v1269 = vcvt.s32.f32 %v1237
  %v1270 = vcvt.s32.f32 %v1238
  %v1271 = vcvt.s32.f32 %v1239
  %v1272 = vcvt.s32.f32 %v1240
  %v1273 = vcvt.s32.f32 %v1241
  %v1274 = vcvt.s32.f32 %v1242
  %v1275 = vcvt.s32.f32 %v1243
  %v1276 = vcvt.s32.f32 %v1244
  %v1277 = vcvt.s32.f32 %v1245
  %v1278 = vcvt.s32.f32 %v1246
  %v1279 = vcvt.s32.f32 %v1247
  %v1280 = vcvt.s32.f32 %v1248
  %v1281 = vcvt.s32.f32 %v1249
  %v1282 = vcvt.s32.f32 %v1250
  %v1283 = vcvt.s32.f32 %v1251
  %v1284 = vcvt.s32.f32 %v1252
  %v1285 = vcvt.s32.f32 %v1253
  %v1286 = vcvt.s32.f32 %v1254
  %v1287 = vcvt.s32.f32 %v1255
  %v1288 = vcvt.s32.f32 %v1256
  %v1289 = vcvt.s32.f32 %v1257
  %1290 = vmatprep.subr.mxu0 0.0
  %1291 = vmatpush1.msra.mxu0 %v1258
  %1292 = vmatprep.subr.mxu0 0.0
  %1293 = vmatpush1.msra.mxu0 %v1259
  %1294 = vmatprep.subr.mxu0 0.0
  %1295 = vmatpush1.msra.mxu0 %v1260
  %1296 = vmatprep.subr.mxu0 0.0
  %1297 = vmatpush1.msra.mxu0 %v1261
  %1298 = vmatprep.subr.mxu0 0.0
  %1299 = vmatpush1.msra.mxu0 %v1262
  %1300 = vmatprep.subr.mxu0 0.0
  %1301 = vmatpush1.msra.mxu0 %v1263
  %1302 = vmatprep.subr.mxu0 0.0
  %1303 = vmatpush1.msra.mxu0 %v1264
  %1304 = vmatprep.subr.mxu0 0.0
  %1305 = vmatpush1.msra.mxu0 %v1265
  %1306 = vmatprep.subr.mxu0 0.0
  %1307 = vmatpush1.msra.mxu0 %v1266
  %1308 = vmatprep.subr.mxu0 0.0
  %1309 = vmatpush1.msra.mxu0 %v1267
  %1310 = vmatprep.subr.mxu0 0.0
  %1311 = vmatpush1.msra.mxu0 %v1268
  %1312 = vmatprep.subr.mxu0 0.0
  %1313 = vmatpush1.msra.mxu0 %v1269
  %1314 = vmatprep.subr.mxu0 0.0
  %1315 = vmatpush1.msra.mxu0 %v1270
  %1316 = vmatprep.subr.mxu0 0.0
  %1317 = vmatpush1.msra.mxu0 %v1271
  %1318 = vmatprep.subr.mxu0 0.0
  %1319 = vmatpush1.msra.mxu0 %v1272
  %1320 = vmatprep.subr.mxu0 0.0
  %1321 = vmatpush1.msra.mxu0 %v1273
  %1322 = vmatprep.subr.mxu0 0.0
  %1323 = vmatpush1.msra.mxu0 %v1274
  %1324 = vmatprep.subr.mxu0 0.0
  %1325 = vmatpush1.msra.mxu0 %v1275
  %1326 = vmatprep.subr.mxu0 0.0
  %1327 = vmatpush1.msra.mxu0 %v1276
  %1328 = vmatprep.subr.mxu0 0.0
  %1329 = vmatpush1.msra.mxu0 %v1277
  %1330 = vmatprep.subr.mxu0 0.0
  %1331 = vmatpush1.msra.mxu0 %v1278
  %1332 = vmatprep.subr.mxu0 0.0
  %1333 = vmatpush1.msra.mxu0 %v1279
  %1334 = vmatprep.subr.mxu0 0.0
  %1335 = vmatpush1.msra.mxu0 %v1280
  %1336 = vmatprep.subr.mxu0 0.0
  %1337 = vmatpush1.msra.mxu0 %v1281
  %1338 = vmatprep.subr.mxu0 0.0
  %1339 = vmatpush1.msra.mxu0 %v1282
  %1340 = vmatprep.subr.mxu0 0.0
  %1341 = vmatpush1.msra.mxu0 %v1283
  %1342 = vmatprep.subr.mxu0 0.0
  %1343 = vmatpush1.msra.mxu0 %v1284
  %1344 = vmatprep.subr.mxu0 0.0
  %1345 = vmatpush1.msra.mxu0 %v1285
  %1346 = vmatprep.subr.mxu0 0.0
  %1347 = vmatpush1.msra.mxu0 %v1286
  %1348 = vmatprep.subr.mxu0 0.0
  %1349 = vmatpush1.msra.mxu0 %v1287
  %1350 = vmatprep.subr.mxu0 0.0
  %1351 = vmatpush1.msra.mxu0 %v1288
  %1352 = vmatprep.subr.mxu0 0.0
  %1353 = vmatpush1.msra.mxu0 %v1289
  %1354 = vmatprep.mubr.f32.mxu0 %v1021
  %1355 = vmatmul.mubr.f32.gmra.mrb[0].mxu0 %v1020
  %v1356 = vpop.f32.mrb[0].mxu0
  %v1357 = vadd.f32 0.0, %v1356
  %v1358 = vpop.f32.mrb[0].mxu0
  %1359 = vdwg.mxu0
  %v1360 = vadd.s32 %v1059, 1
  %vm1361 = vcmp.eq.s32.totalorder %v1023, %v1360
  %vm1362 = vcmp.eq.s32.totalorder %v1024, %v1360
  %vm1363 = vcmp.eq.s32.totalorder %v1025, %v1360
  %vm1364 = vcmp.eq.s32.totalorder %v1026, %v1360
  %vm1365 = vcmp.eq.s32.totalorder %v1027, %v1360
  %vm1366 = vcmp.eq.s32.totalorder %v1028, %v1360
  %vm1367 = vcmp.eq.s32.totalorder %v1029, %v1360
  %vm1368 = vcmp.eq.s32.totalorder %v1030, %v1360
  %vm1369 = vcmp.eq.s32.totalorder %v1031, %v1360
  %vm1370 = vcmp.eq.s32.totalorder %v1032, %v1360
  %vm1371 = vcmp.eq.s32.totalorder %v1033, %v1360
  %vm1372 = vcmp.eq.s32.totalorder %v1034, %v1360
  %vm1373 = vcmp.eq.s32.totalorder %v1035, %v1360
  %vm1374 = vcmp.eq.s32.totalorder %v1036, %v1360
  %vm1375 = vcmp.eq.s32.totalorder %v1037, %v1360
  %vm1376 = vcmp.eq.s32.totalorder %v1038, %v1360
  %vm1377 = vcmp.eq.s32.totalorder %v1039, %v1360
  %vm1378 = vcmp.eq.s32.totalorder %v1040, %v1360
  %vm1379 = vcmp.eq.s32.totalorder %v1041, %v1360
  %vm1380 = vcmp.eq.s32.totalorder %v1042, %v1360
  %vm1381 = vcmp.eq.s32.totalorder %v1043, %v1360
  %vm1382 = vcmp.eq.s32.totalorder %v1044, %v1360
  %vm1383 = vcmp.eq.s32.totalorder %v1045, %v1360
  %vm1384 = vcmp.eq.s32.totalorder %v1046, %v1360
  %vm1385 = vcmp.eq.s32.totalorder %v1047, %v1360
  %vm1386 = vcmp.eq.s32.totalorder %v1048, %v1360
  %vm1387 = vcmp.eq.s32.totalorder %v1049, %v1360
  %vm1388 = vcmp.eq.s32.totalorder %v1050, %v1360
  %vm1389 = vcmp.eq.s32.totalorder %v1051, %v1360
  %vm1390 = vcmp.eq.s32.totalorder %v1052, %v1360
  %vm1391 = vcmp.eq.s32.totalorder %v1053, %v1360
  %vm1392 = vcmp.eq.s32.totalorder %v1054, %v1360
  %vm1393 = vmand %vm1057, %vm1361
  %vm1394 = vmand %vm1057, %vm1362
  %vm1395 = vmand %vm1057, %vm1363
  %vm1396 = vmand %vm1057, %vm1364
  %vm1397 = vmand %vm1057, %vm1365
  %vm1398 = vmand %vm1057, %vm1366
  %vm1399 = vmand %vm1057, %vm1367
  %vm1400 = vmand %vm1057, %vm1368
  %vm1401 = vmand %vm1057, %vm1369
  %vm1402 = vmand %vm1057, %vm1370
  %vm1403 = vmand %vm1057, %vm1371
  %vm1404 = vmand %vm1057, %vm1372
  %vm1405 = vmand %vm1057, %vm1373
  %vm1406 = vmand %vm1057, %vm1374
  %vm1407 = vmand %vm1057, %vm1375
  %vm1408 = vmand %vm1057, %vm1376
  %vm1409 = vmand %vm1057, %vm1377
  %vm1410 = vmand %vm1057, %vm1378
  %vm1411 = vmand %vm1057, %vm1379
  %vm1412 = vmand %vm1057, %vm1380
  %vm1413 = vmand %vm1057, %vm1381
  %vm1414 = vmand %vm1057, %vm1382
  %vm1415 = vmand %vm1057, %vm1383
  %vm1416 = vmand %vm1057, %vm1384
  %vm1417 = vmand %vm1057, %vm1385
  %vm1418 = vmand %vm1057, %vm1386
  %vm1419 = vmand %vm1057, %vm1387
  %vm1420 = vmand %vm1057, %vm1388
  %vm1421 = vmand %vm1057, %vm1389
  %vm1422 = vmand %vm1057, %vm1390
  %vm1423 = vmand %vm1057, %vm1391
  %vm1424 = vmand %vm1057, %vm1392
  %v1425 = vadd.s32 %v1129, 1
  %vm1426 = vcmp.eq.s32.totalorder %v1023, %v1425
  %vm1427 = vcmp.eq.s32.totalorder %v1024, %v1425
  %vm1428 = vcmp.eq.s32.totalorder %v1025, %v1425
  %vm1429 = vcmp.eq.s32.totalorder %v1026, %v1425
  %vm1430 = vcmp.eq.s32.totalorder %v1027, %v1425
  %vm1431 = vcmp.eq.s32.totalorder %v1028, %v1425
  %vm1432 = vcmp.eq.s32.totalorder %v1029, %v1425
  %vm1433 = vcmp.eq.s32.totalorder %v1030, %v1425
  %vm1434 = vcmp.eq.s32.totalorder %v1031, %v1425
  %vm1435 = vcmp.eq.s32.totalorder %v1032, %v1425
  %vm1436 = vcmp.eq.s32.totalorder %v1033, %v1425
  %vm1437 = vcmp.eq.s32.totalorder %v1034, %v1425
  %vm1438 = vcmp.eq.s32.totalorder %v1035, %v1425
  %vm1439 = vcmp.eq.s32.totalorder %v1036, %v1425
  %vm1440 = vcmp.eq.s32.totalorder %v1037, %v1425
  %vm1441 = vcmp.eq.s32.totalorder %v1038, %v1425
  %vm1442 = vcmp.eq.s32.totalorder %v1039, %v1425
  %vm1443 = vcmp.eq.s32.totalorder %v1040, %v1425
  %vm1444 = vcmp.eq.s32.totalorder %v1041, %v1425
  %vm1445 = vcmp.eq.s32.totalorder %v1042, %v1425
  %vm1446 = vcmp.eq.s32.totalorder %v1043, %v1425
  %vm1447 = vcmp.eq.s32.totalorder %v1044, %v1425
  %vm1448 = vcmp.eq.s32.totalorder %v1045, %v1425
  %vm1449 = vcmp.eq.s32.totalorder %v1046, %v1425
  %vm1450 = vcmp.eq.s32.totalorder %v1047, %v1425
  %vm1451 = vcmp.eq.s32.totalorder %v1048, %v1425
  %vm1452 = vcmp.eq.s32.totalorder %v1049, %v1425
  %vm1453 = vcmp.eq.s32.totalorder %v1050, %v1425
  %vm1454 = vcmp.eq.s32.totalorder %v1051, %v1425
  %vm1455 = vcmp.eq.s32.totalorder %v1052, %v1425
  %vm1456 = vcmp.eq.s32.totalorder %v1053, %v1425
  %vm1457 = vcmp.eq.s32.totalorder %v1054, %v1425
  %vm1458 = vmand %vm1127, %vm1426
  %vm1459 = vmand %vm1127, %vm1427
  %vm1460 = vmand %vm1127, %vm1428
  %vm1461 = vmand %vm1127, %vm1429
  %vm1462 = vmand %vm1127, %vm1430
  %vm1463 = vmand %vm1127, %vm1431
  %vm1464 = vmand %vm1127, %vm1432
  %vm1465 = vmand %vm1127, %vm1433
  %vm1466 = vmand %vm1127, %vm1434
  %vm1467 = vmand %vm1127, %vm1435
  %vm1468 = vmand %vm1127, %vm1436
  %vm1469 = vmand %vm1127, %vm1437
  %vm1470 = vmand %vm1127, %vm1438
  %vm1471 = vmand %vm1127, %vm1439
  %vm1472 = vmand %vm1127, %vm1440
  %vm1473 = vmand %vm1127, %vm1441
  %vm1474 = vmand %vm1127, %vm1442
  %vm1475 = vmand %vm1127, %vm1443
  %vm1476 = vmand %vm1127, %vm1444
  %vm1477 = vmand %vm1127, %vm1445
  %vm1478 = vmand %vm1127, %vm1446
  %vm1479 = vmand %vm1127, %vm1447
  %vm1480 = vmand %vm1127, %vm1448
  %vm1481 = vmand %vm1127, %vm1449
  %vm1482 = vmand %vm1127, %vm1450
  %vm1483 = vmand %vm1127, %vm1451
  %vm1484 = vmand %vm1127, %vm1452
  %vm1485 = vmand %vm1127, %vm1453
  %vm1486 = vmand %vm1127, %vm1454
  %vm1487 = vmand %vm1127, %vm1455
  %vm1488 = vmand %vm1127, %vm1456
  %vm1489 = vmand %vm1127, %vm1457
  %vm1490 = vmor %vm1393, %vm1458
  %vm1491 = vmor %vm1394, %vm1459
  %vm1492 = vmor %vm1395, %vm1460
  %vm1493 = vmor %vm1396, %vm1461
  %vm1494 = vmor %vm1397, %vm1462
  %vm1495 = vmor %vm1398, %vm1463
  %vm1496 = vmor %vm1399, %vm1464
  %vm1497 = vmor %vm1400, %vm1465
  %vm1498 = vmor %vm1401, %vm1466
  %vm1499 = vmor %vm1402, %vm1467
  %vm1500 = vmor %vm1403, %vm1468
  %vm1501 = vmor %vm1404, %vm1469
  %vm1502 = vmor %vm1405, %vm1470
  %vm1503 = vmor %vm1406, %vm1471
  %vm1504 = vmor %vm1407, %vm1472
  %vm1505 = vmor %vm1408, %vm1473
  %vm1506 = vmor %vm1409, %vm1474
  %vm1507 = vmor %vm1410, %vm1475
  %vm1508 = vmor %vm1411, %vm1476
  %vm1509 = vmor %vm1412, %vm1477
  %vm1510 = vmor %vm1413, %vm1478
  %vm1511 = vmor %vm1414, %vm1479
  %vm1512 = vmor %vm1415, %vm1480
  %vm1513 = vmor %vm1416, %vm1481
  %vm1514 = vmor %vm1417, %vm1482
  %vm1515 = vmor %vm1418, %vm1483
  %vm1516 = vmor %vm1419, %vm1484
  %vm1517 = vmor %vm1420, %vm1485
  %vm1518 = vmor %vm1421, %vm1486
  %vm1519 = vmor %vm1422, %vm1487
  %vm1520 = vmor %vm1423, %vm1488
  %vm1521 = vmor %vm1424, %vm1489
  %v1522 = vsel %vm1490, 1, 0
  %v1523 = vsel %vm1491, 1, 0
  %v1524 = vsel %vm1492, 1, 0
  %v1525 = vsel %vm1493, 1, 0
  %v1526 = vsel %vm1494, 1, 0
  %v1527 = vsel %vm1495, 1, 0
  %v1528 = vsel %vm1496, 1, 0
  %v1529 = vsel %vm1497, 1, 0
  %v1530 = vsel %vm1498, 1, 0
  %v1531 = vsel %vm1499, 1, 0
  %v1532 = vsel %vm1500, 1, 0
  %v1533 = vsel %vm1501, 1, 0
  %v1534 = vsel %vm1502, 1, 0
  %v1535 = vsel %vm1503, 1, 0
  %v1536 = vsel %vm1504, 1, 0
  %v1537 = vsel %vm1505, 1, 0
  %v1538 = vsel %vm1506, 1, 0
  %v1539 = vsel %vm1507, 1, 0
  %v1540 = vsel %vm1508, 1, 0
  %v1541 = vsel %vm1509, 1, 0
  %v1542 = vsel %vm1510, 1, 0
  %v1543 = vsel %vm1511, 1, 0
  %v1544 = vsel %vm1512, 1, 0
  %v1545 = vsel %vm1513, 1, 0
  %v1546 = vsel %vm1514, 1, 0
  %v1547 = vsel %vm1515, 1, 0
  %v1548 = vsel %vm1516, 1, 0
  %v1549 = vsel %vm1517, 1, 0
  %v1550 = vsel %vm1518, 1, 0
  %v1551 = vsel %vm1519, 1, 0
  %v1552 = vsel %vm1520, 1, 0
  %v1553 = vsel %vm1521, 1, 0
  %v1554 = vcvt.s32.f32 %v1522
  %v1555 = vcvt.s32.f32 %v1523
  %v1556 = vcvt.s32.f32 %v1524
  %v1557 = vcvt.s32.f32 %v1525
  %v1558 = vcvt.s32.f32 %v1526
  %v1559 = vcvt.s32.f32 %v1527
  %v1560 = vcvt.s32.f32 %v1528
  %v1561 = vcvt.s32.f32 %v1529
  %v1562 = vcvt.s32.f32 %v1530
  %v1563 = vcvt.s32.f32 %v1531
  %v1564 = vcvt.s32.f32 %v1532
  %v1565 = vcvt.s32.f32 %v1533
  %v1566 = vcvt.s32.f32 %v1534
  %v1567 = vcvt.s32.f32 %v1535
  %v1568 = vcvt.s32.f32 %v1536
  %v1569 = vcvt.s32.f32 %v1537
  %v1570 = vcvt.s32.f32 %v1538
  %v1571 = vcvt.s32.f32 %v1539
  %v1572 = vcvt.s32.f32 %v1540
  %v1573 = vcvt.s32.f32 %v1541
  %v1574 = vcvt.s32.f32 %v1542
  %v1575 = vcvt.s32.f32 %v1543
  %v1576 = vcvt.s32.f32 %v1544
  %v1577 = vcvt.s32.f32 %v1545
  %v1578 = vcvt.s32.f32 %v1546
  %v1579 = vcvt.s32.f32 %v1547
  %v1580 = vcvt.s32.f32 %v1548
  %v1581 = vcvt.s32.f32 %v1549
  %v1582 = vcvt.s32.f32 %v1550
  %v1583 = vcvt.s32.f32 %v1551
  %v1584 = vcvt.s32.f32 %v1552
  %v1585 = vcvt.s32.f32 %v1553
  %1586 = vmatprep.subr.mxu0 0.0
  %1587 = vmatpush1.msra.mxu0 %v1554
  %1588 = vmatprep.subr.mxu0 0.0
  %1589 = vmatpush1.msra.mxu0 %v1555
  %1590 = vmatprep.subr.mxu0 0.0
  %1591 = vmatpush1.msra.mxu0 %v1556
  %1592 = vmatprep.subr.mxu0 0.0
  %1593 = vmatpush1.msra.mxu0 %v1557
  %1594 = vmatprep.subr.mxu0 0.0
  %1595 = vmatpush1.msra.mxu0 %v1558
  %1596 = vmatprep.subr.mxu0 0.0
  %1597 = vmatpush1.msra.mxu0 %v1559
  %1598 = vmatprep.subr.mxu0 0.0
  %1599 = vmatpush1.msra.mxu0 %v1560
  %1600 = vmatprep.subr.mxu0 0.0
  %1601 = vmatpush1.msra.mxu0 %v1561
  %1602 = vmatprep.subr.mxu0 0.0
  %1603 = vmatpush1.msra.mxu0 %v1562
  %1604 = vmatprep.subr.mxu0 0.0
  %1605 = vmatpush1.msra.mxu0 %v1563
  %1606 = vmatprep.subr.mxu0 0.0
  %1607 = vmatpush1.msra.mxu0 %v1564
  %1608 = vmatprep.subr.mxu0 0.0
  %1609 = vmatpush1.msra.mxu0 %v1565
  %1610 = vmatprep.subr.mxu0 0.0
  %1611 = vmatpush1.msra.mxu0 %v1566
  %1612 = vmatprep.subr.mxu0 0.0
  %1613 = vmatpush1.msra.mxu0 %v1567
  %1614 = vmatprep.subr.mxu0 0.0
  %1615 = vmatpush1.msra.mxu0 %v1568
  %1616 = vmatprep.subr.mxu0 0.0
  %1617 = vmatpush1.msra.mxu0 %v1569
  %1618 = vmatprep.subr.mxu0 0.0
  %1619 = vmatpush1.msra.mxu0 %v1570
  %1620 = vmatprep.subr.mxu0 0.0
  %1621 = vmatpush1.msra.mxu0 %v1571
  %1622 = vmatprep.subr.mxu0 0.0
  %1623 = vmatpush1.msra.mxu0 %v1572
  %1624 = vmatprep.subr.mxu0 0.0
  %1625 = vmatpush1.msra.mxu0 %v1573
  %1626 = vmatprep.subr.mxu0 0.0
  %1627 = vmatpush1.msra.mxu0 %v1574
  %1628 = vmatprep.subr.mxu0 0.0
  %1629 = vmatpush1.msra.mxu0 %v1575
  %1630 = vmatprep.subr.mxu0 0.0
  %1631 = vmatpush1.msra.mxu0 %v1576
  %1632 = vmatprep.subr.mxu0 0.0
  %1633 = vmatpush1.msra.mxu0 %v1577
  %1634 = vmatprep.subr.mxu0 0.0
  %1635 = vmatpush1.msra.mxu0 %v1578
  %1636 = vmatprep.subr.mxu0 0.0
  %1637 = vmatpush1.msra.mxu0 %v1579
  %1638 = vmatprep.subr.mxu0 0.0
  %1639 = vmatpush1.msra.mxu0 %v1580
  %1640 = vmatprep.subr.mxu0 0.0
  %1641 = vmatpush1.msra.mxu0 %v1581
  %1642 = vmatprep.subr.mxu0 0.0
  %1643 = vmatpush1.msra.mxu0 %v1582
  %1644 = vmatprep.subr.mxu0 0.0
  %1645 = vmatpush1.msra.mxu0 %v1583
  %1646 = vmatprep.subr.mxu0 0.0
  %1647 = vmatpush1.msra.mxu0 %v1584
  %1648 = vmatprep.subr.mxu0 0.0
  %1649 = vmatpush1.msra.mxu0 %v1585
  %1650 = vmatprep.mubr.f32.mxu0 %v1021
  %1651 = vmatmul.mubr.f32.gmra.mrb[0].mxu0 %v1020
  %v1652 = vpop.f32.mrb[0].mxu0
  %v1653 = vadd.f32 0.0, %v1652
  %v1654 = vpop.f32.mrb[0].mxu0
  %1655 = vdwg.mxu0
  %v1656 = vadd.s32 %v1059, 2
  %vm1657 = vcmp.eq.s32.totalorder %v1023, %v1656
  %vm1658 = vcmp.eq.s32.totalorder %v1024, %v1656
  %vm1659 = vcmp.eq.s32.totalorder %v1025, %v1656
  %vm1660 = vcmp.eq.s32.totalorder %v1026, %v1656
  %vm1661 = vcmp.eq.s32.totalorder %v1027, %v1656
  %vm1662 = vcmp.eq.s32.totalorder %v1028, %v1656
  %vm1663 = vcmp.eq.s32.totalorder %v1029, %v1656
  %vm1664 = vcmp.eq.s32.totalorder %v1030, %v1656
  %vm1665 = vcmp.eq.s32.totalorder %v1031, %v1656
  %vm1666 = vcmp.eq.s32.totalorder %v1032, %v1656
  %vm1667 = vcmp.eq.s32.totalorder %v1033, %v1656
  %vm1668 = vcmp.eq.s32.totalorder %v1034, %v1656
  %vm1669 = vcmp.eq.s32.totalorder %v1035, %v1656
  %vm1670 = vcmp.eq.s32.totalorder %v1036, %v1656
  %vm1671 = vcmp.eq.s32.totalorder %v1037, %v1656
  %vm1672 = vcmp.eq.s32.totalorder %v1038, %v1656
  %vm1673 = vcmp.eq.s32.totalorder %v1039, %v1656
  %vm1674 = vcmp.eq.s32.totalorder %v1040, %v1656
  %vm1675 = vcmp.eq.s32.totalorder %v1041, %v1656
  %vm1676 = vcmp.eq.s32.totalorder %v1042, %v1656
  %vm1677 = vcmp.eq.s32.totalorder %v1043, %v1656
  %vm1678 = vcmp.eq.s32.totalorder %v1044, %v1656
  %vm1679 = vcmp.eq.s32.totalorder %v1045, %v1656
  %vm1680 = vcmp.eq.s32.totalorder %v1046, %v1656
  %vm1681 = vcmp.eq.s32.totalorder %v1047, %v1656
  %vm1682 = vcmp.eq.s32.totalorder %v1048, %v1656
  %vm1683 = vcmp.eq.s32.totalorder %v1049, %v1656
  %vm1684 = vcmp.eq.s32.totalorder %v1050, %v1656
  %vm1685 = vcmp.eq.s32.totalorder %v1051, %v1656
  %vm1686 = vcmp.eq.s32.totalorder %v1052, %v1656
  %vm1687 = vcmp.eq.s32.totalorder %v1053, %v1656
  %vm1688 = vcmp.eq.s32.totalorder %v1054, %v1656
  %vm1689 = vmand %vm1057, %vm1657
  %vm1690 = vmand %vm1057, %vm1658
  %vm1691 = vmand %vm1057, %vm1659
  %vm1692 = vmand %vm1057, %vm1660
  %vm1693 = vmand %vm1057, %vm1661
  %vm1694 = vmand %vm1057, %vm1662
  %vm1695 = vmand %vm1057, %vm1663
  %vm1696 = vmand %vm1057, %vm1664
  %vm1697 = vmand %vm1057, %vm1665
  %vm1698 = vmand %vm1057, %vm1666
  %vm1699 = vmand %vm1057, %vm1667
  %vm1700 = vmand %vm1057, %vm1668
  %vm1701 = vmand %vm1057, %vm1669
  %vm1702 = vmand %vm1057, %vm1670
  %vm1703 = vmand %vm1057, %vm1671
  %vm1704 = vmand %vm1057, %vm1672
  %vm1705 = vmand %vm1057, %vm1673
  %vm1706 = vmand %vm1057, %vm1674
  %vm1707 = vmand %vm1057, %vm1675
  %vm1708 = vmand %vm1057, %vm1676
  %vm1709 = vmand %vm1057, %vm1677
  %vm1710 = vmand %vm1057, %vm1678
  %vm1711 = vmand %vm1057, %vm1679
  %vm1712 = vmand %vm1057, %vm1680
  %vm1713 = vmand %vm1057, %vm1681
  %vm1714 = vmand %vm1057, %vm1682
  %vm1715 = vmand %vm1057, %vm1683
  %vm1716 = vmand %vm1057, %vm1684
  %vm1717 = vmand %vm1057, %vm1685
  %vm1718 = vmand %vm1057, %vm1686
  %vm1719 = vmand %vm1057, %vm1687
  %vm1720 = vmand %vm1057, %vm1688
  %v1721 = vadd.s32 %v1129, 2
  %vm1722 = vcmp.eq.s32.totalorder %v1023, %v1721
  %vm1723 = vcmp.eq.s32.totalorder %v1024, %v1721
  %vm1724 = vcmp.eq.s32.totalorder %v1025, %v1721
  %vm1725 = vcmp.eq.s32.totalorder %v1026, %v1721
  %vm1726 = vcmp.eq.s32.totalorder %v1027, %v1721
  %vm1727 = vcmp.eq.s32.totalorder %v1028, %v1721
  %vm1728 = vcmp.eq.s32.totalorder %v1029, %v1721
  %vm1729 = vcmp.eq.s32.totalorder %v1030, %v1721
  %vm1730 = vcmp.eq.s32.totalorder %v1031, %v1721
  %vm1731 = vcmp.eq.s32.totalorder %v1032, %v1721
  %vm1732 = vcmp.eq.s32.totalorder %v1033, %v1721
  %vm1733 = vcmp.eq.s32.totalorder %v1034, %v1721
  %vm1734 = vcmp.eq.s32.totalorder %v1035, %v1721
  %vm1735 = vcmp.eq.s32.totalorder %v1036, %v1721
  %vm1736 = vcmp.eq.s32.totalorder %v1037, %v1721
  %vm1737 = vcmp.eq.s32.totalorder %v1038, %v1721
  %vm1738 = vcmp.eq.s32.totalorder %v1039, %v1721
  %vm1739 = vcmp.eq.s32.totalorder %v1040, %v1721
  %vm1740 = vcmp.eq.s32.totalorder %v1041, %v1721
  %vm1741 = vcmp.eq.s32.totalorder %v1042, %v1721
  %vm1742 = vcmp.eq.s32.totalorder %v1043, %v1721
  %vm1743 = vcmp.eq.s32.totalorder %v1044, %v1721
  %vm1744 = vcmp.eq.s32.totalorder %v1045, %v1721
  %vm1745 = vcmp.eq.s32.totalorder %v1046, %v1721
  %vm1746 = vcmp.eq.s32.totalorder %v1047, %v1721
  %vm1747 = vcmp.eq.s32.totalorder %v1048, %v1721
  %vm1748 = vcmp.eq.s32.totalorder %v1049, %v1721
  %vm1749 = vcmp.eq.s32.totalorder %v1050, %v1721
  %vm1750 = vcmp.eq.s32.totalorder %v1051, %v1721
  %vm1751 = vcmp.eq.s32.totalorder %v1052, %v1721
  %vm1752 = vcmp.eq.s32.totalorder %v1053, %v1721
  %vm1753 = vcmp.eq.s32.totalorder %v1054, %v1721
  %vm1754 = vmand %vm1127, %vm1722
  %vm1755 = vmand %vm1127, %vm1723
  %vm1756 = vmand %vm1127, %vm1724
  %vm1757 = vmand %vm1127, %vm1725
  %vm1758 = vmand %vm1127, %vm1726
  %vm1759 = vmand %vm1127, %vm1727
  %vm1760 = vmand %vm1127, %vm1728
  %vm1761 = vmand %vm1127, %vm1729
  %vm1762 = vmand %vm1127, %vm1730
  %vm1763 = vmand %vm1127, %vm1731
  %vm1764 = vmand %vm1127, %vm1732
  %vm1765 = vmand %vm1127, %vm1733
  %vm1766 = vmand %vm1127, %vm1734
  %vm1767 = vmand %vm1127, %vm1735
  %vm1768 = vmand %vm1127, %vm1736
  %vm1769 = vmand %vm1127, %vm1737
  %vm1770 = vmand %vm1127, %vm1738
  %vm1771 = vmand %vm1127, %vm1739
  %vm1772 = vmand %vm1127, %vm1740
  %vm1773 = vmand %vm1127, %vm1741
  %vm1774 = vmand %vm1127, %vm1742
  %vm1775 = vmand %vm1127, %vm1743
  %vm1776 = vmand %vm1127, %vm1744
  %vm1777 = vmand %vm1127, %vm1745
  %vm1778 = vmand %vm1127, %vm1746
  %vm1779 = vmand %vm1127, %vm1747
  %vm1780 = vmand %vm1127, %vm1748
  %vm1781 = vmand %vm1127, %vm1749
  %vm1782 = vmand %vm1127, %vm1750
  %vm1783 = vmand %vm1127, %vm1751
  %vm1784 = vmand %vm1127, %vm1752
  %vm1785 = vmand %vm1127, %vm1753
  %vm1786 = vmor %vm1689, %vm1754
  %vm1787 = vmor %vm1690, %vm1755
  %vm1788 = vmor %vm1691, %vm1756
  %vm1789 = vmor %vm1692, %vm1757
  %vm1790 = vmor %vm1693, %vm1758
  %vm1791 = vmor %vm1694, %vm1759
  %vm1792 = vmor %vm1695, %vm1760
  %vm1793 = vmor %vm1696, %vm1761
  %vm1794 = vmor %vm1697, %vm1762
  %vm1795 = vmor %vm1698, %vm1763
  %vm1796 = vmor %vm1699, %vm1764
  %vm1797 = vmor %vm1700, %vm1765
  %vm1798 = vmor %vm1701, %vm1766
  %vm1799 = vmor %vm1702, %vm1767
  %vm1800 = vmor %vm1703, %vm1768
  %vm1801 = vmor %vm1704, %vm1769
  %vm1802 = vmor %vm1705, %vm1770
  %vm1803 = vmor %vm1706, %vm1771
  %vm1804 = vmor %vm1707, %vm1772
  %vm1805 = vmor %vm1708, %vm1773
  %vm1806 = vmor %vm1709, %vm1774
  %vm1807 = vmor %vm1710, %vm1775
  %vm1808 = vmor %vm1711, %vm1776
  %vm1809 = vmor %vm1712, %vm1777
  %vm1810 = vmor %vm1713, %vm1778
  %vm1811 = vmor %vm1714, %vm1779
  %vm1812 = vmor %vm1715, %vm1780
  %vm1813 = vmor %vm1716, %vm1781
  %vm1814 = vmor %vm1717, %vm1782
  %vm1815 = vmor %vm1718, %vm1783
  %vm1816 = vmor %vm1719, %vm1784
  %vm1817 = vmor %vm1720, %vm1785
  %v1818 = vsel %vm1786, 1, 0
  %v1819 = vsel %vm1787, 1, 0
  %v1820 = vsel %vm1788, 1, 0
  %v1821 = vsel %vm1789, 1, 0
  %v1822 = vsel %vm1790, 1, 0
  %v1823 = vsel %vm1791, 1, 0
  %v1824 = vsel %vm1792, 1, 0
  %v1825 = vsel %vm1793, 1, 0
  %v1826 = vsel %vm1794, 1, 0
  %v1827 = vsel %vm1795, 1, 0
  %v1828 = vsel %vm1796, 1, 0
  %v1829 = vsel %vm1797, 1, 0
  %v1830 = vsel %vm1798, 1, 0
  %v1831 = vsel %vm1799, 1, 0
  %v1832 = vsel %vm1800, 1, 0
  %v1833 = vsel %vm1801, 1, 0
  %v1834 = vsel %vm1802, 1, 0
  %v1835 = vsel %vm1803, 1, 0
  %v1836 = vsel %vm1804, 1, 0
  %v1837 = vsel %vm1805, 1, 0
  %v1838 = vsel %vm1806, 1, 0
  %v1839 = vsel %vm1807, 1, 0
  %v1840 = vsel %vm1808, 1, 0
  %v1841 = vsel %vm1809, 1, 0
  %v1842 = vsel %vm1810, 1, 0
  %v1843 = vsel %vm1811, 1, 0
  %v1844 = vsel %vm1812, 1, 0
  %v1845 = vsel %vm1813, 1, 0
  %v1846 = vsel %vm1814, 1, 0
  %v1847 = vsel %vm1815, 1, 0
  %v1848 = vsel %vm1816, 1, 0
  %v1849 = vsel %vm1817, 1, 0
  %v1850 = vcvt.s32.f32 %v1818
  %v1851 = vcvt.s32.f32 %v1819
  %v1852 = vcvt.s32.f32 %v1820
  %v1853 = vcvt.s32.f32 %v1821
  %v1854 = vcvt.s32.f32 %v1822
  %v1855 = vcvt.s32.f32 %v1823
  %v1856 = vcvt.s32.f32 %v1824
  %v1857 = vcvt.s32.f32 %v1825
  %v1858 = vcvt.s32.f32 %v1826
  %v1859 = vcvt.s32.f32 %v1827
  %v1860 = vcvt.s32.f32 %v1828
  %v1861 = vcvt.s32.f32 %v1829
  %v1862 = vcvt.s32.f32 %v1830
  %v1863 = vcvt.s32.f32 %v1831
  %v1864 = vcvt.s32.f32 %v1832
  %v1865 = vcvt.s32.f32 %v1833
  %v1866 = vcvt.s32.f32 %v1834
  %v1867 = vcvt.s32.f32 %v1835
  %v1868 = vcvt.s32.f32 %v1836
  %v1869 = vcvt.s32.f32 %v1837
  %v1870 = vcvt.s32.f32 %v1838
  %v1871 = vcvt.s32.f32 %v1839
  %v1872 = vcvt.s32.f32 %v1840
  %v1873 = vcvt.s32.f32 %v1841
  %v1874 = vcvt.s32.f32 %v1842
  %v1875 = vcvt.s32.f32 %v1843
  %v1876 = vcvt.s32.f32 %v1844
  %v1877 = vcvt.s32.f32 %v1845
  %v1878 = vcvt.s32.f32 %v1846
  %v1879 = vcvt.s32.f32 %v1847
  %v1880 = vcvt.s32.f32 %v1848
  %v1881 = vcvt.s32.f32 %v1849
  %1882 = vmatprep.subr.mxu0 0.0
  %1883 = vmatpush1.msra.mxu0 %v1850
  %1884 = vmatprep.subr.mxu0 0.0
  %1885 = vmatpush1.msra.mxu0 %v1851
  %1886 = vmatprep.subr.mxu0 0.0
  %1887 = vmatpush1.msra.mxu0 %v1852
  %1888 = vmatprep.subr.mxu0 0.0
  %1889 = vmatpush1.msra.mxu0 %v1853
  %1890 = vmatprep.subr.mxu0 0.0
  %1891 = vmatpush1.msra.mxu0 %v1854
  %1892 = vmatprep.subr.mxu0 0.0
  %1893 = vmatpush1.msra.mxu0 %v1855
  %1894 = vmatprep.subr.mxu0 0.0
  %1895 = vmatpush1.msra.mxu0 %v1856
  %1896 = vmatprep.subr.mxu0 0.0
  %1897 = vmatpush1.msra.mxu0 %v1857
  %1898 = vmatprep.subr.mxu0 0.0
  %1899 = vmatpush1.msra.mxu0 %v1858
  %1900 = vmatprep.subr.mxu0 0.0
  %1901 = vmatpush1.msra.mxu0 %v1859
  %1902 = vmatprep.subr.mxu0 0.0
  %1903 = vmatpush1.msra.mxu0 %v1860
  %1904 = vmatprep.subr.mxu0 0.0
  %1905 = vmatpush1.msra.mxu0 %v1861
  %1906 = vmatprep.subr.mxu0 0.0
  %1907 = vmatpush1.msra.mxu0 %v1862
  %1908 = vmatprep.subr.mxu0 0.0
  %1909 = vmatpush1.msra.mxu0 %v1863
  %1910 = vmatprep.subr.mxu0 0.0
  %1911 = vmatpush1.msra.mxu0 %v1864
  %1912 = vmatprep.subr.mxu0 0.0
  %1913 = vmatpush1.msra.mxu0 %v1865
  %1914 = vmatprep.subr.mxu0 0.0
  %1915 = vmatpush1.msra.mxu0 %v1866
  %1916 = vmatprep.subr.mxu0 0.0
  %1917 = vmatpush1.msra.mxu0 %v1867
  %1918 = vmatprep.subr.mxu0 0.0
  %1919 = vmatpush1.msra.mxu0 %v1868
  %1920 = vmatprep.subr.mxu0 0.0
  %1921 = vmatpush1.msra.mxu0 %v1869
  %1922 = vmatprep.subr.mxu0 0.0
  %1923 = vmatpush1.msra.mxu0 %v1870
  %1924 = vmatprep.subr.mxu0 0.0
  %1925 = vmatpush1.msra.mxu0 %v1871
  %1926 = vmatprep.subr.mxu0 0.0
  %1927 = vmatpush1.msra.mxu0 %v1872
  %1928 = vmatprep.subr.mxu0 0.0
  %1929 = vmatpush1.msra.mxu0 %v1873
  %1930 = vmatprep.subr.mxu0 0.0
  %1931 = vmatpush1.msra.mxu0 %v1874
  %1932 = vmatprep.subr.mxu0 0.0
  %1933 = vmatpush1.msra.mxu0 %v1875
  %1934 = vmatprep.subr.mxu0 0.0
  %1935 = vmatpush1.msra.mxu0 %v1876
  %1936 = vmatprep.subr.mxu0 0.0
  %1937 = vmatpush1.msra.mxu0 %v1877
  %1938 = vmatprep.subr.mxu0 0.0
  %1939 = vmatpush1.msra.mxu0 %v1878
  %1940 = vmatprep.subr.mxu0 0.0
  %1941 = vmatpush1.msra.mxu0 %v1879
  %1942 = vmatprep.subr.mxu0 0.0
  %1943 = vmatpush1.msra.mxu0 %v1880
  %1944 = vmatprep.subr.mxu0 0.0
  %1945 = vmatpush1.msra.mxu0 %v1881
  %1946 = vmatprep.mubr.f32.mxu0 %v1021
  %1947 = vmatmul.mubr.f32.gmra.mrb[0].mxu0 %v1020
  %v1948 = vpop.f32.mrb[0].mxu0
  %v1949 = vadd.f32 0.0, %v1948
  %v1950 = vpop.f32.mrb[0].mxu0
  %1951 = vdwg.mxu0
  %v1952 = vadd.s32 %v1059, 3
  %vm1953 = vcmp.eq.s32.totalorder %v1023, %v1952
  %vm1954 = vcmp.eq.s32.totalorder %v1024, %v1952
  %vm1955 = vcmp.eq.s32.totalorder %v1025, %v1952
  %vm1956 = vcmp.eq.s32.totalorder %v1026, %v1952
  %vm1957 = vcmp.eq.s32.totalorder %v1027, %v1952
  %vm1958 = vcmp.eq.s32.totalorder %v1028, %v1952
  %vm1959 = vcmp.eq.s32.totalorder %v1029, %v1952
  %vm1960 = vcmp.eq.s32.totalorder %v1030, %v1952
  %vm1961 = vcmp.eq.s32.totalorder %v1031, %v1952
  %vm1962 = vcmp.eq.s32.totalorder %v1032, %v1952
  %vm1963 = vcmp.eq.s32.totalorder %v1033, %v1952
  %vm1964 = vcmp.eq.s32.totalorder %v1034, %v1952
  %vm1965 = vcmp.eq.s32.totalorder %v1035, %v1952
  %vm1966 = vcmp.eq.s32.totalorder %v1036, %v1952
  %vm1967 = vcmp.eq.s32.totalorder %v1037, %v1952
  %vm1968 = vcmp.eq.s32.totalorder %v1038, %v1952
  %vm1969 = vcmp.eq.s32.totalorder %v1039, %v1952
  %vm1970 = vcmp.eq.s32.totalorder %v1040, %v1952
  %vm1971 = vcmp.eq.s32.totalorder %v1041, %v1952
  %vm1972 = vcmp.eq.s32.totalorder %v1042, %v1952
  %vm1973 = vcmp.eq.s32.totalorder %v1043, %v1952
  %vm1974 = vcmp.eq.s32.totalorder %v1044, %v1952
  %vm1975 = vcmp.eq.s32.totalorder %v1045, %v1952
  %vm1976 = vcmp.eq.s32.totalorder %v1046, %v1952
  %vm1977 = vcmp.eq.s32.totalorder %v1047, %v1952
  %vm1978 = vcmp.eq.s32.totalorder %v1048, %v1952
  %vm1979 = vcmp.eq.s32.totalorder %v1049, %v1952
  %vm1980 = vcmp.eq.s32.totalorder %v1050, %v1952
  %vm1981 = vcmp.eq.s32.totalorder %v1051, %v1952
  %vm1982 = vcmp.eq.s32.totalorder %v1052, %v1952
  %vm1983 = vcmp.eq.s32.totalorder %v1053, %v1952
  %vm1984 = vcmp.eq.s32.totalorder %v1054, %v1952
  %vm1985 = vmand %vm1057, %vm1953
  %vm1986 = vmand %vm1057, %vm1954
  %vm1987 = vmand %vm1057, %vm1955
  %vm1988 = vmand %vm1057, %vm1956
  %vm1989 = vmand %vm1057, %vm1957
  %vm1990 = vmand %vm1057, %vm1958
  %vm1991 = vmand %vm1057, %vm1959
  %vm1992 = vmand %vm1057, %vm1960
  %vm1993 = vmand %vm1057, %vm1961
  %vm1994 = vmand %vm1057, %vm1962
  %vm1995 = vmand %vm1057, %vm1963
  %vm1996 = vmand %vm1057, %vm1964
  %vm1997 = vmand %vm1057, %vm1965
  %vm1998 = vmand %vm1057, %vm1966
  %vm1999 = vmand %vm1057, %vm1967
  %vm2000 = vmand %vm1057, %vm1968
  %vm2001 = vmand %vm1057, %vm1969
  %vm2002 = vmand %vm1057, %vm1970
  %vm2003 = vmand %vm1057, %vm1971
  %vm2004 = vmand %vm1057, %vm1972
  %vm2005 = vmand %vm1057, %vm1973
  %vm2006 = vmand %vm1057, %vm1974
  %vm2007 = vmand %vm1057, %vm1975
  %vm2008 = vmand %vm1057, %vm1976
  %vm2009 = vmand %vm1057, %vm1977
  %vm2010 = vmand %vm1057, %vm1978
  %vm2011 = vmand %vm1057, %vm1979
  %vm2012 = vmand %vm1057, %vm1980
  %vm2013 = vmand %vm1057, %vm1981
  %vm2014 = vmand %vm1057, %vm1982
  %vm2015 = vmand %vm1057, %vm1983
  %vm2016 = vmand %vm1057, %vm1984
  %v2017 = vadd.s32 %v1129, 3
  %vm2018 = vcmp.eq.s32.totalorder %v1023, %v2017
  %vm2019 = vcmp.eq.s32.totalorder %v1024, %v2017
  %vm2020 = vcmp.eq.s32.totalorder %v1025, %v2017
  %vm2021 = vcmp.eq.s32.totalorder %v1026, %v2017
  %vm2022 = vcmp.eq.s32.totalorder %v1027, %v2017
  %vm2023 = vcmp.eq.s32.totalorder %v1028, %v2017
  %vm2024 = vcmp.eq.s32.totalorder %v1029, %v2017
  %vm2025 = vcmp.eq.s32.totalorder %v1030, %v2017
  %vm2026 = vcmp.eq.s32.totalorder %v1031, %v2017
  %vm2027 = vcmp.eq.s32.totalorder %v1032, %v2017
  %vm2028 = vcmp.eq.s32.totalorder %v1033, %v2017
  %vm2029 = vcmp.eq.s32.totalorder %v1034, %v2017
  %vm2030 = vcmp.eq.s32.totalorder %v1035, %v2017
  %vm2031 = vcmp.eq.s32.totalorder %v1036, %v2017
  %vm2032 = vcmp.eq.s32.totalorder %v1037, %v2017
  %vm2033 = vcmp.eq.s32.totalorder %v1038, %v2017
  %vm2034 = vcmp.eq.s32.totalorder %v1039, %v2017
  %vm2035 = vcmp.eq.s32.totalorder %v1040, %v2017
  %vm2036 = vcmp.eq.s32.totalorder %v1041, %v2017
  %vm2037 = vcmp.eq.s32.totalorder %v1042, %v2017
  %vm2038 = vcmp.eq.s32.totalorder %v1043, %v2017
  %vm2039 = vcmp.eq.s32.totalorder %v1044, %v2017
  %vm2040 = vcmp.eq.s32.totalorder %v1045, %v2017
  %vm2041 = vcmp.eq.s32.totalorder %v1046, %v2017
  %vm2042 = vcmp.eq.s32.totalorder %v1047, %v2017
  %vm2043 = vcmp.eq.s32.totalorder %v1048, %v2017
  %vm2044 = vcmp.eq.s32.totalorder %v1049, %v2017
  %vm2045 = vcmp.eq.s32.totalorder %v1050, %v2017
  %vm2046 = vcmp.eq.s32.totalorder %v1051, %v2017
  %vm2047 = vcmp.eq.s32.totalorder %v1052, %v2017
  %vm2048 = vcmp.eq.s32.totalorder %v1053, %v2017
  %vm2049 = vcmp.eq.s32.totalorder %v1054, %v2017
  %vm2050 = vmand %vm1127, %vm2018
  %vm2051 = vmand %vm1127, %vm2019
  %vm2052 = vmand %vm1127, %vm2020
  %vm2053 = vmand %vm1127, %vm2021
  %vm2054 = vmand %vm1127, %vm2022
  %vm2055 = vmand %vm1127, %vm2023
  %vm2056 = vmand %vm1127, %vm2024
  %vm2057 = vmand %vm1127, %vm2025
  %vm2058 = vmand %vm1127, %vm2026
  %vm2059 = vmand %vm1127, %vm2027
  %vm2060 = vmand %vm1127, %vm2028
  %vm2061 = vmand %vm1127, %vm2029
  %vm2062 = vmand %vm1127, %vm2030
  %vm2063 = vmand %vm1127, %vm2031
  %vm2064 = vmand %vm1127, %vm2032
  %vm2065 = vmand %vm1127, %vm2033
  %vm2066 = vmand %vm1127, %vm2034
  %vm2067 = vmand %vm1127, %vm2035
  %vm2068 = vmand %vm1127, %vm2036
  %vm2069 = vmand %vm1127, %vm2037
  %vm2070 = vmand %vm1127, %vm2038
  %vm2071 = vmand %vm1127, %vm2039
  %vm2072 = vmand %vm1127, %vm2040
  %vm2073 = vmand %vm1127, %vm2041
  %vm2074 = vmand %vm1127, %vm2042
  %vm2075 = vmand %vm1127, %vm2043
  %vm2076 = vmand %vm1127, %vm2044
  %vm2077 = vmand %vm1127, %vm2045
  %vm2078 = vmand %vm1127, %vm2046
  %vm2079 = vmand %vm1127, %vm2047
  %vm2080 = vmand %vm1127, %vm2048
  %vm2081 = vmand %vm1127, %vm2049
  %vm2082 = vmor %vm1985, %vm2050
  %vm2083 = vmor %vm1986, %vm2051
  %vm2084 = vmor %vm1987, %vm2052
  %vm2085 = vmor %vm1988, %vm2053
  %vm2086 = vmor %vm1989, %vm2054
  %vm2087 = vmor %vm1990, %vm2055
  %vm2088 = vmor %vm1991, %vm2056
  %vm2089 = vmor %vm1992, %vm2057
  %vm2090 = vmor %vm1993, %vm2058
  %vm2091 = vmor %vm1994, %vm2059
  %vm2092 = vmor %vm1995, %vm2060
  %vm2093 = vmor %vm1996, %vm2061
  %vm2094 = vmor %vm1997, %vm2062
  %vm2095 = vmor %vm1998, %vm2063
  %vm2096 = vmor %vm1999, %vm2064
  %vm2097 = vmor %vm2000, %vm2065
  %vm2098 = vmor %vm2001, %vm2066
  %vm2099 = vmor %vm2002, %vm2067
  %vm2100 = vmor %vm2003, %vm2068
  %vm2101 = vmor %vm2004, %vm2069
  %vm2102 = vmor %vm2005, %vm2070
  %vm2103 = vmor %vm2006, %vm2071
  %vm2104 = vmor %vm2007, %vm2072
  %vm2105 = vmor %vm2008, %vm2073
  %vm2106 = vmor %vm2009, %vm2074
  %vm2107 = vmor %vm2010, %vm2075
  %vm2108 = vmor %vm2011, %vm2076
  %vm2109 = vmor %vm2012, %vm2077
  %vm2110 = vmor %vm2013, %vm2078
  %vm2111 = vmor %vm2014, %vm2079
  %vm2112 = vmor %vm2015, %vm2080
  %vm2113 = vmor %vm2016, %vm2081
  %v2114 = vsel %vm2082, 1, 0
  %v2115 = vsel %vm2083, 1, 0
  %v2116 = vsel %vm2084, 1, 0
  %v2117 = vsel %vm2085, 1, 0
  %v2118 = vsel %vm2086, 1, 0
  %v2119 = vsel %vm2087, 1, 0
  %v2120 = vsel %vm2088, 1, 0
  %v2121 = vsel %vm2089, 1, 0
  %v2122 = vsel %vm2090, 1, 0
  %v2123 = vsel %vm2091, 1, 0
  %v2124 = vsel %vm2092, 1, 0
  %v2125 = vsel %vm2093, 1, 0
  %v2126 = vsel %vm2094, 1, 0
  %v2127 = vsel %vm2095, 1, 0
  %v2128 = vsel %vm2096, 1, 0
  %v2129 = vsel %vm2097, 1, 0
  %v2130 = vsel %vm2098, 1, 0
  %v2131 = vsel %vm2099, 1, 0
  %v2132 = vsel %vm2100, 1, 0
  %v2133 = vsel %vm2101, 1, 0
  %v2134 = vsel %vm2102, 1, 0
  %v2135 = vsel %vm2103, 1, 0
  %v2136 = vsel %vm2104, 1, 0
  %v2137 = vsel %vm2105, 1, 0
  %v2138 = vsel %vm2106, 1, 0
  %v2139 = vsel %vm2107, 1, 0
  %v2140 = vsel %vm2108, 1, 0
  %v2141 = vsel %vm2109, 1, 0
  %v2142 = vsel %vm2110, 1, 0
  %v2143 = vsel %vm2111, 1, 0
  %v2144 = vsel %vm2112, 1, 0
  %v2145 = vsel %vm2113, 1, 0
  %v2146 = vcvt.s32.f32 %v2114
  %v2147 = vcvt.s32.f32 %v2115
  %v2148 = vcvt.s32.f32 %v2116
  %v2149 = vcvt.s32.f32 %v2117
  %v2150 = vcvt.s32.f32 %v2118
  %v2151 = vcvt.s32.f32 %v2119
  %v2152 = vcvt.s32.f32 %v2120
  %v2153 = vcvt.s32.f32 %v2121
  %v2154 = vcvt.s32.f32 %v2122
  %v2155 = vcvt.s32.f32 %v2123
  %v2156 = vcvt.s32.f32 %v2124
  %v2157 = vcvt.s32.f32 %v2125
  %v2158 = vcvt.s32.f32 %v2126
  %v2159 = vcvt.s32.f32 %v2127
  %v2160 = vcvt.s32.f32 %v2128
  %v2161 = vcvt.s32.f32 %v2129
  %v2162 = vcvt.s32.f32 %v2130
  %v2163 = vcvt.s32.f32 %v2131
  %v2164 = vcvt.s32.f32 %v2132
  %v2165 = vcvt.s32.f32 %v2133
  %v2166 = vcvt.s32.f32 %v2134
  %v2167 = vcvt.s32.f32 %v2135
  %v2168 = vcvt.s32.f32 %v2136
  %v2169 = vcvt.s32.f32 %v2137
  %v2170 = vcvt.s32.f32 %v2138
  %v2171 = vcvt.s32.f32 %v2139
  %v2172 = vcvt.s32.f32 %v2140
  %v2173 = vcvt.s32.f32 %v2141
  %v2174 = vcvt.s32.f32 %v2142
  %v2175 = vcvt.s32.f32 %v2143
  %v2176 = vcvt.s32.f32 %v2144
  %v2177 = vcvt.s32.f32 %v2145
  %2178 = vmatprep.subr.mxu0 0.0
  %2179 = vmatpush1.msra.mxu0 %v2146
  %2180 = vmatprep.subr.mxu0 0.0
  %2181 = vmatpush1.msra.mxu0 %v2147
  %2182 = vmatprep.subr.mxu0 0.0
  %2183 = vmatpush1.msra.mxu0 %v2148
  %2184 = vmatprep.subr.mxu0 0.0
  %2185 = vmatpush1.msra.mxu0 %v2149
  %2186 = vmatprep.subr.mxu0 0.0
  %2187 = vmatpush1.msra.mxu0 %v2150
  %2188 = vmatprep.subr.mxu0 0.0
  %2189 = vmatpush1.msra.mxu0 %v2151
  %2190 = vmatprep.subr.mxu0 0.0
  %2191 = vmatpush1.msra.mxu0 %v2152
  %2192 = vmatprep.subr.mxu0 0.0
  %2193 = vmatpush1.msra.mxu0 %v2153
  %2194 = vmatprep.subr.mxu0 0.0
  %2195 = vmatpush1.msra.mxu0 %v2154
  %2196 = vmatprep.subr.mxu0 0.0
  %2197 = vmatpush1.msra.mxu0 %v2155
  %2198 = vmatprep.subr.mxu0 0.0
  %2199 = vmatpush1.msra.mxu0 %v2156
  %2200 = vmatprep.subr.mxu0 0.0
  %2201 = vmatpush1.msra.mxu0 %v2157
  %2202 = vmatprep.subr.mxu0 0.0
  %2203 = vmatpush1.msra.mxu0 %v2158
  %2204 = vmatprep.subr.mxu0 0.0
  %2205 = vmatpush1.msra.mxu0 %v2159
  %2206 = vmatprep.subr.mxu0 0.0
  %2207 = vmatpush1.msra.mxu0 %v2160
  %2208 = vmatprep.subr.mxu0 0.0
  %2209 = vmatpush1.msra.mxu0 %v2161
  %2210 = vmatprep.subr.mxu0 0.0
  %2211 = vmatpush1.msra.mxu0 %v2162
  %2212 = vmatprep.subr.mxu0 0.0
  %2213 = vmatpush1.msra.mxu0 %v2163
  %2214 = vmatprep.subr.mxu0 0.0
  %2215 = vmatpush1.msra.mxu0 %v2164
  %2216 = vmatprep.subr.mxu0 0.0
  %2217 = vmatpush1.msra.mxu0 %v2165
  %2218 = vmatprep.subr.mxu0 0.0
  %2219 = vmatpush1.msra.mxu0 %v2166
  %2220 = vmatprep.subr.mxu0 0.0
  %2221 = vmatpush1.msra.mxu0 %v2167
  %2222 = vmatprep.subr.mxu0 0.0
  %2223 = vmatpush1.msra.mxu0 %v2168
  %2224 = vmatprep.subr.mxu0 0.0
  %2225 = vmatpush1.msra.mxu0 %v2169
  %2226 = vmatprep.subr.mxu0 0.0
  %2227 = vmatpush1.msra.mxu0 %v2170
  %2228 = vmatprep.subr.mxu0 0.0
  %2229 = vmatpush1.msra.mxu0 %v2171
  %2230 = vmatprep.subr.mxu0 0.0
  %2231 = vmatpush1.msra.mxu0 %v2172
  %2232 = vmatprep.subr.mxu0 0.0
  %2233 = vmatpush1.msra.mxu0 %v2173
  %2234 = vmatprep.subr.mxu0 0.0
  %2235 = vmatpush1.msra.mxu0 %v2174
  %2236 = vmatprep.subr.mxu0 0.0
  %2237 = vmatpush1.msra.mxu0 %v2175
  %2238 = vmatprep.subr.mxu0 0.0
  %2239 = vmatpush1.msra.mxu0 %v2176
  %2240 = vmatprep.subr.mxu0 0.0
  %2241 = vmatpush1.msra.mxu0 %v2177
  %2242 = vmatprep.mubr.f32.mxu0 %v1021
  %2243 = vmatmul.mubr.f32.gmra.mrb[0].mxu0 %v1020
  %v2244 = vpop.f32.mrb[0].mxu0
  %v2245 = vadd.f32 0.0, %v2244
  %v2246 = vpop.f32.mrb[0].mxu0
  %2247 = vdwg.mxu0
  %v2249 = vrot.slane %v1653, 4
  %v2252 = vrot.slane %v2245, 4
  %v2254 = vsel %vm93, %v1357, %v2249
  %v2255 = vsel %vm93, %v1949, %v2252
  %v2256 = vld [vmem:[%s13] sm:$0xff]
  %vm2257 = vcmask 130048
  %v2259 = vsel %vm2257, %v2256, 0
  %2261 = vmatprep.subr.mxu0 0.0
  %2262 = vmatpush1.msra.mxu0 %v2254
  %2263 = vmatprep.subr.mxu0 0.0
  %2264 = vmatpush1.msra.mxu0 %v2255
  %2265 = vmatprep.subr.mxu0 0.0
  %2266 = vmatpush1.msra.mxu0 0.0
  %2267 = vmatprep.subr.mxu0 0.0
  %2268 = vmatpush1.msra.mxu0 0.0
  %2269 = vmatprep.subr.mxu0 0.0
  %2270 = vmatpush1.msra.mxu0 0.0
  %2271 = vmatprep.subr.mxu0 0.0
  %2272 = vmatpush1.msra.mxu0 0.0
  %2273 = vmatprep.subr.mxu0 0.0
  %2274 = vmatpush1.msra.mxu0 0.0
  %2275 = vmatprep.subr.mxu0 0.0
  %2276 = vmatpush1.msra.mxu0 0.0
  %2277 = vmatprep.subr.mxu0 0.0
  %2278 = vmatpush1.msra.mxu0 0.0
  %2279 = vmatprep.subr.mxu0 0.0
  %2280 = vmatpush1.msra.mxu0 0.0
  %2281 = vmatprep.subr.mxu0 0.0
  %2282 = vmatpush1.msra.mxu0 0.0
  %2283 = vmatprep.subr.mxu0 0.0
  %2284 = vmatpush1.msra.mxu0 0.0
  %2285 = vmatprep.subr.mxu0 0.0
  %2286 = vmatpush1.msra.mxu0 0.0
  %2287 = vmatprep.subr.mxu0 0.0
  %2288 = vmatpush1.msra.mxu0 0.0
  %2289 = vmatprep.subr.mxu0 0.0
  %2290 = vmatpush1.msra.mxu0 0.0
  %2291 = vmatprep.subr.mxu0 0.0
  %2292 = vmatpush1.msra.mxu0 0.0
  %2293 = vmatprep.subr.mxu0 0.0
  %2294 = vmatpush1.msra.mxu0 0.0
  %2295 = vmatprep.subr.mxu0 0.0
  %2296 = vmatpush1.msra.mxu0 0.0
  %2297 = vmatprep.subr.mxu0 0.0
  %2298 = vmatpush1.msra.mxu0 0.0
  %2299 = vmatprep.subr.mxu0 0.0
  %2300 = vmatpush1.msra.mxu0 0.0
  %2301 = vmatprep.subr.mxu0 0.0
  %2302 = vmatpush1.msra.mxu0 0.0
  %2303 = vmatprep.subr.mxu0 0.0
  %2304 = vmatpush1.msra.mxu0 0.0
  %2305 = vmatprep.subr.mxu0 0.0
  %2306 = vmatpush1.msra.mxu0 0.0
  %2307 = vmatprep.subr.mxu0 0.0
  %2308 = vmatpush1.msra.mxu0 0.0
  %2309 = vmatprep.subr.mxu0 0.0
  %2310 = vmatpush1.msra.mxu0 0.0
  %2311 = vmatprep.subr.mxu0 0.0
  %2312 = vmatpush1.msra.mxu0 0.0
  %2313 = vmatprep.subr.mxu0 0.0
  %2314 = vmatpush1.msra.mxu0 0.0
  %2315 = vmatprep.subr.mxu0 0.0
  %2316 = vmatpush1.msra.mxu0 0.0
  %2317 = vmatprep.subr.mxu0 0.0
  %2318 = vmatpush1.msra.mxu0 0.0
  %2319 = vmatprep.subr.mxu0 0.0
  %2320 = vmatpush1.msra.mxu0 0.0
  %2321 = vmatprep.subr.mxu0 0.0
  %2322 = vmatpush1.msra.mxu0 0.0
  %2323 = vmatprep.subr.mxu0 0.0
  %2324 = vmatpush1.msra.mxu0 0.0
  %2325 = vmatprep.mubr.f32.mxu0 0.0
  %2326 = vmatmul.mubr.f32.gmra.mrb[0].mxu0 %v2259
  %v2327 = vpop.f32.mrb[0].mxu0
  %v2328 = vadd.f32 0.0, %v2327
  %v2329 = vpop.f32.mrb[0].mxu0
  %2330 = vdwg.mxu0
  %vm2331 = vcmp.lt.s32.totalorder %v51, 62
  %v2332 = vsel %vm2331, 1, 0
  %v2333 = vcvt.s32.f32 %v2332
  %v2334 = vld [vmem:[%s14] sm:$0xff]
  %v2335 = vmul.f32 %v2328, %v2333
  %2336 = vadd.xlane.f32.xlu0 %v2335
  %v2337 = vpop.xlane.xlu0 %2336
  %v2338 = vmul.f32 %v2337, 0.016129032
  %v2339 = vsub.f32 %v2328, %v2338
  %v2340 = vmul.f32 %v2339, %v2339
  %v2341 = vmul.f32 %v2340, %v2333
  %2342 = vadd.xlane.f32.xlu0 %v2341
  %v2343 = vpop.xlane.xlu0 %2342
  %v2344 = vmul.f32 %v2343, 0.016129032
  %v2345 = vadd.f32 %v2344, 1e-05
  %v2346 = vrsqrt.pop %v2345
  %v2347 = vmul.f32 %v2334, %v2346
  %v2348 = vmul.f32 %v2338, %v2347
  %2350 = vrot.lane.b32.xlu0 %v2348, 1
  %v2351 = vpop.permute.xlu0 %2350
  %v2353 = vsub.f32 %v2334, %v2351
  %2355 = vset.pattern.permute.xlu0 0
  %2356 = vperm.xlu0 %2355, %v2347
  %v2357 = vpop.permute.xlu0 %2356
  %v2359 = vmul.f32 %v2328, %v2357
  %2361 = vset.pattern.permute.xlu0 1
  %2362 = vperm.xlu0 %2361, %v2353
  %v2363 = vpop.permute.xlu0 %2362
  %v2365 = vadd.f32 %v2359, %v2363
  %v2366 = vmin.f32 %v2365, 0.0
  %vm2367 = vcmp.gt.f32.partialorder %v2365, 0.0
  %v2368 = vmul.f32 %v2366, 0.5
  %v2369 = vtanh.pop %v2368
  %v2370 = vmul.f32 %v2366, 1.442695
  %v2371 = vpow.pop %v2370
  %v2372 = vadd.f32 %v2371, 1.0
  %v2373 = vmul.f32 %v2369, %v2372
  %v2374 = vsel %vm2367, %v2365, %v2373
  %v2375 = vmul.f32 %v2374, %v2333
  %2376 = vst [vmem:[%s15] sm:$0xff] %v2375
  // Predicated region
  $region62: #{upsampling_layer_forward.1} parent=0 // pred_check
    _
  $region63: #{upsampling_layer_forward.1} parent=0 // pred_check_branch
    %2378 = sbr.rel (0) target = $region65
  $region64: #{upsampling_layer_forward.1} parent=0 // pred_region
    _
  $region65: #{upsampling_layer_forward.1} parent=0 // pred_fallthru
    _
  // Predicated region
  $region66: #{upsampling_layer_forward.1} parent=0 // pred_check
    _
  $region67: #{upsampling_layer_forward.1} parent=0 // pred_check_branch
    %2380 = sbr.rel (0) target = $region69
  $region68: #{upsampling_layer_forward.1} parent=0 // pred_region
    _
  $region69: #{upsampling_layer_forward.1} parent=0 // pred_fallthru
    _

</llo_original>
